<compile_context>
chip_gen: v5e
topology: v5e:2x2
jax: 0.10.0
libtpu: 0.0.40
codegen_flags: <defaults>
</compile_context>

<pallas_src>
import functools

import jax
import jax.numpy as jnp
from jax.experimental import pallas as pl
from jax.experimental.pallas import tpu as pltpu


def _round_up(x, m):
    return ((x + m - 1) // m) * m


def _make_encoder_kernel(n_layers, S, B_pad, H_pad, unroll_threshold=16):
    """Builds the fused encoder kernel (all layers + time recurrence in one call)."""
    H3 = 3 * H_pad

    def kernel(*refs):
        x_ref = refs[0]                                  # (S*B_pad, E_pad) bf16 embedded input
        w_refs = refs[1:1 + 3 * n_layers]                # per layer: W_ih, W_hh (bf16), bias (f32)
        hid_ref = refs[1 + 3 * n_layers]                 # (n_layers, B_pad, H_pad) f32
        cell_ref = refs[2 + 3 * n_layers]                # (n_layers, B_pad, H_pad) f32
        act_ref = refs[3 + 3 * n_layers]                 # VMEM scratch (S*B_pad, H_pad) bf16

        layer_in = x_ref[...]                            # bf16 MXU operand for current layer
        for l in range(n_layers):                        # static layer loop (fused layers)
            w_ih = w_refs[3 * l][...]                    # (in_dim_pad, 4*H_pad) bf16
            w_hh = w_refs[3 * l + 1][...]                # (H_pad, 4*H_pad) bf16
            bias = w_refs[3 * l + 2][...]                # (1, 4*H_pad) f32 = b_ih + b_hh

            # Hoisted input projection for ALL time steps: one well-shaped bf16 MXU matmul,
            # bias folded in (broadcast done once, outside the time loop).
            xp = jnp.dot(layer_in, w_ih,
                         preferred_element_type=jnp.float32) + bias   # (S*B_pad, 4*H_pad) f32

            last_layer = (l == n_layers - 1)

            def cell_step(xp_t, h, c):
                # Recurrent matmul: bf16 LHS (padded to full sublanes) x bf16 W_hh -> f32.
                gates = xp_t + jnp.dot(h.astype(jnp.bfloat16), w_hh,
                                       preferred_element_type=jnp.float32)   # (B_pad, 4*H_pad)
                # Gate order (i, f, o, g): one sigmoid over the contiguous 3*H_pad slab,
                # one tanh over the last H_pad slab (2 EUP launches per step, lane-dense).
                sig = jax.nn.sigmoid(gates[:, :H3])
                g_g = jnp.tanh(gates[:, H3:])
                i_g = sig[:, 0 * H_pad:1 * H_pad]
                f_g = sig[:, 1 * H_pad:2 * H_pad]
                o_g = sig[:, 2 * H_pad:3 * H_pad]
                c = f_g * c + i_g * g_g
                h = o_g * jnp.tanh(c)
                return h, c

            h = jnp.zeros((B_pad, H_pad), jnp.float32)
            c = jnp.zeros((B_pad, H_pad), jnp.float32)

            if S <= unroll_threshold:
                # Small S: static unroll (full LLO scheduler visibility).
                for t in range(S):
                    h, c = cell_step(xp[t * B_pad:(t + 1) * B_pad, :], h, c)
                    if not last_layer:
                        # Next layer's input stays resident in VMEM (bf16 MXU operand).
                        act_ref[t * B_pad:(t + 1) * B_pad, :] = h.astype(jnp.bfloat16)
            else:
                # Long sequences: fori_loop bounds vreg live ranges / code size.
                def body(t, carry):
                    h_t, c_t = carry
                    row = pl.multiple_of(t * B_pad, B_pad)
                    xp_t = jax.lax.dynamic_slice_in_dim(xp, row, B_pad, axis=0)
                    h_t, c_t = cell_step(xp_t, h_t, c_t)
                    if not last_layer:
                        act_ref[pl.ds(row, B_pad), :] = h_t.astype(jnp.bfloat16)
                    return (h_t, c_t)
                h, c = jax.lax.fori_loop(0, S, body, (h, c))

            hid_ref[l] = h                               # final hidden state, layer l (lane-dense)
            cell_ref[l] = c                              # final cell state, layer l
            if not last_layer:
                layer_in = act_ref[...]                  # (S*B_pad, H_pad) bf16

    return kernel


def _pack_lstm_layer(w_ih, w_hh, b, in_dim_pad, H_pad):
    """Reorder gate columns (i,f,g,o)->(i,f,o,g), zero-pad each gate block to H_pad lanes,
    zero-pad the input dim, and cast the matmul operands to bf16."""
    H = w_hh.shape[0]

    def reorder_pad_cols(w):
        i, f, g, o = jnp.split(w, 4, axis=1)
        return jnp.concatenate(
            [jnp.pad(blk, ((0, 0), (0, H_pad - H))) for blk in (i, f, o, g)], axis=1)

    w_ih_p = jnp.pad(reorder_pad_cols(w_ih), ((0, in_dim_pad - w_ih.shape[0]), (0, 0)))
    w_hh_p = jnp.pad(reorder_pad_cols(w_hh), ((0, H_pad - H), (0, 0)))
    b_p = reorder_pad_cols(b)
    return (w_ih_p.astype(jnp.bfloat16), w_hh_p.astype(jnp.bfloat16),
            b_p.astype(jnp.float32))


@functools.partial(jax.jit, static_argnums=())
def encoder_pallas(params, src):
    """src: [S, B] int32 -> (hidden [n_layers, B, H], cell [n_layers, B, H])."""
    S, B = src.shape
    emb = params["embedding"]
    E = emb.shape[1]
    layers = params["layers"]
    n_layers = len(layers)
    H = layers[0]["w_hh"].shape[0]

    # Pad batch to the f32 sublane and feature dims to full 128-lane tiles.
    B_pad = _round_up(max(B, 8), 8)
    H_pad = _round_up(H, 128)
    E_pad = _round_up(E, 128)

    # Embedding gather (plain-JAX glue); dropout is identity in eval mode.
    x = jnp.take(emb, src, axis=0)                               # [S, B, E]
    x = jnp.pad(x, ((0, 0), (0, B_pad - B), (0, E_pad - E)))      # padded rows/lanes are zero
    x_flat = x.reshape(S * B_pad, E_pad).astype(jnp.bfloat16)     # row t*B_pad + b <-> (t, b)

    flat_w = []
    for l, layer in enumerate(layers):
        in_dim_pad = E_pad if l == 0 else H_pad
        flat_w += list(_pack_lstm_layer(layer["w_ih"], layer["w_hh"], layer["b"],
                                        in_dim_pad, H_pad))

    vmem_spec = pl.BlockSpec(memory_space=pltpu.MemorySpace.VMEM)
    hidden_p, cell_p = pl.pallas_call(
        _make_encoder_kernel(n_layers, S, B_pad, H_pad),
        out_shape=(jax.ShapeDtypeStruct((n_layers, B_pad, H_pad), jnp.float32),
                   jax.ShapeDtypeStruct((n_layers, B_pad, H_pad), jnp.float32)),
        in_specs=[vmem_spec] * (1 + 3 * n_layers),
        out_specs=(vmem_spec, vmem_spec),
        scratch_shapes=[pltpu.VMEM((S * B_pad, H_pad), jnp.bfloat16)],  # inter-layer activations
        compiler_params=pltpu.CompilerParams(vmem_limit_bytes=32 * 1024 * 1024),
    )(x_flat, *flat_w)

    # Drop padded batch rows / hidden lanes (padded lanes are exactly zero by construction).
    return hidden_p[:, :B, :H], cell_p[:, :B, :H]


def init_encoder_params(key, input_dim, emb_dim, hid_dim, n_layers):
    """Deterministic synthetic parameters (shapes match nn.Embedding + nn.LSTM),
    stored in the unpadded PyTorch gate order (i, f, g, o), weights pre-transposed."""
    keys = jax.random.split(key, 1 + 4 * n_layers)
    params = {"embedding": jax.random.normal(keys[0], (input_dim, emb_dim),
                                             jnp.float32) * 0.1}
    scale = 1.0 / jnp.sqrt(hid_dim)
    layers = []
    for l in range(n_layers):
        in_dim = emb_dim if l == 0 else hid_dim
        k_ih, k_hh, k_bi, k_bh = keys[1 + 4 * l: 1 + 4 * (l + 1)]
        w_ih = jax.random.uniform(k_ih, (in_dim, 4 * hid_dim), jnp.float32, -scale, scale)
        w_hh = jax.random.uniform(k_hh, (hid_dim, 4 * hid_dim), jnp.float32, -scale, scale)
        b_ih = jax.random.uniform(k_bi, (4 * hid_dim,), jnp.float32, -scale, scale)
        b_hh = jax.random.uniform(k_bh, (4 * hid_dim,), jnp.float32, -scale, scale)
        layers.append({"w_ih": w_ih, "w_hh": w_hh,
                       "b": (b_ih + b_hh).reshape(1, 4 * hid_dim)})
    params["layers"] = layers
    return params


def encoder_reference(params, src):
    """Pure-JAX f32 reference (lax.scan LSTM stack) for a numerical sanity check."""
    x = jnp.take(params["embedding"], src, axis=0)
    hs, cs = [], []
    B = src.shape[1]
    for layer in params["layers"]:
        w_ih, w_hh, b = layer["w_ih"], layer["w_hh"], layer["b"]
        H = w_hh.shape[0]

        def cell_fn(carry, x_t):
            h, c = carry
            gates = (jnp.dot(x_t, w_ih, precision=jax.lax.Precision.HIGHEST)
                     + jnp.dot(h, w_hh, precision=jax.lax.Precision.HIGHEST) + b)
            i_g = jax.nn.sigmoid(gates[:, 0 * H:1 * H])
            f_g = jax.nn.sigmoid(gates[:, 1 * H:2 * H])
            g_g = jnp.tanh(gates[:, 2 * H:3 * H])
            o_g = jax.nn.sigmoid(gates[:, 3 * H:4 * H])
            c = f_g * c + i_g * g_g
            h = o_g * jnp.tanh(c)
            return (h, c), h

        (h, c), y = jax.lax.scan(
            cell_fn, (jnp.zeros((B, H), jnp.float32), jnp.zeros((B, H), jnp.float32)), x)
        hs.append(h)
        cs.append(c)
        x = y
    return jnp.stack(hs, axis=0), jnp.stack(cs, axis=0)


if __name__ == "__main__":
    INPUT_DIM = 50    # vocab size
    EMB_DIM = 32
    HID_DIM = 32
    N_LAYERS = 2
    SEQ_LEN = 8
    BATCH = 4

    key = jax.random.PRNGKey(0)
    k_params, k_src = jax.random.split(key)
    params = init_encoder_params(k_params, INPUT_DIM, EMB_DIM, HID_DIM, N_LAYERS)
    src = jax.random.randint(k_src, (SEQ_LEN, BATCH), 0, INPUT_DIM, dtype=jnp.int32)

    hidden, cell = encoder_pallas(params, src)
    jax.block_until_ready((hidden, cell))

    assert hidden.shape == (N_LAYERS, BATCH, HID_DIM)
    assert cell.shape == (N_LAYERS, BATCH, HID_DIM)
    assert jnp.all(jnp.isfinite(hidden)) and jnp.all(jnp.isfinite(cell))

    # Kernel uses bf16 MXU operands (f32 accumulation / state); reference is f32 HIGHEST,
    # so tolerances are widened accordingly.
    ref_hidden, ref_cell = encoder_reference(params, src)
    assert jnp.allclose(hidden, ref_hidden, atol=5e-2, rtol=5e-2), (
        float(jnp.max(jnp.abs(hidden - ref_hidden))))
    assert jnp.allclose(cell, ref_cell, atol=5e-2, rtol=5e-2), (
        float(jnp.max(jnp.abs(cell - ref_cell))))

    print("KERNEL_OK")
</pallas_src>

<mosaic_0001>
module attributes {stable_mosaic.version = 11 : i64} {
  func.func @kernel(%arg0: memref<64x128xbf16, #tpu.memory_space<vmem>>, %arg1: memref<128x512xbf16, #tpu.memory_space<vmem>>, %arg2: memref<128x512xbf16, #tpu.memory_space<vmem>>, %arg3: memref<1x512xf32, #tpu.memory_space<vmem>>, %arg4: memref<128x512xbf16, #tpu.memory_space<vmem>>, %arg5: memref<128x512xbf16, #tpu.memory_space<vmem>>, %arg6: memref<1x512xf32, #tpu.memory_space<vmem>>, %arg7: memref<2x8x128xf32, #tpu.memory_space<vmem>>, %arg8: memref<2x8x128xf32, #tpu.memory_space<vmem>>, %arg9: memref<64x128xbf16, #tpu.memory_space<vmem>>) attributes {dimension_semantics = [], scalar_prefetch = 0 : i64, scratch_operands = 1 : i64, tpu.core_type = #tpu.core_type<tc>} {
    %c0 = arith.constant 0 : index
    %c0_0 = arith.constant 0 : index
    %0 = vector.load %arg0[%c0, %c0_0] : memref<64x128xbf16, #tpu.memory_space<vmem>>, vector<64x128xbf16>
    %c0_1 = arith.constant 0 : index
    %c0_2 = arith.constant 0 : index
    %1 = vector.load %arg1[%c0_1, %c0_2] : memref<128x512xbf16, #tpu.memory_space<vmem>>, vector<128x512xbf16>
    %c0_3 = arith.constant 0 : index
    %c0_4 = arith.constant 0 : index
    %2 = vector.load %arg2[%c0_3, %c0_4] : memref<128x512xbf16, #tpu.memory_space<vmem>>, vector<128x512xbf16>
    %c0_5 = arith.constant 0 : index
    %c0_6 = arith.constant 0 : index
    %3 = vector.load %arg3[%c0_5, %c0_6] : memref<1x512xf32, #tpu.memory_space<vmem>>, vector<1x512xf32>
    %cst = arith.constant dense<0.000000e+00> : vector<64x512xf32>
    %4 = tpu.matmul %0, %1, %cst {dimension_numbers = #tpu.dot_dimension_numbers<[1], [0], [0], [1], [0, 0, 1, 1], [], []>} : vector<64x128xbf16>, vector<128x512xbf16>, vector<64x512xf32> -> vector<64x512xf32>
    %5 = vector.broadcast %3 : vector<1x512xf32> to vector<64x512xf32>
    %6 = arith.addf %4, %5 : vector<64x512xf32>
    %cst_7 = arith.constant 0.000000e+00 : f32
    %7 = vector.broadcast %cst_7 : f32 to vector<8x128xf32>
    %cst_8 = arith.constant 0.000000e+00 : f32
    %8 = vector.broadcast %cst_8 : f32 to vector<8x128xf32>
    %9 = vector.extract_strided_slice %6 {offsets = [0, 0], sizes = [8, 512], strides = [1, 1]} : vector<64x512xf32> to vector<8x512xf32>
    %10 = arith.truncf %7 : vector<8x128xf32> to vector<8x128xbf16>
    %cst_9 = arith.constant dense<0.000000e+00> : vector<8x512xf32>
    %11 = tpu.matmul %10, %2, %cst_9 {dimension_numbers = #tpu.dot_dimension_numbers<[1], [0], [0], [1], [0, 0, 1, 1], [], []>} : vector<8x128xbf16>, vector<128x512xbf16>, vector<8x512xf32> -> vector<8x512xf32>
    %12 = arith.addf %9, %11 : vector<8x512xf32>
    %13 = vector.extract_strided_slice %12 {offsets = [0, 0], sizes = [8, 384], strides = [1, 1]} : vector<8x512xf32> to vector<8x384xf32>
    %14 = arith.negf %13 : vector<8x384xf32>
    %15 = math.exp %14 : vector<8x384xf32>
    %cst_10 = arith.constant 1.000000e+00 : f32
    %16 = vector.broadcast %cst_10 : f32 to vector<8x384xf32>
    %17 = arith.addf %16, %15 : vector<8x384xf32>
    %18 = arith.divf %16, %17 : vector<8x384xf32>
    %19 = vector.extract_strided_slice %12 {offsets = [0, 384], sizes = [8, 128], strides = [1, 1]} : vector<8x512xf32> to vector<8x128xf32>
    %20 = math.tanh %19 : vector<8x128xf32>
    %21 = vector.extract_strided_slice %18 {offsets = [0, 0], sizes = [8, 128], strides = [1, 1]} : vector<8x384xf32> to vector<8x128xf32>
    %22 = vector.extract_strided_slice %18 {offsets = [0, 128], sizes = [8, 128], strides = [1, 1]} : vector<8x384xf32> to vector<8x128xf32>
    %23 = vector.extract_strided_slice %18 {offsets = [0, 256], sizes = [8, 128], strides = [1, 1]} : vector<8x384xf32> to vector<8x128xf32>
    %24 = arith.mulf %22, %8 : vector<8x128xf32>
    %25 = arith.mulf %21, %20 : vector<8x128xf32>
    %26 = arith.addf %24, %25 : vector<8x128xf32>
    %27 = math.tanh %26 : vector<8x128xf32>
    %28 = arith.mulf %23, %27 : vector<8x128xf32>
    %29 = arith.truncf %28 : vector<8x128xf32> to vector<8x128xbf16>
    %c0_11 = arith.constant 0 : index
    %c0_12 = arith.constant 0 : index
    %30 = vector.load %arg9[%c0_11, %c0_12] : memref<64x128xbf16, #tpu.memory_space<vmem>>, vector<8x128xbf16>
    tpu.vector_store %arg9[%c0_11, %c0_12], %29 {strides = array<i32>} : memref<64x128xbf16, #tpu.memory_space<vmem>>, vector<8x128xbf16>,
    %31 = vector.extract_strided_slice %6 {offsets = [8, 0], sizes = [8, 512], strides = [1, 1]} : vector<64x512xf32> to vector<8x512xf32>
    %32 = arith.truncf %28 : vector<8x128xf32> to vector<8x128xbf16>
    %cst_13 = arith.constant dense<0.000000e+00> : vector<8x512xf32>
    %33 = tpu.matmul %32, %2, %cst_13 {dimension_numbers = #tpu.dot_dimension_numbers<[1], [0], [0], [1], [0, 0, 1, 1], [], []>} : vector<8x128xbf16>, vector<128x512xbf16>, vector<8x512xf32> -> vector<8x512xf32>
    %34 = arith.addf %31, %33 : vector<8x512xf32>
    %35 = vector.extract_strided_slice %34 {offsets = [0, 0], sizes = [8, 384], strides = [1, 1]} : vector<8x512xf32> to vector<8x384xf32>
    %36 = arith.negf %35 : vector<8x384xf32>
    %37 = math.exp %36 : vector<8x384xf32>
    %cst_14 = arith.constant 1.000000e+00 : f32
    %38 = vector.broadcast %cst_14 : f32 to vector<8x384xf32>
    %39 = arith.addf %38, %37 : vector<8x384xf32>
    %40 = arith.divf %38, %39 : vector<8x384xf32>
    %41 = vector.extract_strided_slice %34 {offsets = [0, 384], sizes = [8, 128], strides = [1, 1]} : vector<8x512xf32> to vector<8x128xf32>
    %42 = math.tanh %41 : vector<8x128xf32>
    %43 = vector.extract_strided_slice %40 {offsets = [0, 0], sizes = [8, 128], strides = [1, 1]} : vector<8x384xf32> to vector<8x128xf32>
    %44 = vector.extract_strided_slice %40 {offsets = [0, 128], sizes = [8, 128], strides = [1, 1]} : vector<8x384xf32> to vector<8x128xf32>
    %45 = vector.extract_strided_slice %40 {offsets = [0, 256], sizes = [8, 128], strides = [1, 1]} : vector<8x384xf32> to vector<8x128xf32>
    %46 = arith.mulf %44, %26 : vector<8x128xf32>
    %47 = arith.mulf %43, %42 : vector<8x128xf32>
    %48 = arith.addf %46, %47 : vector<8x128xf32>
    %49 = math.tanh %48 : vector<8x128xf32>
    %50 = arith.mulf %45, %49 : vector<8x128xf32>
    %51 = arith.truncf %50 : vector<8x128xf32> to vector<8x128xbf16>
    %c8 = arith.constant 8 : index
    %c0_15 = arith.constant 0 : index
    %52 = vector.load %arg9[%c8, %c0_15] : memref<64x128xbf16, #tpu.memory_space<vmem>>, vector<8x128xbf16>
    tpu.vector_store %arg9[%c8, %c0_15], %51 {strides = array<i32>} : memref<64x128xbf16, #tpu.memory_space<vmem>>, vector<8x128xbf16>,
    %53 = vector.extract_strided_slice %6 {offsets = [16, 0], sizes = [8, 512], strides = [1, 1]} : vector<64x512xf32> to vector<8x512xf32>
    %54 = arith.truncf %50 : vector<8x128xf32> to vector<8x128xbf16>
    %cst_16 = arith.constant dense<0.000000e+00> : vector<8x512xf32>
    %55 = tpu.matmul %54, %2, %cst_16 {dimension_numbers = #tpu.dot_dimension_numbers<[1], [0], [0], [1], [0, 0, 1, 1], [], []>} : vector<8x128xbf16>, vector<128x512xbf16>, vector<8x512xf32> -> vector<8x512xf32>
    %56 = arith.addf %53, %55 : vector<8x512xf32>
    %57 = vector.extract_strided_slice %56 {offsets = [0, 0], sizes = [8, 384], strides = [1, 1]} : vector<8x512xf32> to vector<8x384xf32>
    %58 = arith.negf %57 : vector<8x384xf32>
    %59 = math.exp %58 : vector<8x384xf32>
    %cst_17 = arith.constant 1.000000e+00 : f32
    %60 = vector.broadcast %cst_17 : f32 to vector<8x384xf32>
    %61 = arith.addf %60, %59 : vector<8x384xf32>
    %62 = arith.divf %60, %61 : vector<8x384xf32>
    %63 = vector.extract_strided_slice %56 {offsets = [0, 384], sizes = [8, 128], strides = [1, 1]} : vector<8x512xf32> to vector<8x128xf32>
    %64 = math.tanh %63 : vector<8x128xf32>
    %65 = vector.extract_strided_slice %62 {offsets = [0, 0], sizes = [8, 128], strides = [1, 1]} : vector<8x384xf32> to vector<8x128xf32>
    %66 = vector.extract_strided_slice %62 {offsets = [0, 128], sizes = [8, 128], strides = [1, 1]} : vector<8x384xf32> to vector<8x128xf32>
    %67 = vector.extract_strided_slice %62 {offsets = [0, 256], sizes = [8, 128], strides = [1, 1]} : vector<8x384xf32> to vector<8x128xf32>
    %68 = arith.mulf %66, %48 : vector<8x128xf32>
    %69 = arith.mulf %65, %64 : vector<8x128xf32>
    %70 = arith.addf %68, %69 : vector<8x128xf32>
    %71 = math.tanh %70 : vector<8x128xf32>
    %72 = arith.mulf %67, %71 : vector<8x128xf32>
    %73 = arith.truncf %72 : vector<8x128xf32> to vector<8x128xbf16>
    %c16 = arith.constant 16 : index
    %c0_18 = arith.constant 0 : index
    %74 = vector.load %arg9[%c16, %c0_18] : memref<64x128xbf16, #tpu.memory_space<vmem>>, vector<8x128xbf16>
    tpu.vector_store %arg9[%c16, %c0_18], %73 {strides = array<i32>} : memref<64x128xbf16, #tpu.memory_space<vmem>>, vector<8x128xbf16>,
    %75 = vector.extract_strided_slice %6 {offsets = [24, 0], sizes = [8, 512], strides = [1, 1]} : vector<64x512xf32> to vector<8x512xf32>
    %76 = arith.truncf %72 : vector<8x128xf32> to vector<8x128xbf16>
    %cst_19 = arith.constant dense<0.000000e+00> : vector<8x512xf32>
    %77 = tpu.matmul %76, %2, %cst_19 {dimension_numbers = #tpu.dot_dimension_numbers<[1], [0], [0], [1], [0, 0, 1, 1], [], []>} : vector<8x128xbf16>, vector<128x512xbf16>, vector<8x512xf32> -> vector<8x512xf32>
    %78 = arith.addf %75, %77 : vector<8x512xf32>
    %79 = vector.extract_strided_slice %78 {offsets = [0, 0], sizes = [8, 384], strides = [1, 1]} : vector<8x512xf32> to vector<8x384xf32>
    %80 = arith.negf %79 : vector<8x384xf32>
    %81 = math.exp %80 : vector<8x384xf32>
    %cst_20 = arith.constant 1.000000e+00 : f32
    %82 = vector.broadcast %cst_20 : f32 to vector<8x384xf32>
    %83 = arith.addf %82, %81 : vector<8x384xf32>
    %84 = arith.divf %82, %83 : vector<8x384xf32>
    %85 = vector.extract_strided_slice %78 {offsets = [0, 384], sizes = [8, 128], strides = [1, 1]} : vector<8x512xf32> to vector<8x128xf32>
    %86 = math.tanh %85 : vector<8x128xf32>
    %87 = vector.extract_strided_slice %84 {offsets = [0, 0], sizes = [8, 128], strides = [1, 1]} : vector<8x384xf32> to vector<8x128xf32>
    %88 = vector.extract_strided_slice %84 {offsets = [0, 128], sizes = [8, 128], strides = [1, 1]} : vector<8x384xf32> to vector<8x128xf32>
    %89 = vector.extract_strided_slice %84 {offsets = [0, 256], sizes = [8, 128], strides = [1, 1]} : vector<8x384xf32> to vector<8x128xf32>
    %90 = arith.mulf %88, %70 : vector<8x128xf32>
    %91 = arith.mulf %87, %86 : vector<8x128xf32>
    %92 = arith.addf %90, %91 : vector<8x128xf32>
    %93 = math.tanh %92 : vector<8x128xf32>
    %94 = arith.mulf %89, %93 : vector<8x128xf32>
    %95 = arith.truncf %94 : vector<8x128xf32> to vector<8x128xbf16>
    %c24 = arith.constant 24 : index
    %c0_21 = arith.constant 0 : index
    %96 = vector.load %arg9[%c24, %c0_21] : memref<64x128xbf16, #tpu.memory_space<vmem>>, vector<8x128xbf16>
    tpu.vector_store %arg9[%c24, %c0_21], %95 {strides = array<i32>} : memref<64x128xbf16, #tpu.memory_space<vmem>>, vector<8x128xbf16>,
    %97 = vector.extract_strided_slice %6 {offsets = [32, 0], sizes = [8, 512], strides = [1, 1]} : vector<64x512xf32> to vector<8x512xf32>
    %98 = arith.truncf %94 : vector<8x128xf32> to vector<8x128xbf16>
    %cst_22 = arith.constant dense<0.000000e+00> : vector<8x512xf32>
    %99 = tpu.matmul %98, %2, %cst_22 {dimension_numbers = #tpu.dot_dimension_numbers<[1], [0], [0], [1], [0, 0, 1, 1], [], []>} : vector<8x128xbf16>, vector<128x512xbf16>, vector<8x512xf32> -> vector<8x512xf32>
    %100 = arith.addf %97, %99 : vector<8x512xf32>
    %101 = vector.extract_strided_slice %100 {offsets = [0, 0], sizes = [8, 384], strides = [1, 1]} : vector<8x512xf32> to vector<8x384xf32>
    %102 = arith.negf %101 : vector<8x384xf32>
    %103 = math.exp %102 : vector<8x384xf32>
    %cst_23 = arith.constant 1.000000e+00 : f32
    %104 = vector.broadcast %cst_23 : f32 to vector<8x384xf32>
    %105 = arith.addf %104, %103 : vector<8x384xf32>
    %106 = arith.divf %104, %105 : vector<8x384xf32>
    %107 = vector.extract_strided_slice %100 {offsets = [0, 384], sizes = [8, 128], strides = [1, 1]} : vector<8x512xf32> to vector<8x128xf32>
    %108 = math.tanh %107 : vector<8x128xf32>
    %109 = vector.extract_strided_slice %106 {offsets = [0, 0], sizes = [8, 128], strides = [1, 1]} : vector<8x384xf32> to vector<8x128xf32>
    %110 = vector.extract_strided_slice %106 {offsets = [0, 128], sizes = [8, 128], strides = [1, 1]} : vector<8x384xf32> to vector<8x128xf32>
    %111 = vector.extract_strided_slice %106 {offsets = [0, 256], sizes = [8, 128], strides = [1, 1]} : vector<8x384xf32> to vector<8x128xf32>
    %112 = arith.mulf %110, %92 : vector<8x128xf32>
    %113 = arith.mulf %109, %108 : vector<8x128xf32>
    %114 = arith.addf %112, %113 : vector<8x128xf32>
    %115 = math.tanh %114 : vector<8x128xf32>
    %116 = arith.mulf %111, %115 : vector<8x128xf32>
    %117 = arith.truncf %116 : vector<8x128xf32> to vector<8x128xbf16>
    %c32 = arith.constant 32 : index
    %c0_24 = arith.constant 0 : index
    %118 = vector.load %arg9[%c32, %c0_24] : memref<64x128xbf16, #tpu.memory_space<vmem>>, vector<8x128xbf16>
    tpu.vector_store %arg9[%c32, %c0_24], %117 {strides = array<i32>} : memref<64x128xbf16, #tpu.memory_space<vmem>>, vector<8x128xbf16>,
    %119 = vector.extract_strided_slice %6 {offsets = [40, 0], sizes = [8, 512], strides = [1, 1]} : vector<64x512xf32> to vector<8x512xf32>
    %120 = arith.truncf %116 : vector<8x128xf32> to vector<8x128xbf16>
    %cst_25 = arith.constant dense<0.000000e+00> : vector<8x512xf32>
    %121 = tpu.matmul %120, %2, %cst_25 {dimension_numbers = #tpu.dot_dimension_numbers<[1], [0], [0], [1], [0, 0, 1, 1], [], []>} : vector<8x128xbf16>, vector<128x512xbf16>, vector<8x512xf32> -> vector<8x512xf32>
    %122 = arith.addf %119, %121 : vector<8x512xf32>
    %123 = vector.extract_strided_slice %122 {offsets = [0, 0], sizes = [8, 384], strides = [1, 1]} : vector<8x512xf32> to vector<8x384xf32>
    %124 = arith.negf %123 : vector<8x384xf32>
    %125 = math.exp %124 : vector<8x384xf32>
    %cst_26 = arith.constant 1.000000e+00 : f32
    %126 = vector.broadcast %cst_26 : f32 to vector<8x384xf32>
    %127 = arith.addf %126, %125 : vector<8x384xf32>
    %128 = arith.divf %126, %127 : vector<8x384xf32>
    %129 = vector.extract_strided_slice %122 {offsets = [0, 384], sizes = [8, 128], strides = [1, 1]} : vector<8x512xf32> to vector<8x128xf32>
    %130 = math.tanh %129 : vector<8x128xf32>
    %131 = vector.extract_strided_slice %128 {offsets = [0, 0], sizes = [8, 128], strides = [1, 1]} : vector<8x384xf32> to vector<8x128xf32>
    %132 = vector.extract_strided_slice %128 {offsets = [0, 128], sizes = [8, 128], strides = [1, 1]} : vector<8x384xf32> to vector<8x128xf32>
    %133 = vector.extract_strided_slice %128 {offsets = [0, 256], sizes = [8, 128], strides = [1, 1]} : vector<8x384xf32> to vector<8x128xf32>
    %134 = arith.mulf %132, %114 : vector<8x128xf32>
    %135 = arith.mulf %131, %130 : vector<8x128xf32>
    %136 = arith.addf %134, %135 : vector<8x128xf32>
    %137 = math.tanh %136 : vector<8x128xf32>
    %138 = arith.mulf %133, %137 : vector<8x128xf32>
    %139 = arith.truncf %138 : vector<8x128xf32> to vector<8x128xbf16>
    %c40 = arith.constant 40 : index
    %c0_27 = arith.constant 0 : index
    %140 = vector.load %arg9[%c40, %c0_27] : memref<64x128xbf16, #tpu.memory_space<vmem>>, vector<8x128xbf16>
    tpu.vector_store %arg9[%c40, %c0_27], %139 {strides = array<i32>} : memref<64x128xbf16, #tpu.memory_space<vmem>>, vector<8x128xbf16>,
    %141 = vector.extract_strided_slice %6 {offsets = [48, 0], sizes = [8, 512], strides = [1, 1]} : vector<64x512xf32> to vector<8x512xf32>
    %142 = arith.truncf %138 : vector<8x128xf32> to vector<8x128xbf16>
    %cst_28 = arith.constant dense<0.000000e+00> : vector<8x512xf32>
    %143 = tpu.matmul %142, %2, %cst_28 {dimension_numbers = #tpu.dot_dimension_numbers<[1], [0], [0], [1], [0, 0, 1, 1], [], []>} : vector<8x128xbf16>, vector<128x512xbf16>, vector<8x512xf32> -> vector<8x512xf32>
    %144 = arith.addf %141, %143 : vector<8x512xf32>
    %145 = vector.extract_strided_slice %144 {offsets = [0, 0], sizes = [8, 384], strides = [1, 1]} : vector<8x512xf32> to vector<8x384xf32>
    %146 = arith.negf %145 : vector<8x384xf32>
    %147 = math.exp %146 : vector<8x384xf32>
    %cst_29 = arith.constant 1.000000e+00 : f32
    %148 = vector.broadcast %cst_29 : f32 to vector<8x384xf32>
    %149 = arith.addf %148, %147 : vector<8x384xf32>
    %150 = arith.divf %148, %149 : vector<8x384xf32>
    %151 = vector.extract_strided_slice %144 {offsets = [0, 384], sizes = [8, 128], strides = [1, 1]} : vector<8x512xf32> to vector<8x128xf32>
    %152 = math.tanh %151 : vector<8x128xf32>
    %153 = vector.extract_strided_slice %150 {offsets = [0, 0], sizes = [8, 128], strides = [1, 1]} : vector<8x384xf32> to vector<8x128xf32>
    %154 = vector.extract_strided_slice %150 {offsets = [0, 128], sizes = [8, 128], strides = [1, 1]} : vector<8x384xf32> to vector<8x128xf32>
    %155 = vector.extract_strided_slice %150 {offsets = [0, 256], sizes = [8, 128], strides = [1, 1]} : vector<8x384xf32> to vector<8x128xf32>
    %156 = arith.mulf %154, %136 : vector<8x128xf32>
    %157 = arith.mulf %153, %152 : vector<8x128xf32>
    %158 = arith.addf %156, %157 : vector<8x128xf32>
    %159 = math.tanh %158 : vector<8x128xf32>
    %160 = arith.mulf %155, %159 : vector<8x128xf32>
    %161 = arith.truncf %160 : vector<8x128xf32> to vector<8x128xbf16>
    %c48 = arith.constant 48 : index
    %c0_30 = arith.constant 0 : index
    %162 = vector.load %arg9[%c48, %c0_30] : memref<64x128xbf16, #tpu.memory_space<vmem>>, vector<8x128xbf16>
    tpu.vector_store %arg9[%c48, %c0_30], %161 {strides = array<i32>} : memref<64x128xbf16, #tpu.memory_space<vmem>>, vector<8x128xbf16>,
    %163 = vector.extract_strided_slice %6 {offsets = [56, 0], sizes = [8, 512], strides = [1, 1]} : vector<64x512xf32> to vector<8x512xf32>
    %164 = arith.truncf %160 : vector<8x128xf32> to vector<8x128xbf16>
    %cst_31 = arith.constant dense<0.000000e+00> : vector<8x512xf32>
    %165 = tpu.matmul %164, %2, %cst_31 {dimension_numbers = #tpu.dot_dimension_numbers<[1], [0], [0], [1], [0, 0, 1, 1], [], []>} : vector<8x128xbf16>, vector<128x512xbf16>, vector<8x512xf32> -> vector<8x512xf32>
    %166 = arith.addf %163, %165 : vector<8x512xf32>
    %167 = vector.extract_strided_slice %166 {offsets = [0, 0], sizes = [8, 384], strides = [1, 1]} : vector<8x512xf32> to vector<8x384xf32>
    %168 = arith.negf %167 : vector<8x384xf32>
    %169 = math.exp %168 : vector<8x384xf32>
    %cst_32 = arith.constant 1.000000e+00 : f32
    %170 = vector.broadcast %cst_32 : f32 to vector<8x384xf32>
    %171 = arith.addf %170, %169 : vector<8x384xf32>
    %172 = arith.divf %170, %171 : vector<8x384xf32>
    %173 = vector.extract_strided_slice %166 {offsets = [0, 384], sizes = [8, 128], strides = [1, 1]} : vector<8x512xf32> to vector<8x128xf32>
    %174 = math.tanh %173 : vector<8x128xf32>
    %175 = vector.extract_strided_slice %172 {offsets = [0, 0], sizes = [8, 128], strides = [1, 1]} : vector<8x384xf32> to vector<8x128xf32>
    %176 = vector.extract_strided_slice %172 {offsets = [0, 128], sizes = [8, 128], strides = [1, 1]} : vector<8x384xf32> to vector<8x128xf32>
    %177 = vector.extract_strided_slice %172 {offsets = [0, 256], sizes = [8, 128], strides = [1, 1]} : vector<8x384xf32> to vector<8x128xf32>
    %178 = arith.mulf %176, %158 : vector<8x128xf32>
    %179 = arith.mulf %175, %174 : vector<8x128xf32>
    %180 = arith.addf %178, %179 : vector<8x128xf32>
    %181 = math.tanh %180 : vector<8x128xf32>
    %182 = arith.mulf %177, %181 : vector<8x128xf32>
    %183 = arith.truncf %182 : vector<8x128xf32> to vector<8x128xbf16>
    %c56 = arith.constant 56 : index
    %c0_33 = arith.constant 0 : index
    %184 = vector.load %arg9[%c56, %c0_33] : memref<64x128xbf16, #tpu.memory_space<vmem>>, vector<8x128xbf16>
    tpu.vector_store %arg9[%c56, %c0_33], %183 {strides = array<i32>} : memref<64x128xbf16, #tpu.memory_space<vmem>>, vector<8x128xbf16>,
    %c0_34 = arith.constant 0 : index
    %c0_35 = arith.constant 0 : index
    %c0_36 = arith.constant 0 : index
    %185 = vector.load %arg7[%c0_34, %c0_35, %c0_36] : memref<2x8x128xf32, #tpu.memory_space<vmem>>, vector<1x8x128xf32>
    %186 = vector.shape_cast %185 : vector<1x8x128xf32> to vector<8x128xf32>
    %187 = vector.shape_cast %182 : vector<8x128xf32> to vector<1x8x128xf32>
    tpu.vector_store %arg7[%c0_34, %c0_35, %c0_36], %187 {strides = array<i32>} : memref<2x8x128xf32, #tpu.memory_space<vmem>>, vector<1x8x128xf32>,
    %c0_37 = arith.constant 0 : index
    %c0_38 = arith.constant 0 : index
    %c0_39 = arith.constant 0 : index
    %188 = vector.load %arg8[%c0_37, %c0_38, %c0_39] : memref<2x8x128xf32, #tpu.memory_space<vmem>>, vector<1x8x128xf32>
    %189 = vector.shape_cast %188 : vector<1x8x128xf32> to vector<8x128xf32>
    %190 = vector.shape_cast %180 : vector<8x128xf32> to vector<1x8x128xf32>
    tpu.vector_store %arg8[%c0_37, %c0_38, %c0_39], %190 {strides = array<i32>} : memref<2x8x128xf32, #tpu.memory_space<vmem>>, vector<1x8x128xf32>,
    %c0_40 = arith.constant 0 : index
    %c0_41 = arith.constant 0 : index
    %191 = vector.load %arg9[%c0_40, %c0_41] : memref<64x128xbf16, #tpu.memory_space<vmem>>, vector<64x128xbf16>
    %c0_42 = arith.constant 0 : index
    %c0_43 = arith.constant 0 : index
    %192 = vector.load %arg4[%c0_42, %c0_43] : memref<128x512xbf16, #tpu.memory_space<vmem>>, vector<128x512xbf16>
    %c0_44 = arith.constant 0 : index
    %c0_45 = arith.constant 0 : index
    %193 = vector.load %arg5[%c0_44, %c0_45] : memref<128x512xbf16, #tpu.memory_space<vmem>>, vector<128x512xbf16>
    %c0_46 = arith.constant 0 : index
    %c0_47 = arith.constant 0 : index
    %194 = vector.load %arg6[%c0_46, %c0_47] : memref<1x512xf32, #tpu.memory_space<vmem>>, vector<1x512xf32>
    %cst_48 = arith.constant dense<0.000000e+00> : vector<64x512xf32>
    %195 = tpu.matmul %191, %192, %cst_48 {dimension_numbers = #tpu.dot_dimension_numbers<[1], [0], [0], [1], [0, 0, 1, 1], [], []>} : vector<64x128xbf16>, vector<128x512xbf16>, vector<64x512xf32> -> vector<64x512xf32>
    %196 = vector.broadcast %194 : vector<1x512xf32> to vector<64x512xf32>
    %197 = arith.addf %195, %196 : vector<64x512xf32>
    %cst_49 = arith.constant 0.000000e+00 : f32
    %198 = vector.broadcast %cst_49 : f32 to vector<8x128xf32>
    %cst_50 = arith.constant 0.000000e+00 : f32
    %199 = vector.broadcast %cst_50 : f32 to vector<8x128xf32>
    %200 = vector.extract_strided_slice %197 {offsets = [0, 0], sizes = [8, 512], strides = [1, 1]} : vector<64x512xf32> to vector<8x512xf32>
    %201 = arith.truncf %198 : vector<8x128xf32> to vector<8x128xbf16>
    %cst_51 = arith.constant dense<0.000000e+00> : vector<8x512xf32>
    %202 = tpu.matmul %201, %193, %cst_51 {dimension_numbers = #tpu.dot_dimension_numbers<[1], [0], [0], [1], [0, 0, 1, 1], [], []>} : vector<8x128xbf16>, vector<128x512xbf16>, vector<8x512xf32> -> vector<8x512xf32>
    %203 = arith.addf %200, %202 : vector<8x512xf32>
    %204 = vector.extract_strided_slice %203 {offsets = [0, 0], sizes = [8, 384], strides = [1, 1]} : vector<8x512xf32> to vector<8x384xf32>
    %205 = arith.negf %204 : vector<8x384xf32>
    %206 = math.exp %205 : vector<8x384xf32>
    %cst_52 = arith.constant 1.000000e+00 : f32
    %207 = vector.broadcast %cst_52 : f32 to vector<8x384xf32>
    %208 = arith.addf %207, %206 : vector<8x384xf32>
    %209 = arith.divf %207, %208 : vector<8x384xf32>
    %210 = vector.extract_strided_slice %203 {offsets = [0, 384], sizes = [8, 128], strides = [1, 1]} : vector<8x512xf32> to vector<8x128xf32>
    %211 = math.tanh %210 : vector<8x128xf32>
    %212 = vector.extract_strided_slice %209 {offsets = [0, 0], sizes = [8, 128], strides = [1, 1]} : vector<8x384xf32> to vector<8x128xf32>
    %213 = vector.extract_strided_slice %209 {offsets = [0, 128], sizes = [8, 128], strides = [1, 1]} : vector<8x384xf32> to vector<8x128xf32>
    %214 = vector.extract_strided_slice %209 {offsets = [0, 256], sizes = [8, 128], strides = [1, 1]} : vector<8x384xf32> to vector<8x128xf32>
    %215 = arith.mulf %213, %199 : vector<8x128xf32>
    %216 = arith.mulf %212, %211 : vector<8x128xf32>
    %217 = arith.addf %215, %216 : vector<8x128xf32>
    %218 = math.tanh %217 : vector<8x128xf32>
    %219 = arith.mulf %214, %218 : vector<8x128xf32>
    %220 = vector.extract_strided_slice %197 {offsets = [8, 0], sizes = [8, 512], strides = [1, 1]} : vector<64x512xf32> to vector<8x512xf32>
    %221 = arith.truncf %219 : vector<8x128xf32> to vector<8x128xbf16>
    %cst_53 = arith.constant dense<0.000000e+00> : vector<8x512xf32>
    %222 = tpu.matmul %221, %193, %cst_53 {dimension_numbers = #tpu.dot_dimension_numbers<[1], [0], [0], [1], [0, 0, 1, 1], [], []>} : vector<8x128xbf16>, vector<128x512xbf16>, vector<8x512xf32> -> vector<8x512xf32>
    %223 = arith.addf %220, %222 : vector<8x512xf32>
    %224 = vector.extract_strided_slice %223 {offsets = [0, 0], sizes = [8, 384], strides = [1, 1]} : vector<8x512xf32> to vector<8x384xf32>
    %225 = arith.negf %224 : vector<8x384xf32>
    %226 = math.exp %225 : vector<8x384xf32>
    %cst_54 = arith.constant 1.000000e+00 : f32
    %227 = vector.broadcast %cst_54 : f32 to vector<8x384xf32>
    %228 = arith.addf %227, %226 : vector<8x384xf32>
    %229 = arith.divf %227, %228 : vector<8x384xf32>
    %230 = vector.extract_strided_slice %223 {offsets = [0, 384], sizes = [8, 128], strides = [1, 1]} : vector<8x512xf32> to vector<8x128xf32>
    %231 = math.tanh %230 : vector<8x128xf32>
    %232 = vector.extract_strided_slice %229 {offsets = [0, 0], sizes = [8, 128], strides = [1, 1]} : vector<8x384xf32> to vector<8x128xf32>
    %233 = vector.extract_strided_slice %229 {offsets = [0, 128], sizes = [8, 128], strides = [1, 1]} : vector<8x384xf32> to vector<8x128xf32>
    %234 = vector.extract_strided_slice %229 {offsets = [0, 256], sizes = [8, 128], strides = [1, 1]} : vector<8x384xf32> to vector<8x128xf32>
    %235 = arith.mulf %233, %217 : vector<8x128xf32>
    %236 = arith.mulf %232, %231 : vector<8x128xf32>
    %237 = arith.addf %235, %236 : vector<8x128xf32>
    %238 = math.tanh %237 : vector<8x128xf32>
    %239 = arith.mulf %234, %238 : vector<8x128xf32>
    %240 = vector.extract_strided_slice %197 {offsets = [16, 0], sizes = [8, 512], strides = [1, 1]} : vector<64x512xf32> to vector<8x512xf32>
    %241 = arith.truncf %239 : vector<8x128xf32> to vector<8x128xbf16>
    %cst_55 = arith.constant dense<0.000000e+00> : vector<8x512xf32>
    %242 = tpu.matmul %241, %193, %cst_55 {dimension_numbers = #tpu.dot_dimension_numbers<[1], [0], [0], [1], [0, 0, 1, 1], [], []>} : vector<8x128xbf16>, vector<128x512xbf16>, vector<8x512xf32> -> vector<8x512xf32>
    %243 = arith.addf %240, %242 : vector<8x512xf32>
    %244 = vector.extract_strided_slice %243 {offsets = [0, 0], sizes = [8, 384], strides = [1, 1]} : vector<8x512xf32> to vector<8x384xf32>
    %245 = arith.negf %244 : vector<8x384xf32>
    %246 = math.exp %245 : vector<8x384xf32>
    %cst_56 = arith.constant 1.000000e+00 : f32
    %247 = vector.broadcast %cst_56 : f32 to vector<8x384xf32>
    %248 = arith.addf %247, %246 : vector<8x384xf32>
    %249 = arith.divf %247, %248 : vector<8x384xf32>
    %250 = vector.extract_strided_slice %243 {offsets = [0, 384], sizes = [8, 128], strides = [1, 1]} : vector<8x512xf32> to vector<8x128xf32>
    %251 = math.tanh %250 : vector<8x128xf32>
    %252 = vector.extract_strided_slice %249 {offsets = [0, 0], sizes = [8, 128], strides = [1, 1]} : vector<8x384xf32> to vector<8x128xf32>
    %253 = vector.extract_strided_slice %249 {offsets = [0, 128], sizes = [8, 128], strides = [1, 1]} : vector<8x384xf32> to vector<8x128xf32>
    %254 = vector.extract_strided_slice %249 {offsets = [0, 256], sizes = [8, 128], strides = [1, 1]} : vector<8x384xf32> to vector<8x128xf32>
    %255 = arith.mulf %253, %237 : vector<8x128xf32>
    %256 = arith.mulf %252, %251 : vector<8x128xf32>
    %257 = arith.addf %255, %256 : vector<8x128xf32>
    %258 = math.tanh %257 : vector<8x128xf32>
    %259 = arith.mulf %254, %258 : vector<8x128xf32>
    %260 = vector.extract_strided_slice %197 {offsets = [24, 0], sizes = [8, 512], strides = [1, 1]} : vector<64x512xf32> to vector<8x512xf32>
    %261 = arith.truncf %259 : vector<8x128xf32> to vector<8x128xbf16>
    %cst_57 = arith.constant dense<0.000000e+00> : vector<8x512xf32>
    %262 = tpu.matmul %261, %193, %cst_57 {dimension_numbers = #tpu.dot_dimension_numbers<[1], [0], [0], [1], [0, 0, 1, 1], [], []>} : vector<8x128xbf16>, vector<128x512xbf16>, vector<8x512xf32> -> vector<8x512xf32>
    %263 = arith.addf %260, %262 : vector<8x512xf32>
    %264 = vector.extract_strided_slice %263 {offsets = [0, 0], sizes = [8, 384], strides = [1, 1]} : vector<8x512xf32> to vector<8x384xf32>
    %265 = arith.negf %264 : vector<8x384xf32>
    %266 = math.exp %265 : vector<8x384xf32>
    %cst_58 = arith.constant 1.000000e+00 : f32
    %267 = vector.broadcast %cst_58 : f32 to vector<8x384xf32>
    %268 = arith.addf %267, %266 : vector<8x384xf32>
    %269 = arith.divf %267, %268 : vector<8x384xf32>
    %270 = vector.extract_strided_slice %263 {offsets = [0, 384], sizes = [8, 128], strides = [1, 1]} : vector<8x512xf32> to vector<8x128xf32>
    %271 = math.tanh %270 : vector<8x128xf32>
    %272 = vector.extract_strided_slice %269 {offsets = [0, 0], sizes = [8, 128], strides = [1, 1]} : vector<8x384xf32> to vector<8x128xf32>
    %273 = vector.extract_strided_slice %269 {offsets = [0, 128], sizes = [8, 128], strides = [1, 1]} : vector<8x384xf32> to vector<8x128xf32>
    %274 = vector.extract_strided_slice %269 {offsets = [0, 256], sizes = [8, 128], strides = [1, 1]} : vector<8x384xf32> to vector<8x128xf32>
    %275 = arith.mulf %273, %257 : vector<8x128xf32>
    %276 = arith.mulf %272, %271 : vector<8x128xf32>
    %277 = arith.addf %275, %276 : vector<8x128xf32>
    %278 = math.tanh %277 : vector<8x128xf32>
    %279 = arith.mulf %274, %278 : vector<8x128xf32>
    %280 = vector.extract_strided_slice %197 {offsets = [32, 0], sizes = [8, 512], strides = [1, 1]} : vector<64x512xf32> to vector<8x512xf32>
    %281 = arith.truncf %279 : vector<8x128xf32> to vector<8x128xbf16>
    %cst_59 = arith.constant dense<0.000000e+00> : vector<8x512xf32>
    %282 = tpu.matmul %281, %193, %cst_59 {dimension_numbers = #tpu.dot_dimension_numbers<[1], [0], [0], [1], [0, 0, 1, 1], [], []>} : vector<8x128xbf16>, vector<128x512xbf16>, vector<8x512xf32> -> vector<8x512xf32>
    %283 = arith.addf %280, %282 : vector<8x512xf32>
    %284 = vector.extract_strided_slice %283 {offsets = [0, 0], sizes = [8, 384], strides = [1, 1]} : vector<8x512xf32> to vector<8x384xf32>
    %285 = arith.negf %284 : vector<8x384xf32>
    %286 = math.exp %285 : vector<8x384xf32>
    %cst_60 = arith.constant 1.000000e+00 : f32
    %287 = vector.broadcast %cst_60 : f32 to vector<8x384xf32>
    %288 = arith.addf %287, %286 : vector<8x384xf32>
    %289 = arith.divf %287, %288 : vector<8x384xf32>
    %290 = vector.extract_strided_slice %283 {offsets = [0, 384], sizes = [8, 128], strides = [1, 1]} : vector<8x512xf32> to vector<8x128xf32>
    %291 = math.tanh %290 : vector<8x128xf32>
    %292 = vector.extract_strided_slice %289 {offsets = [0, 0], sizes = [8, 128], strides = [1, 1]} : vector<8x384xf32> to vector<8x128xf32>
    %293 = vector.extract_strided_slice %289 {offsets = [0, 128], sizes = [8, 128], strides = [1, 1]} : vector<8x384xf32> to vector<8x128xf32>
    %294 = vector.extract_strided_slice %289 {offsets = [0, 256], sizes = [8, 128], strides = [1, 1]} : vector<8x384xf32> to vector<8x128xf32>
    %295 = arith.mulf %293, %277 : vector<8x128xf32>
    %296 = arith.mulf %292, %291 : vector<8x128xf32>
    %297 = arith.addf %295, %296 : vector<8x128xf32>
    %298 = math.tanh %297 : vector<8x128xf32>
    %299 = arith.mulf %294, %298 : vector<8x128xf32>
    %300 = vector.extract_strided_slice %197 {offsets = [40, 0], sizes = [8, 512], strides = [1, 1]} : vector<64x512xf32> to vector<8x512xf32>
    %301 = arith.truncf %299 : vector<8x128xf32> to vector<8x128xbf16>
    %cst_61 = arith.constant dense<0.000000e+00> : vector<8x512xf32>
    %302 = tpu.matmul %301, %193, %cst_61 {dimension_numbers = #tpu.dot_dimension_numbers<[1], [0], [0], [1], [0, 0, 1, 1], [], []>} : vector<8x128xbf16>, vector<128x512xbf16>, vector<8x512xf32> -> vector<8x512xf32>
    %303 = arith.addf %300, %302 : vector<8x512xf32>
    %304 = vector.extract_strided_slice %303 {offsets = [0, 0], sizes = [8, 384], strides = [1, 1]} : vector<8x512xf32> to vector<8x384xf32>
    %305 = arith.negf %304 : vector<8x384xf32>
    %306 = math.exp %305 : vector<8x384xf32>
    %cst_62 = arith.constant 1.000000e+00 : f32
    %307 = vector.broadcast %cst_62 : f32 to vector<8x384xf32>
    %308 = arith.addf %307, %306 : vector<8x384xf32>
    %309 = arith.divf %307, %308 : vector<8x384xf32>
    %310 = vector.extract_strided_slice %303 {offsets = [0, 384], sizes = [8, 128], strides = [1, 1]} : vector<8x512xf32> to vector<8x128xf32>
    %311 = math.tanh %310 : vector<8x128xf32>
    %312 = vector.extract_strided_slice %309 {offsets = [0, 0], sizes = [8, 128], strides = [1, 1]} : vector<8x384xf32> to vector<8x128xf32>
    %313 = vector.extract_strided_slice %309 {offsets = [0, 128], sizes = [8, 128], strides = [1, 1]} : vector<8x384xf32> to vector<8x128xf32>
    %314 = vector.extract_strided_slice %309 {offsets = [0, 256], sizes = [8, 128], strides = [1, 1]} : vector<8x384xf32> to vector<8x128xf32>
    %315 = arith.mulf %313, %297 : vector<8x128xf32>
    %316 = arith.mulf %312, %311 : vector<8x128xf32>
    %317 = arith.addf %315, %316 : vector<8x128xf32>
    %318 = math.tanh %317 : vector<8x128xf32>
    %319 = arith.mulf %314, %318 : vector<8x128xf32>
    %320 = vector.extract_strided_slice %197 {offsets = [48, 0], sizes = [8, 512], strides = [1, 1]} : vector<64x512xf32> to vector<8x512xf32>
    %321 = arith.truncf %319 : vector<8x128xf32> to vector<8x128xbf16>
    %cst_63 = arith.constant dense<0.000000e+00> : vector<8x512xf32>
    %322 = tpu.matmul %321, %193, %cst_63 {dimension_numbers = #tpu.dot_dimension_numbers<[1], [0], [0], [1], [0, 0, 1, 1], [], []>} : vector<8x128xbf16>, vector<128x512xbf16>, vector<8x512xf32> -> vector<8x512xf32>
    %323 = arith.addf %320, %322 : vector<8x512xf32>
    %324 = vector.extract_strided_slice %323 {offsets = [0, 0], sizes = [8, 384], strides = [1, 1]} : vector<8x512xf32> to vector<8x384xf32>
    %325 = arith.negf %324 : vector<8x384xf32>
    %326 = math.exp %325 : vector<8x384xf32>
    %cst_64 = arith.constant 1.000000e+00 : f32
    %327 = vector.broadcast %cst_64 : f32 to vector<8x384xf32>
    %328 = arith.addf %327, %326 : vector<8x384xf32>
    %329 = arith.divf %327, %328 : vector<8x384xf32>
    %330 = vector.extract_strided_slice %323 {offsets = [0, 384], sizes = [8, 128], strides = [1, 1]} : vector<8x512xf32> to vector<8x128xf32>
    %331 = math.tanh %330 : vector<8x128xf32>
    %332 = vector.extract_strided_slice %329 {offsets = [0, 0], sizes = [8, 128], strides = [1, 1]} : vector<8x384xf32> to vector<8x128xf32>
    %333 = vector.extract_strided_slice %329 {offsets = [0, 128], sizes = [8, 128], strides = [1, 1]} : vector<8x384xf32> to vector<8x128xf32>
    %334 = vector.extract_strided_slice %329 {offsets = [0, 256], sizes = [8, 128], strides = [1, 1]} : vector<8x384xf32> to vector<8x128xf32>
    %335 = arith.mulf %333, %317 : vector<8x128xf32>
    %336 = arith.mulf %332, %331 : vector<8x128xf32>
    %337 = arith.addf %335, %336 : vector<8x128xf32>
    %338 = math.tanh %337 : vector<8x128xf32>
    %339 = arith.mulf %334, %338 : vector<8x128xf32>
    %340 = vector.extract_strided_slice %197 {offsets = [56, 0], sizes = [8, 512], strides = [1, 1]} : vector<64x512xf32> to vector<8x512xf32>
    %341 = arith.truncf %339 : vector<8x128xf32> to vector<8x128xbf16>
    %cst_65 = arith.constant dense<0.000000e+00> : vector<8x512xf32>
    %342 = tpu.matmul %341, %193, %cst_65 {dimension_numbers = #tpu.dot_dimension_numbers<[1], [0], [0], [1], [0, 0, 1, 1], [], []>} : vector<8x128xbf16>, vector<128x512xbf16>, vector<8x512xf32> -> vector<8x512xf32>
    %343 = arith.addf %340, %342 : vector<8x512xf32>
    %344 = vector.extract_strided_slice %343 {offsets = [0, 0], sizes = [8, 384], strides = [1, 1]} : vector<8x512xf32> to vector<8x384xf32>
    %345 = arith.negf %344 : vector<8x384xf32>
    %346 = math.exp %345 : vector<8x384xf32>
    %cst_66 = arith.constant 1.000000e+00 : f32
    %347 = vector.broadcast %cst_66 : f32 to vector<8x384xf32>
    %348 = arith.addf %347, %346 : vector<8x384xf32>
    %349 = arith.divf %347, %348 : vector<8x384xf32>
    %350 = vector.extract_strided_slice %343 {offsets = [0, 384], sizes = [8, 128], strides = [1, 1]} : vector<8x512xf32> to vector<8x128xf32>
    %351 = math.tanh %350 : vector<8x128xf32>
    %352 = vector.extract_strided_slice %349 {offsets = [0, 0], sizes = [8, 128], strides = [1, 1]} : vector<8x384xf32> to vector<8x128xf32>
    %353 = vector.extract_strided_slice %349 {offsets = [0, 128], sizes = [8, 128], strides = [1, 1]} : vector<8x384xf32> to vector<8x128xf32>
    %354 = vector.extract_strided_slice %349 {offsets = [0, 256], sizes = [8, 128], strides = [1, 1]} : vector<8x384xf32> to vector<8x128xf32>
    %355 = arith.mulf %353, %337 : vector<8x128xf32>
    %356 = arith.mulf %352, %351 : vector<8x128xf32>
    %357 = arith.addf %355, %356 : vector<8x128xf32>
    %358 = math.tanh %357 : vector<8x128xf32>
    %359 = arith.mulf %354, %358 : vector<8x128xf32>
    %c1 = arith.constant 1 : index
    %c0_67 = arith.constant 0 : index
    %c0_68 = arith.constant 0 : index
    %360 = vector.load %arg7[%c1, %c0_67, %c0_68] : memref<2x8x128xf32, #tpu.memory_space<vmem>>, vector<1x8x128xf32>
    %361 = vector.shape_cast %360 : vector<1x8x128xf32> to vector<8x128xf32>
    %362 = vector.shape_cast %359 : vector<8x128xf32> to vector<1x8x128xf32>
    tpu.vector_store %arg7[%c1, %c0_67, %c0_68], %362 {strides = array<i32>} : memref<2x8x128xf32, #tpu.memory_space<vmem>>, vector<1x8x128xf32>,
    %c1_69 = arith.constant 1 : index
    %c0_70 = arith.constant 0 : index
    %c0_71 = arith.constant 0 : index
    %363 = vector.load %arg8[%c1_69, %c0_70, %c0_71] : memref<2x8x128xf32, #tpu.memory_space<vmem>>, vector<1x8x128xf32>
    %364 = vector.shape_cast %363 : vector<1x8x128xf32> to vector<8x128xf32>
    %365 = vector.shape_cast %357 : vector<8x128xf32> to vector<1x8x128xf32>
    tpu.vector_store %arg8[%c1_69, %c0_70, %c0_71], %365 {strides = array<i32>} : memref<2x8x128xf32, #tpu.memory_space<vmem>>, vector<1x8x128xf32>,
    return
  }
}

</mosaic_0001>

<llo_original>
// kernel: encoder_pallas.1
$region0: #{encoder_pallas.1}
  #allocation0 [shape = 'u32[]', space=smem, size = 0x4, offset = 0x4, fixed_abs, tag = 'smem constant byte address 0x4 - core index']
  #allocation1 [shape = 'u32[72,128]{1,0:T(1,128)}', space=vmem, size = 0x9000, scoped, tag = 'internal scratch']
  #allocation2 [shape = 'bf16[64,128]{1,0:T(8,128)(2,1)}', space=vmem, size = 0x4000, scoped, tag = 'scratch operand']
  %s0 = inlined_call_operand.vmem [shape: bf16[64,128], index: 0, kind: input, shape index: {}]
  %s1 = inlined_call_operand.vmem [shape: bf16[128,512], index: 1, kind: input, shape index: {}]
  %s2 = inlined_call_operand.vmem [shape: bf16[128,512], index: 2, kind: input, shape index: {}]
  %s3 = inlined_call_operand.vmem [shape: f32[1,512], index: 3, kind: input, shape index: {}]
  %s4 = inlined_call_operand.vmem [shape: bf16[128,512], index: 4, kind: input, shape index: {}]
  %s5 = inlined_call_operand.vmem [shape: bf16[128,512], index: 5, kind: input, shape index: {}]
  %s6 = inlined_call_operand.vmem [shape: f32[1,512], index: 6, kind: input, shape index: {}]
  %s7 = inlined_call_operand.vmem [shape: f32[2,8,128], index: 7, kind: output, shape index: {0}]
  %s8 = inlined_call_operand.vmem [shape: f32[2,8,128], index: 8, kind: output, shape index: {1}]
  %9 = xla_tuple %s7, %s8
  %s10 = sld [smem:[#allocation0]]
  $region46: #{encoder_pallas.1} parent=0
    _
  %s12 = ssub.s32 1, %s10
  %s13 = scalar_select 0, %s12, %s10
  // Predicated region
  $region2: #{encoder_pallas.1} parent=0 // pred_check
    _
  $region3: #{encoder_pallas.1} parent=0 // pred_check_branch
    %15 = sbr.rel (0) target = $region5
  $region4: #{encoder_pallas.1} parent=0 // pred_region
    _
  $region5: #{encoder_pallas.1} parent=0 // pred_fallthru
    _
  // Predicated region
  $region6: #{encoder_pallas.1} parent=0 // pred_check
    _
  $region7: #{encoder_pallas.1} parent=0 // pred_check_branch
    %17 = sbr.rel (0) target = $region9
  $region8: #{encoder_pallas.1} parent=0 // pred_region
    _
  $region9: #{encoder_pallas.1} parent=0 // pred_fallthru
    _
  // Predicated region
  $region10: #{encoder_pallas.1} parent=0 // pred_check
    _
  $region11: #{encoder_pallas.1} parent=0 // pred_check_branch
    %19 = sbr.rel (0) target = $region13
  $region12: #{encoder_pallas.1} parent=0 // pred_region
    _
  $region13: #{encoder_pallas.1} parent=0 // pred_fallthru
    _
  // Predicated region
  $region14: #{encoder_pallas.1} parent=0 // pred_check
    _
  $region15: #{encoder_pallas.1} parent=0 // pred_check_branch
    %21 = sbr.rel (0) target = $region17
  $region16: #{encoder_pallas.1} parent=0 // pred_region
    _
  $region17: #{encoder_pallas.1} parent=0 // pred_fallthru
    _
  // Predicated region
  $region18: #{encoder_pallas.1} parent=0 // pred_check
    _
  $region19: #{encoder_pallas.1} parent=0 // pred_check_branch
    %23 = sbr.rel (0) target = $region21
  $region20: #{encoder_pallas.1} parent=0 // pred_region
    _
  $region21: #{encoder_pallas.1} parent=0 // pred_fallthru
    _
  // Predicated region
  $region22: #{encoder_pallas.1} parent=0 // pred_check
    _
  $region23: #{encoder_pallas.1} parent=0 // pred_check_branch
    %25 = sbr.rel (0) target = $region25
  $region24: #{encoder_pallas.1} parent=0 // pred_region
    _
  $region25: #{encoder_pallas.1} parent=0 // pred_fallthru
    _
  // Predicated region
  $region26: #{encoder_pallas.1} parent=0 // pred_check
    _
  $region27: #{encoder_pallas.1} parent=0 // pred_check_branch
    %27 = sbr.rel (0) target = $region29
  $region28: #{encoder_pallas.1} parent=0 // pred_region
    _
  $region29: #{encoder_pallas.1} parent=0 // pred_fallthru
    _
  %v29 = vld [vmem:[%s0] sm:$0xf]
  %v30 = vld [vmem:[%s0 + $0x4] sm:$0xf]
  %v31 = vld [vmem:[%s0 + $0x8] sm:$0xf]
  %v32 = vld [vmem:[%s0 + $0xc] sm:$0xf]
  %v33 = vld [vmem:[%s0 + $0x10] sm:$0xf]
  %v34 = vld [vmem:[%s0 + $0x14] sm:$0xf]
  %v35 = vld [vmem:[%s0 + $0x18] sm:$0xf]
  %v36 = vld [vmem:[%s0 + $0x1c] sm:$0xf]
  %v37 = vld [vmem:[%s1] sm:$0xff]
  %v38 = vld [vmem:[%s1 + $0x8] sm:$0xff]
  %v39 = vld [vmem:[%s1 + $0x10] sm:$0xff]
  %v40 = vld [vmem:[%s1 + $0x18] sm:$0xff]
  %v41 = vld [vmem:[%s1 + $0x20] sm:$0xff]
  %v42 = vld [vmem:[%s1 + $0x28] sm:$0xff]
  %v43 = vld [vmem:[%s1 + $0x30] sm:$0xff]
  %v44 = vld [vmem:[%s1 + $0x38] sm:$0xff]
  %v45 = vld [vmem:[%s1 + $0x40] sm:$0xff]
  %v46 = vld [vmem:[%s1 + $0x48] sm:$0xff]
  %v47 = vld [vmem:[%s1 + $0x50] sm:$0xff]
  %v48 = vld [vmem:[%s1 + $0x58] sm:$0xff]
  %v49 = vld [vmem:[%s1 + $0x60] sm:$0xff]
  %v50 = vld [vmem:[%s1 + $0x68] sm:$0xff]
  %v51 = vld [vmem:[%s1 + $0x70] sm:$0xff]
  %v52 = vld [vmem:[%s1 + $0x78] sm:$0xff]
  %v53 = vld [vmem:[%s1 + $0x80] sm:$0xff]
  %v54 = vld [vmem:[%s1 + $0x88] sm:$0xff]
  %v55 = vld [vmem:[%s1 + $0x90] sm:$0xff]
  %v56 = vld [vmem:[%s1 + $0x98] sm:$0xff]
  %v57 = vld [vmem:[%s1 + $0xa0] sm:$0xff]
  %v58 = vld [vmem:[%s1 + $0xa8] sm:$0xff]
  %v59 = vld [vmem:[%s1 + $0xb0] sm:$0xff]
  %v60 = vld [vmem:[%s1 + $0xb8] sm:$0xff]
  %v61 = vld [vmem:[%s1 + $0xc0] sm:$0xff]
  %v62 = vld [vmem:[%s1 + $0xc8] sm:$0xff]
  %v63 = vld [vmem:[%s1 + $0xd0] sm:$0xff]
  %v64 = vld [vmem:[%s1 + $0xd8] sm:$0xff]
  %v65 = vld [vmem:[%s1 + $0xe0] sm:$0xff]
  %v66 = vld [vmem:[%s1 + $0xe8] sm:$0xff]
  %v67 = vld [vmem:[%s1 + $0xf0] sm:$0xff]
  %v68 = vld [vmem:[%s1 + $0xf8] sm:$0xff]
  %v69 = vld [vmem:[%s2] sm:$0xff]
  %v70 = vld [vmem:[%s2 + $0x8] sm:$0xff]
  %v71 = vld [vmem:[%s2 + $0x10] sm:$0xff]
  %v72 = vld [vmem:[%s2 + $0x18] sm:$0xff]
  %v73 = vld [vmem:[%s2 + $0x20] sm:$0xff]
  %v74 = vld [vmem:[%s2 + $0x28] sm:$0xff]
  %v75 = vld [vmem:[%s2 + $0x30] sm:$0xff]
  %v76 = vld [vmem:[%s2 + $0x38] sm:$0xff]
  %v77 = vld [vmem:[%s2 + $0x40] sm:$0xff]
  %v78 = vld [vmem:[%s2 + $0x48] sm:$0xff]
  %v79 = vld [vmem:[%s2 + $0x50] sm:$0xff]
  %v80 = vld [vmem:[%s2 + $0x58] sm:$0xff]
  %v81 = vld [vmem:[%s2 + $0x60] sm:$0xff]
  %v82 = vld [vmem:[%s2 + $0x68] sm:$0xff]
  %v83 = vld [vmem:[%s2 + $0x70] sm:$0xff]
  %v84 = vld [vmem:[%s2 + $0x78] sm:$0xff]
  %v85 = vld [vmem:[%s2 + $0x80] sm:$0xff]
  %v86 = vld [vmem:[%s2 + $0x88] sm:$0xff]
  %v87 = vld [vmem:[%s2 + $0x90] sm:$0xff]
  %v88 = vld [vmem:[%s2 + $0x98] sm:$0xff]
  %v89 = vld [vmem:[%s2 + $0xa0] sm:$0xff]
  %v90 = vld [vmem:[%s2 + $0xa8] sm:$0xff]
  %v91 = vld [vmem:[%s2 + $0xb0] sm:$0xff]
  %v92 = vld [vmem:[%s2 + $0xb8] sm:$0xff]
  %v93 = vld [vmem:[%s2 + $0xc0] sm:$0xff]
  %v94 = vld [vmem:[%s2 + $0xc8] sm:$0xff]
  %v95 = vld [vmem:[%s2 + $0xd0] sm:$0xff]
  %v96 = vld [vmem:[%s2 + $0xd8] sm:$0xff]
  %v97 = vld [vmem:[%s2 + $0xe0] sm:$0xff]
  %v98 = vld [vmem:[%s2 + $0xe8] sm:$0xff]
  %v99 = vld [vmem:[%s2 + $0xf0] sm:$0xff]
  %v100 = vld [vmem:[%s2 + $0xf8] sm:$0xff]
  %v101 = vld [vmem:[%s3] sm:$0xf]
  %v103 = vperm.slane %v101, 0
  %v104 = vperm.slane %v101, 1
  %v105 = vperm.slane %v101, 2
  %v106 = vperm.slane %v101, 3
  %v119 = vunpack.c.l.b16 %v29
  %v120 = vunpack.c.l.b16 %v30
  %v121 = vunpack.c.l.b16 %v31
  %v122 = vunpack.c.l.b16 %v32
  %v123 = vunpack.c.l.b16 %v33
  %v124 = vunpack.c.l.b16 %v34
  %v125 = vunpack.c.l.b16 %v35
  %v126 = vunpack.c.l.b16 %v36
  %v127 = vpack.c.b16 %v120, %v119
  %v128 = vpack.c.b16 %v122, %v121
  %v129 = vpack.c.b16 %v124, %v123
  %v130 = vpack.c.b16 %v126, %v125
  %v167 = vunpack.c.l.b16 %v37
  %v168 = vunpack.c.h.b16 %v37
  %v169 = vunpack.c.l.b16 %v38
  %v170 = vunpack.c.h.b16 %v38
  %v171 = vunpack.c.l.b16 %v39
  %v172 = vunpack.c.h.b16 %v39
  %v173 = vunpack.c.l.b16 %v40
  %v174 = vunpack.c.h.b16 %v40
  %v175 = vunpack.c.l.b16 %v41
  %v176 = vunpack.c.h.b16 %v41
  %v177 = vunpack.c.l.b16 %v42
  %v178 = vunpack.c.h.b16 %v42
  %v179 = vunpack.c.l.b16 %v43
  %v180 = vunpack.c.h.b16 %v43
  %v181 = vunpack.c.l.b16 %v44
  %v182 = vunpack.c.h.b16 %v44
  %v183 = vunpack.c.l.b16 %v45
  %v184 = vunpack.c.h.b16 %v45
  %v185 = vunpack.c.l.b16 %v46
  %v186 = vunpack.c.h.b16 %v46
  %v187 = vunpack.c.l.b16 %v47
  %v188 = vunpack.c.h.b16 %v47
  %v189 = vunpack.c.l.b16 %v48
  %v190 = vunpack.c.h.b16 %v48
  %v191 = vunpack.c.l.b16 %v49
  %v192 = vunpack.c.h.b16 %v49
  %v193 = vunpack.c.l.b16 %v50
  %v194 = vunpack.c.h.b16 %v50
  %v195 = vunpack.c.l.b16 %v51
  %v196 = vunpack.c.h.b16 %v51
  %v197 = vunpack.c.l.b16 %v52
  %v198 = vunpack.c.h.b16 %v52
  %v199 = vunpack.c.l.b16 %v53
  %v200 = vunpack.c.h.b16 %v53
  %v201 = vunpack.c.l.b16 %v54
  %v202 = vunpack.c.h.b16 %v54
  %v203 = vunpack.c.l.b16 %v55
  %v204 = vunpack.c.h.b16 %v55
  %v205 = vunpack.c.l.b16 %v56
  %v206 = vunpack.c.h.b16 %v56
  %v207 = vunpack.c.l.b16 %v57
  %v208 = vunpack.c.h.b16 %v57
  %v209 = vunpack.c.l.b16 %v58
  %v210 = vunpack.c.h.b16 %v58
  %v211 = vunpack.c.l.b16 %v59
  %v212 = vunpack.c.h.b16 %v59
  %v213 = vunpack.c.l.b16 %v60
  %v214 = vunpack.c.h.b16 %v60
  %v215 = vunpack.c.l.b16 %v61
  %v216 = vunpack.c.h.b16 %v61
  %v217 = vunpack.c.l.b16 %v62
  %v218 = vunpack.c.h.b16 %v62
  %v219 = vunpack.c.l.b16 %v63
  %v220 = vunpack.c.h.b16 %v63
  %v221 = vunpack.c.l.b16 %v64
  %v222 = vunpack.c.h.b16 %v64
  %v223 = vunpack.c.l.b16 %v65
  %v224 = vunpack.c.h.b16 %v65
  %v225 = vunpack.c.l.b16 %v66
  %v226 = vunpack.c.h.b16 %v66
  %v227 = vunpack.c.l.b16 %v67
  %v228 = vunpack.c.h.b16 %v67
  %v229 = vunpack.c.l.b16 %v68
  %v230 = vunpack.c.h.b16 %v68
  %v231 = vpack.c.b16 %v171, %v167
  %v232 = vpack.c.b16 %v172, %v168
  %v233 = vpack.c.b16 %v173, %v169
  %v234 = vpack.c.b16 %v174, %v170
  %v235 = vpack.c.b16 %v179, %v175
  %v236 = vpack.c.b16 %v180, %v176
  %v237 = vpack.c.b16 %v181, %v177
  %v238 = vpack.c.b16 %v182, %v178
  %v239 = vpack.c.b16 %v187, %v183
  %v240 = vpack.c.b16 %v188, %v184
  %v241 = vpack.c.b16 %v189, %v185
  %v242 = vpack.c.b16 %v190, %v186
  %v243 = vpack.c.b16 %v195, %v191
  %v244 = vpack.c.b16 %v196, %v192
  %v245 = vpack.c.b16 %v197, %v193
  %v246 = vpack.c.b16 %v198, %v194
  %v247 = vpack.c.b16 %v203, %v199
  %v248 = vpack.c.b16 %v204, %v200
  %v249 = vpack.c.b16 %v205, %v201
  %v250 = vpack.c.b16 %v206, %v202
  %v251 = vpack.c.b16 %v211, %v207
  %v252 = vpack.c.b16 %v212, %v208
  %v253 = vpack.c.b16 %v213, %v209
  %v254 = vpack.c.b16 %v214, %v210
  %v255 = vpack.c.b16 %v219, %v215
  %v256 = vpack.c.b16 %v220, %v216
  %v257 = vpack.c.b16 %v221, %v217
  %v258 = vpack.c.b16 %v222, %v218
  %v259 = vpack.c.b16 %v227, %v223
  %v260 = vpack.c.b16 %v228, %v224
  %v261 = vpack.c.b16 %v229, %v225
  %v262 = vpack.c.b16 %v230, %v226
  %295 = vmatpush.bf16.msra.mxu0 %v259
  %296 = vmatpush.bf16.msra.mxu0 %v255
  %297 = vmatpush.bf16.msra.mxu0 %v251
  %298 = vmatpush.bf16.msra.mxu0 %v247
  %299 = vmatpush.bf16.msra.mxu0 %v243
  %300 = vmatpush.bf16.msra.mxu0 %v239
  %301 = vmatpush.bf16.msra.mxu0 %v235
  %302 = vmatpush.bf16.msra.mxu0 %v231
  %303 = vmatmul.bf16.gmra.mxu0 %v127
  %v304 = vpop.f32.mrf.mxu0
  %v305 = vadd.f32 %v103, %v304
  %v306 = vpop.f32.mrf.mxu0
  %v307 = vadd.f32 %v103, %v306
  %308 = vmatmul.bf16.gmra.mxu0 %v128
  %v309 = vpop.f32.mrf.mxu0
  %v310 = vadd.f32 %v103, %v309
  %v311 = vpop.f32.mrf.mxu0
  %v312 = vadd.f32 %v103, %v311
  %313 = vmatmul.bf16.gmra.mxu0 %v129
  %v314 = vpop.f32.mrf.mxu0
  %v315 = vadd.f32 %v103, %v314
  %v316 = vpop.f32.mrf.mxu0
  %v317 = vadd.f32 %v103, %v316
  %318 = vmatmul.bf16.gmra.mxu0 %v130
  %v319 = vpop.f32.mrf.mxu0
  %v320 = vadd.f32 %v103, %v319
  %v321 = vpop.f32.mrf.mxu0
  %v322 = vadd.f32 %v103, %v321
  %323 = vdwg.mxu0
  %324 = vmatpush.bf16.msra.mxu0 %v260
  %325 = vmatpush.bf16.msra.mxu0 %v256
  %326 = vmatpush.bf16.msra.mxu0 %v252
  %327 = vmatpush.bf16.msra.mxu0 %v248
  %328 = vmatpush.bf16.msra.mxu0 %v244
  %329 = vmatpush.bf16.msra.mxu0 %v240
  %330 = vmatpush.bf16.msra.mxu0 %v236
  %331 = vmatpush.bf16.msra.mxu0 %v232
  %332 = vmatmul.bf16.gmra.mxu0 %v127
  %v333 = vpop.f32.mrf.mxu0
  %v334 = vadd.f32 %v104, %v333
  %v335 = vpop.f32.mrf.mxu0
  %v336 = vadd.f32 %v104, %v335
  %337 = vmatmul.bf16.gmra.mxu0 %v128
  %v338 = vpop.f32.mrf.mxu0
  %v339 = vadd.f32 %v104, %v338
  %v340 = vpop.f32.mrf.mxu0
  %v341 = vadd.f32 %v104, %v340
  %342 = vmatmul.bf16.gmra.mxu0 %v129
  %v343 = vpop.f32.mrf.mxu0
  %v344 = vadd.f32 %v104, %v343
  %v345 = vpop.f32.mrf.mxu0
  %v346 = vadd.f32 %v104, %v345
  %347 = vmatmul.bf16.gmra.mxu0 %v130
  %v348 = vpop.f32.mrf.mxu0
  %v349 = vadd.f32 %v104, %v348
  %v350 = vpop.f32.mrf.mxu0
  %v351 = vadd.f32 %v104, %v350
  %352 = vdwg.mxu0
  %353 = vmatpush.bf16.msra.mxu0 %v261
  %354 = vmatpush.bf16.msra.mxu0 %v257
  %355 = vmatpush.bf16.msra.mxu0 %v253
  %356 = vmatpush.bf16.msra.mxu0 %v249
  %357 = vmatpush.bf16.msra.mxu0 %v245
  %358 = vmatpush.bf16.msra.mxu0 %v241
  %359 = vmatpush.bf16.msra.mxu0 %v237
  %360 = vmatpush.bf16.msra.mxu0 %v233
  %361 = vmatmul.bf16.gmra.mxu0 %v127
  %v362 = vpop.f32.mrf.mxu0
  %v363 = vadd.f32 %v105, %v362
  %v364 = vpop.f32.mrf.mxu0
  %v365 = vadd.f32 %v105, %v364
  %366 = vmatmul.bf16.gmra.mxu0 %v128
  %v367 = vpop.f32.mrf.mxu0
  %v368 = vadd.f32 %v105, %v367
  %v369 = vpop.f32.mrf.mxu0
  %v370 = vadd.f32 %v105, %v369
  %371 = vmatmul.bf16.gmra.mxu0 %v129
  %v372 = vpop.f32.mrf.mxu0
  %v373 = vadd.f32 %v105, %v372
  %v374 = vpop.f32.mrf.mxu0
  %v375 = vadd.f32 %v105, %v374
  %376 = vmatmul.bf16.gmra.mxu0 %v130
  %v377 = vpop.f32.mrf.mxu0
  %v378 = vadd.f32 %v105, %v377
  %v379 = vpop.f32.mrf.mxu0
  %v380 = vadd.f32 %v105, %v379
  %381 = vdwg.mxu0
  %382 = vmatpush.bf16.msra.mxu0 %v262
  %383 = vmatpush.bf16.msra.mxu0 %v258
  %384 = vmatpush.bf16.msra.mxu0 %v254
  %385 = vmatpush.bf16.msra.mxu0 %v250
  %386 = vmatpush.bf16.msra.mxu0 %v246
  %387 = vmatpush.bf16.msra.mxu0 %v242
  %388 = vmatpush.bf16.msra.mxu0 %v238
  %389 = vmatpush.bf16.msra.mxu0 %v234
  %390 = vmatmul.bf16.gmra.mxu0 %v127
  %v391 = vpop.f32.mrf.mxu0
  %v392 = vadd.f32 %v106, %v391
  %v393 = vpop.f32.mrf.mxu0
  %v394 = vadd.f32 %v106, %v393
  %395 = vmatmul.bf16.gmra.mxu0 %v128
  %v396 = vpop.f32.mrf.mxu0
  %v397 = vadd.f32 %v106, %v396
  %v398 = vpop.f32.mrf.mxu0
  %v399 = vadd.f32 %v106, %v398
  %400 = vmatmul.bf16.gmra.mxu0 %v129
  %v401 = vpop.f32.mrf.mxu0
  %v402 = vadd.f32 %v106, %v401
  %v403 = vpop.f32.mrf.mxu0
  %v404 = vadd.f32 %v106, %v403
  %405 = vmatmul.bf16.gmra.mxu0 %v130
  %v406 = vpop.f32.mrf.mxu0
  %v407 = vadd.f32 %v106, %v406
  %v408 = vpop.f32.mrf.mxu0
  %v409 = vadd.f32 %v106, %v408
  %410 = vdwg.mxu0
  %v443 = vunpack.c.l.b16 %v69
  %v444 = vunpack.c.h.b16 %v69
  %v445 = vunpack.c.l.b16 %v70
  %v446 = vunpack.c.h.b16 %v70
  %v447 = vunpack.c.l.b16 %v71
  %v448 = vunpack.c.h.b16 %v71
  %v449 = vunpack.c.l.b16 %v72
  %v450 = vunpack.c.h.b16 %v72
  %v451 = vunpack.c.l.b16 %v73
  %v452 = vunpack.c.h.b16 %v73
  %v453 = vunpack.c.l.b16 %v74
  %v454 = vunpack.c.h.b16 %v74
  %v455 = vunpack.c.l.b16 %v75
  %v456 = vunpack.c.h.b16 %v75
  %v457 = vunpack.c.l.b16 %v76
  %v458 = vunpack.c.h.b16 %v76
  %v459 = vunpack.c.l.b16 %v77
  %v460 = vunpack.c.h.b16 %v77
  %v461 = vunpack.c.l.b16 %v78
  %v462 = vunpack.c.h.b16 %v78
  %v463 = vunpack.c.l.b16 %v79
  %v464 = vunpack.c.h.b16 %v79
  %v465 = vunpack.c.l.b16 %v80
  %v466 = vunpack.c.h.b16 %v80
  %v467 = vunpack.c.l.b16 %v81
  %v468 = vunpack.c.h.b16 %v81
  %v469 = vunpack.c.l.b16 %v82
  %v470 = vunpack.c.h.b16 %v82
  %v471 = vunpack.c.l.b16 %v83
  %v472 = vunpack.c.h.b16 %v83
  %v473 = vunpack.c.l.b16 %v84
  %v474 = vunpack.c.h.b16 %v84
  %v475 = vunpack.c.l.b16 %v85
  %v476 = vunpack.c.h.b16 %v85
  %v477 = vunpack.c.l.b16 %v86
  %v478 = vunpack.c.h.b16 %v86
  %v479 = vunpack.c.l.b16 %v87
  %v480 = vunpack.c.h.b16 %v87
  %v481 = vunpack.c.l.b16 %v88
  %v482 = vunpack.c.h.b16 %v88
  %v483 = vunpack.c.l.b16 %v89
  %v484 = vunpack.c.h.b16 %v89
  %v485 = vunpack.c.l.b16 %v90
  %v486 = vunpack.c.h.b16 %v90
  %v487 = vunpack.c.l.b16 %v91
  %v488 = vunpack.c.h.b16 %v91
  %v489 = vunpack.c.l.b16 %v92
  %v490 = vunpack.c.h.b16 %v92
  %v491 = vunpack.c.l.b16 %v93
  %v492 = vunpack.c.h.b16 %v93
  %v493 = vunpack.c.l.b16 %v94
  %v494 = vunpack.c.h.b16 %v94
  %v495 = vunpack.c.l.b16 %v95
  %v496 = vunpack.c.h.b16 %v95
  %v497 = vunpack.c.l.b16 %v96
  %v498 = vunpack.c.h.b16 %v96
  %v499 = vunpack.c.l.b16 %v97
  %v500 = vunpack.c.h.b16 %v97
  %v501 = vunpack.c.l.b16 %v98
  %v502 = vunpack.c.h.b16 %v98
  %v503 = vunpack.c.l.b16 %v99
  %v504 = vunpack.c.h.b16 %v99
  %v505 = vunpack.c.l.b16 %v100
  %v506 = vunpack.c.h.b16 %v100
  %v507 = vpack.c.b16 %v447, %v443
  %v508 = vpack.c.b16 %v448, %v444
  %v509 = vpack.c.b16 %v449, %v445
  %v510 = vpack.c.b16 %v450, %v446
  %v511 = vpack.c.b16 %v455, %v451
  %v512 = vpack.c.b16 %v456, %v452
  %v513 = vpack.c.b16 %v457, %v453
  %v514 = vpack.c.b16 %v458, %v454
  %v515 = vpack.c.b16 %v463, %v459
  %v516 = vpack.c.b16 %v464, %v460
  %v517 = vpack.c.b16 %v465, %v461
  %v518 = vpack.c.b16 %v466, %v462
  %v519 = vpack.c.b16 %v471, %v467
  %v520 = vpack.c.b16 %v472, %v468
  %v521 = vpack.c.b16 %v473, %v469
  %v522 = vpack.c.b16 %v474, %v470
  %v523 = vpack.c.b16 %v479, %v475
  %v524 = vpack.c.b16 %v480, %v476
  %v525 = vpack.c.b16 %v481, %v477
  %v526 = vpack.c.b16 %v482, %v478
  %v527 = vpack.c.b16 %v487, %v483
  %v528 = vpack.c.b16 %v488, %v484
  %v529 = vpack.c.b16 %v489, %v485
  %v530 = vpack.c.b16 %v490, %v486
  %v531 = vpack.c.b16 %v495, %v491
  %v532 = vpack.c.b16 %v496, %v492
  %v533 = vpack.c.b16 %v497, %v493
  %v534 = vpack.c.b16 %v498, %v494
  %v535 = vpack.c.b16 %v503, %v499
  %v536 = vpack.c.b16 %v504, %v500
  %v537 = vpack.c.b16 %v505, %v501
  %v538 = vpack.c.b16 %v506, %v502
  %571 = vmatpush.bf16.msra.mxu0 %v535
  %572 = vmatpush.bf16.msra.mxu0 %v531
  %573 = vmatpush.bf16.msra.mxu0 %v527
  %574 = vmatpush.bf16.msra.mxu0 %v523
  %575 = vmatpush.bf16.msra.mxu0 %v519
  %576 = vmatpush.bf16.msra.mxu0 %v515
  %577 = vmatpush.bf16.msra.mxu0 %v511
  %578 = vmatpush.bf16.msra.mxu0 %v507
  %579 = vmatmul.bf16.gmra.mxu0 0
  %v580 = vpop.f32.mrf.mxu0
  %v581 = vadd.f32 0.0, %v580
  %v582 = vpop.f32.mrf.mxu0
  %583 = vdwg.mxu0
  %584 = vmatpush.bf16.msra.mxu0 %v536
  %585 = vmatpush.bf16.msra.mxu0 %v532
  %586 = vmatpush.bf16.msra.mxu0 %v528
  %587 = vmatpush.bf16.msra.mxu0 %v524
  %588 = vmatpush.bf16.msra.mxu0 %v520
  %589 = vmatpush.bf16.msra.mxu0 %v516
  %590 = vmatpush.bf16.msra.mxu0 %v512
  %591 = vmatpush.bf16.msra.mxu0 %v508
  %592 = vmatmul.bf16.gmra.mxu0 0
  %v593 = vpop.f32.mrf.mxu0
  %v594 = vadd.f32 0.0, %v593
  %v595 = vpop.f32.mrf.mxu0
  %596 = vdwg.mxu0
  %597 = vmatpush.bf16.msra.mxu0 %v537
  %598 = vmatpush.bf16.msra.mxu0 %v533
  %599 = vmatpush.bf16.msra.mxu0 %v529
  %600 = vmatpush.bf16.msra.mxu0 %v525
  %601 = vmatpush.bf16.msra.mxu0 %v521
  %602 = vmatpush.bf16.msra.mxu0 %v517
  %603 = vmatpush.bf16.msra.mxu0 %v513
  %604 = vmatpush.bf16.msra.mxu0 %v509
  %605 = vmatmul.bf16.gmra.mxu0 0
  %v606 = vpop.f32.mrf.mxu0
  %v607 = vadd.f32 0.0, %v606
  %v608 = vpop.f32.mrf.mxu0
  %609 = vdwg.mxu0
  %610 = vmatpush.bf16.msra.mxu0 %v538
  %611 = vmatpush.bf16.msra.mxu0 %v534
  %612 = vmatpush.bf16.msra.mxu0 %v530
  %613 = vmatpush.bf16.msra.mxu0 %v526
  %614 = vmatpush.bf16.msra.mxu0 %v522
  %615 = vmatpush.bf16.msra.mxu0 %v518
  %616 = vmatpush.bf16.msra.mxu0 %v514
  %617 = vmatpush.bf16.msra.mxu0 %v510
  %618 = vmatmul.bf16.gmra.mxu0 0
  %v619 = vpop.f32.mrf.mxu0
  %v620 = vadd.f32 0.0, %v619
  %v621 = vpop.f32.mrf.mxu0
  %622 = vdwg.mxu0
  %v623 = vadd.f32 %v305, %v581
  %v624 = vadd.f32 %v334, %v594
  %v625 = vadd.f32 %v363, %v607
  %v626 = vadd.f32 %v392, %v620
  %v627 = vxor.u32 %v623, 2147483648
  %v628 = vxor.u32 %v624, 2147483648
  %v629 = vxor.u32 %v625, 2147483648
  %v630 = vmul.f32 %v627, 1.442695
  %v631 = vpow.pop %v630
  %v632 = vmul.f32 %v628, 1.442695
  %v633 = vpow.pop %v632
  %v634 = vmul.f32 %v629, 1.442695
  %v635 = vpow.pop %v634
  %v636 = vadd.f32 %v631, 1.0
  %v637 = vadd.f32 %v633, 1.0
  %v638 = vadd.f32 %v635, 1.0
  %v639 = vrcp.pop %v636
  %v640 = vmul.f32 %v636, %v639
  %v641 = vsub.f32 1.0, %v640
  %v642 = vmul.f32 %v639, %v641
  %v643 = vadd.f32 %v639, %v642
  %vm644 = vweird.f32 %v636
  %vm645 = vweird.f32 %v639
  %vm646 = vmor %vm644, %vm645
  %v647 = vsel %vm646, %v639, %v643
  %v648 = vand.u32 2147483647, %v636
  %vm649 = vcmp.eq.f32.partialorder %v648, 8.507059e+37
  %v650 = vand.u32 %v636, 2147483648
  %v651 = vor.u32 1.1754944e-38, %v650
  %v652 = vsel %vm649, %v651, %v647
  %v653 = vmul.f32 1.0, %v652
  %v654 = vrcp.pop %v637
  %v655 = vmul.f32 %v637, %v654
  %v656 = vsub.f32 1.0, %v655
  %v657 = vmul.f32 %v654, %v656
  %v658 = vadd.f32 %v654, %v657
  %vm659 = vweird.f32 %v637
  %vm660 = vweird.f32 %v654
  %vm661 = vmor %vm659, %vm660
  %v662 = vsel %vm661, %v654, %v658
  %v663 = vand.u32 2147483647, %v637
  %vm664 = vcmp.eq.f32.partialorder %v663, 8.507059e+37
  %v665 = vand.u32 %v637, 2147483648
  %v666 = vor.u32 1.1754944e-38, %v665
  %v667 = vsel %vm664, %v666, %v662
  %v668 = vmul.f32 1.0, %v667
  %v669 = vrcp.pop %v638
  %v670 = vmul.f32 %v638, %v669
  %v671 = vsub.f32 1.0, %v670
  %v672 = vmul.f32 %v669, %v671
  %v673 = vadd.f32 %v669, %v672
  %vm674 = vweird.f32 %v638
  %vm675 = vweird.f32 %v669
  %vm676 = vmor %vm674, %vm675
  %v677 = vsel %vm676, %v669, %v673
  %v678 = vand.u32 2147483647, %v638
  %vm679 = vcmp.eq.f32.partialorder %v678, 8.507059e+37
  %v680 = vand.u32 %v638, 2147483648
  %v681 = vor.u32 1.1754944e-38, %v680
  %v682 = vsel %vm679, %v681, %v677
  %v683 = vmul.f32 1.0, %v682
  %v684 = vtanh.pop %v626
  %v685 = vmul.f32 %v668, 0.0
  %v686 = vmul.f32 %v653, %v684
  %v687 = vadd.f32 %v685, %v686
  %v688 = vtanh.pop %v687
  %v689 = vmul.f32 %v683, %v688
  %v690 = vpack.c.bf16 %v689, %v689
  %691 = vst [vmem:[#allocation2] sm:$0xf] %v690
  %692 = vmatpush.bf16.msra.mxu0 %v535
  %693 = vmatpush.bf16.msra.mxu0 %v531
  %694 = vmatpush.bf16.msra.mxu0 %v527
  %695 = vmatpush.bf16.msra.mxu0 %v523
  %696 = vmatpush.bf16.msra.mxu0 %v519
  %697 = vmatpush.bf16.msra.mxu0 %v515
  %698 = vmatpush.bf16.msra.mxu0 %v511
  %699 = vmatpush.bf16.msra.mxu0 %v507
  %700 = vmatmul.bf16.gmra.mxu0 %v690
  %v701 = vpop.f32.mrf.mxu0
  %v702 = vadd.f32 0.0, %v701
  %v703 = vpop.f32.mrf.mxu0
  %704 = vdwg.mxu0
  %705 = vmatpush.bf16.msra.mxu0 %v536
  %706 = vmatpush.bf16.msra.mxu0 %v532
  %707 = vmatpush.bf16.msra.mxu0 %v528
  %708 = vmatpush.bf16.msra.mxu0 %v524
  %709 = vmatpush.bf16.msra.mxu0 %v520
  %710 = vmatpush.bf16.msra.mxu0 %v516
  %711 = vmatpush.bf16.msra.mxu0 %v512
  %712 = vmatpush.bf16.msra.mxu0 %v508
  %713 = vmatmul.bf16.gmra.mxu0 %v690
  %v714 = vpop.f32.mrf.mxu0
  %v715 = vadd.f32 0.0, %v714
  %v716 = vpop.f32.mrf.mxu0
  %717 = vdwg.mxu0
  %718 = vmatpush.bf16.msra.mxu0 %v537
  %719 = vmatpush.bf16.msra.mxu0 %v533
  %720 = vmatpush.bf16.msra.mxu0 %v529
  %721 = vmatpush.bf16.msra.mxu0 %v525
  %722 = vmatpush.bf16.msra.mxu0 %v521
  %723 = vmatpush.bf16.msra.mxu0 %v517
  %724 = vmatpush.bf16.msra.mxu0 %v513
  %725 = vmatpush.bf16.msra.mxu0 %v509
  %726 = vmatmul.bf16.gmra.mxu0 %v690
  %v727 = vpop.f32.mrf.mxu0
  %v728 = vadd.f32 0.0, %v727
  %v729 = vpop.f32.mrf.mxu0
  %730 = vdwg.mxu0
  %731 = vmatpush.bf16.msra.mxu0 %v538
  %732 = vmatpush.bf16.msra.mxu0 %v534
  %733 = vmatpush.bf16.msra.mxu0 %v530
  %734 = vmatpush.bf16.msra.mxu0 %v526
  %735 = vmatpush.bf16.msra.mxu0 %v522
  %736 = vmatpush.bf16.msra.mxu0 %v518
  %737 = vmatpush.bf16.msra.mxu0 %v514
  %738 = vmatpush.bf16.msra.mxu0 %v510
  %739 = vmatmul.bf16.gmra.mxu0 %v690
  %v740 = vpop.f32.mrf.mxu0
  %v741 = vadd.f32 0.0, %v740
  %v742 = vpop.f32.mrf.mxu0
  %743 = vdwg.mxu0
  %v744 = vadd.f32 %v307, %v702
  %v745 = vadd.f32 %v336, %v715
  %v746 = vadd.f32 %v365, %v728
  %v747 = vadd.f32 %v394, %v741
  %v748 = vxor.u32 %v744, 2147483648
  %v749 = vxor.u32 %v745, 2147483648
  %v750 = vxor.u32 %v746, 2147483648
  %v751 = vmul.f32 %v748, 1.442695
  %v752 = vpow.pop %v751
  %v753 = vmul.f32 %v749, 1.442695
  %v754 = vpow.pop %v753
  %v755 = vmul.f32 %v750, 1.442695
  %v756 = vpow.pop %v755
  %v757 = vadd.f32 %v752, 1.0
  %v758 = vadd.f32 %v754, 1.0
  %v759 = vadd.f32 %v756, 1.0
  %v760 = vrcp.pop %v757
  %v761 = vmul.f32 %v757, %v760
  %v762 = vsub.f32 1.0, %v761
  %v763 = vmul.f32 %v760, %v762
  %v764 = vadd.f32 %v760, %v763
  %vm765 = vweird.f32 %v757
  %vm766 = vweird.f32 %v760
  %vm767 = vmor %vm765, %vm766
  %v768 = vsel %vm767, %v760, %v764
  %v769 = vand.u32 2147483647, %v757
  %vm770 = vcmp.eq.f32.partialorder %v769, 8.507059e+37
  %v771 = vand.u32 %v757, 2147483648
  %v772 = vor.u32 1.1754944e-38, %v771
  %v773 = vsel %vm770, %v772, %v768
  %v774 = vmul.f32 1.0, %v773
  %v775 = vrcp.pop %v758
  %v776 = vmul.f32 %v758, %v775
  %v777 = vsub.f32 1.0, %v776
  %v778 = vmul.f32 %v775, %v777
  %v779 = vadd.f32 %v775, %v778
  %vm780 = vweird.f32 %v758
  %vm781 = vweird.f32 %v775
  %vm782 = vmor %vm780, %vm781
  %v783 = vsel %vm782, %v775, %v779
  %v784 = vand.u32 2147483647, %v758
  %vm785 = vcmp.eq.f32.partialorder %v784, 8.507059e+37
  %v786 = vand.u32 %v758, 2147483648
  %v787 = vor.u32 1.1754944e-38, %v786
  %v788 = vsel %vm785, %v787, %v783
  %v789 = vmul.f32 1.0, %v788
  %v790 = vrcp.pop %v759
  %v791 = vmul.f32 %v759, %v790
  %v792 = vsub.f32 1.0, %v791
  %v793 = vmul.f32 %v790, %v792
  %v794 = vadd.f32 %v790, %v793
  %vm795 = vweird.f32 %v759
  %vm796 = vweird.f32 %v790
  %vm797 = vmor %vm795, %vm796
  %v798 = vsel %vm797, %v790, %v794
  %v799 = vand.u32 2147483647, %v759
  %vm800 = vcmp.eq.f32.partialorder %v799, 8.507059e+37
  %v801 = vand.u32 %v759, 2147483648
  %v802 = vor.u32 1.1754944e-38, %v801
  %v803 = vsel %vm800, %v802, %v798
  %v804 = vmul.f32 1.0, %v803
  %v805 = vtanh.pop %v747
  %v806 = vmul.f32 %v789, %v687
  %v807 = vmul.f32 %v774, %v805
  %v808 = vadd.f32 %v806, %v807
  %v809 = vtanh.pop %v808
  %v810 = vmul.f32 %v804, %v809
  %v811 = vpack.c.bf16 %v810, %v810
  %812 = vst [vmem:[#allocation2 + $0x4] sm:$0xf] %v811
  %813 = vmatpush.bf16.msra.mxu0 %v535
  %814 = vmatpush.bf16.msra.mxu0 %v531
  %815 = vmatpush.bf16.msra.mxu0 %v527
  %816 = vmatpush.bf16.msra.mxu0 %v523
  %817 = vmatpush.bf16.msra.mxu0 %v519
  %818 = vmatpush.bf16.msra.mxu0 %v515
  %819 = vmatpush.bf16.msra.mxu0 %v511
  %820 = vmatpush.bf16.msra.mxu0 %v507
  %821 = vmatmul.bf16.gmra.mxu0 %v811
  %v822 = vpop.f32.mrf.mxu0
  %v823 = vadd.f32 0.0, %v822
  %v824 = vpop.f32.mrf.mxu0
  %825 = vdwg.mxu0
  %826 = vmatpush.bf16.msra.mxu0 %v536
  %827 = vmatpush.bf16.msra.mxu0 %v532
  %828 = vmatpush.bf16.msra.mxu0 %v528
  %829 = vmatpush.bf16.msra.mxu0 %v524
  %830 = vmatpush.bf16.msra.mxu0 %v520
  %831 = vmatpush.bf16.msra.mxu0 %v516
  %832 = vmatpush.bf16.msra.mxu0 %v512
  %833 = vmatpush.bf16.msra.mxu0 %v508
  %834 = vmatmul.bf16.gmra.mxu0 %v811
  %v835 = vpop.f32.mrf.mxu0
  %v836 = vadd.f32 0.0, %v835
  %v837 = vpop.f32.mrf.mxu0
  %838 = vdwg.mxu0
  %839 = vmatpush.bf16.msra.mxu0 %v537
  %840 = vmatpush.bf16.msra.mxu0 %v533
  %841 = vmatpush.bf16.msra.mxu0 %v529
  %842 = vmatpush.bf16.msra.mxu0 %v525
  %843 = vmatpush.bf16.msra.mxu0 %v521
  %844 = vmatpush.bf16.msra.mxu0 %v517
  %845 = vmatpush.bf16.msra.mxu0 %v513
  %846 = vmatpush.bf16.msra.mxu0 %v509
  %847 = vmatmul.bf16.gmra.mxu0 %v811
  %v848 = vpop.f32.mrf.mxu0
  %v849 = vadd.f32 0.0, %v848
  %v850 = vpop.f32.mrf.mxu0
  %851 = vdwg.mxu0
  %852 = vmatpush.bf16.msra.mxu0 %v538
  %853 = vmatpush.bf16.msra.mxu0 %v534
  %854 = vmatpush.bf16.msra.mxu0 %v530
  %855 = vmatpush.bf16.msra.mxu0 %v526
  %856 = vmatpush.bf16.msra.mxu0 %v522
  %857 = vmatpush.bf16.msra.mxu0 %v518
  %858 = vmatpush.bf16.msra.mxu0 %v514
  %859 = vmatpush.bf16.msra.mxu0 %v510
  %860 = vmatmul.bf16.gmra.mxu0 %v811
  %v861 = vpop.f32.mrf.mxu0
  %v862 = vadd.f32 0.0, %v861
  %v863 = vpop.f32.mrf.mxu0
  %864 = vdwg.mxu0
  %v865 = vadd.f32 %v310, %v823
  %v866 = vadd.f32 %v339, %v836
  %v867 = vadd.f32 %v368, %v849
  %v868 = vadd.f32 %v397, %v862
  %v869 = vxor.u32 %v865, 2147483648
  %v870 = vxor.u32 %v866, 2147483648
  %v871 = vxor.u32 %v867, 2147483648
  %v872 = vmul.f32 %v869, 1.442695
  %v873 = vpow.pop %v872
  %v874 = vmul.f32 %v870, 1.442695
  %v875 = vpow.pop %v874
  %v876 = vmul.f32 %v871, 1.442695
  %v877 = vpow.pop %v876
  %v878 = vadd.f32 %v873, 1.0
  %v879 = vadd.f32 %v875, 1.0
  %v880 = vadd.f32 %v877, 1.0
  %v881 = vrcp.pop %v878
  %v882 = vmul.f32 %v878, %v881
  %v883 = vsub.f32 1.0, %v882
  %v884 = vmul.f32 %v881, %v883
  %v885 = vadd.f32 %v881, %v884
  %vm886 = vweird.f32 %v878
  %vm887 = vweird.f32 %v881
  %vm888 = vmor %vm886, %vm887
  %v889 = vsel %vm888, %v881, %v885
  %v890 = vand.u32 2147483647, %v878
  %vm891 = vcmp.eq.f32.partialorder %v890, 8.507059e+37
  %v892 = vand.u32 %v878, 2147483648
  %v893 = vor.u32 1.1754944e-38, %v892
  %v894 = vsel %vm891, %v893, %v889
  %v895 = vmul.f32 1.0, %v894
  %v896 = vrcp.pop %v879
  %v897 = vmul.f32 %v879, %v896
  %v898 = vsub.f32 1.0, %v897
  %v899 = vmul.f32 %v896, %v898
  %v900 = vadd.f32 %v896, %v899
  %vm901 = vweird.f32 %v879
  %vm902 = vweird.f32 %v896
  %vm903 = vmor %vm901, %vm902
  %v904 = vsel %vm903, %v896, %v900
  %v905 = vand.u32 2147483647, %v879
  %vm906 = vcmp.eq.f32.partialorder %v905, 8.507059e+37
  %v907 = vand.u32 %v879, 2147483648
  %v908 = vor.u32 1.1754944e-38, %v907
  %v909 = vsel %vm906, %v908, %v904
  %v910 = vmul.f32 1.0, %v909
  %v911 = vrcp.pop %v880
  %v912 = vmul.f32 %v880, %v911
  %v913 = vsub.f32 1.0, %v912
  %v914 = vmul.f32 %v911, %v913
  %v915 = vadd.f32 %v911, %v914
  %vm916 = vweird.f32 %v880
  %vm917 = vweird.f32 %v911
  %vm918 = vmor %vm916, %vm917
  %v919 = vsel %vm918, %v911, %v915
  %v920 = vand.u32 2147483647, %v880
  %vm921 = vcmp.eq.f32.partialorder %v920, 8.507059e+37
  %v922 = vand.u32 %v880, 2147483648
  %v923 = vor.u32 1.1754944e-38, %v922
  %v924 = vsel %vm921, %v923, %v919
  %v925 = vmul.f32 1.0, %v924
  %v926 = vtanh.pop %v868
  %v927 = vmul.f32 %v910, %v808
  %v928 = vmul.f32 %v895, %v926
  %v929 = vadd.f32 %v927, %v928
  %v930 = vtanh.pop %v929
  %v931 = vmul.f32 %v925, %v930
  %v932 = vpack.c.bf16 %v931, %v931
  %933 = vst [vmem:[#allocation2 + $0x8] sm:$0xf] %v932
  %934 = vmatpush.bf16.msra.mxu0 %v535
  %935 = vmatpush.bf16.msra.mxu0 %v531
  %936 = vmatpush.bf16.msra.mxu0 %v527
  %937 = vmatpush.bf16.msra.mxu0 %v523
  %938 = vmatpush.bf16.msra.mxu0 %v519
  %939 = vmatpush.bf16.msra.mxu0 %v515
  %940 = vmatpush.bf16.msra.mxu0 %v511
  %941 = vmatpush.bf16.msra.mxu0 %v507
  %942 = vmatmul.bf16.gmra.mxu0 %v932
  %v943 = vpop.f32.mrf.mxu0
  %v944 = vadd.f32 0.0, %v943
  %v945 = vpop.f32.mrf.mxu0
  %946 = vdwg.mxu0
  %947 = vmatpush.bf16.msra.mxu0 %v536
  %948 = vmatpush.bf16.msra.mxu0 %v532
  %949 = vmatpush.bf16.msra.mxu0 %v528
  %950 = vmatpush.bf16.msra.mxu0 %v524
  %951 = vmatpush.bf16.msra.mxu0 %v520
  %952 = vmatpush.bf16.msra.mxu0 %v516
  %953 = vmatpush.bf16.msra.mxu0 %v512
  %954 = vmatpush.bf16.msra.mxu0 %v508
  %955 = vmatmul.bf16.gmra.mxu0 %v932
  %v956 = vpop.f32.mrf.mxu0
  %v957 = vadd.f32 0.0, %v956
  %v958 = vpop.f32.mrf.mxu0
  %959 = vdwg.mxu0
  %960 = vmatpush.bf16.msra.mxu0 %v537
  %961 = vmatpush.bf16.msra.mxu0 %v533
  %962 = vmatpush.bf16.msra.mxu0 %v529
  %963 = vmatpush.bf16.msra.mxu0 %v525
  %964 = vmatpush.bf16.msra.mxu0 %v521
  %965 = vmatpush.bf16.msra.mxu0 %v517
  %966 = vmatpush.bf16.msra.mxu0 %v513
  %967 = vmatpush.bf16.msra.mxu0 %v509
  %968 = vmatmul.bf16.gmra.mxu0 %v932
  %v969 = vpop.f32.mrf.mxu0
  %v970 = vadd.f32 0.0, %v969
  %v971 = vpop.f32.mrf.mxu0
  %972 = vdwg.mxu0
  %973 = vmatpush.bf16.msra.mxu0 %v538
  %974 = vmatpush.bf16.msra.mxu0 %v534
  %975 = vmatpush.bf16.msra.mxu0 %v530
  %976 = vmatpush.bf16.msra.mxu0 %v526
  %977 = vmatpush.bf16.msra.mxu0 %v522
  %978 = vmatpush.bf16.msra.mxu0 %v518
  %979 = vmatpush.bf16.msra.mxu0 %v514
  %980 = vmatpush.bf16.msra.mxu0 %v510
  %981 = vmatmul.bf16.gmra.mxu0 %v932
  %v982 = vpop.f32.mrf.mxu0
  %v983 = vadd.f32 0.0, %v982
  %v984 = vpop.f32.mrf.mxu0
  %985 = vdwg.mxu0
  %v986 = vadd.f32 %v312, %v944
  %v987 = vadd.f32 %v341, %v957
  %v988 = vadd.f32 %v370, %v970
  %v989 = vadd.f32 %v399, %v983
  %v990 = vxor.u32 %v986, 2147483648
  %v991 = vxor.u32 %v987, 2147483648
  %v992 = vxor.u32 %v988, 2147483648
  %v993 = vmul.f32 %v990, 1.442695
  %v994 = vpow.pop %v993
  %v995 = vmul.f32 %v991, 1.442695
  %v996 = vpow.pop %v995
  %v997 = vmul.f32 %v992, 1.442695
  %v998 = vpow.pop %v997
  %v999 = vadd.f32 %v994, 1.0
  %v1000 = vadd.f32 %v996, 1.0
  %v1001 = vadd.f32 %v998, 1.0
  %v1002 = vrcp.pop %v999
  %v1003 = vmul.f32 %v999, %v1002
  %v1004 = vsub.f32 1.0, %v1003
  %v1005 = vmul.f32 %v1002, %v1004
  %v1006 = vadd.f32 %v1002, %v1005
  %vm1007 = vweird.f32 %v999
  %vm1008 = vweird.f32 %v1002
  %vm1009 = vmor %vm1007, %vm1008
  %v1010 = vsel %vm1009, %v1002, %v1006
  %v1011 = vand.u32 2147483647, %v999
  %vm1012 = vcmp.eq.f32.partialorder %v1011, 8.507059e+37
  %v1013 = vand.u32 %v999, 2147483648
  %v1014 = vor.u32 1.1754944e-38, %v1013
  %v1015 = vsel %vm1012, %v1014, %v1010
  %v1016 = vmul.f32 1.0, %v1015
  %v1017 = vrcp.pop %v1000
  %v1018 = vmul.f32 %v1000, %v1017
  %v1019 = vsub.f32 1.0, %v1018
  %v1020 = vmul.f32 %v1017, %v1019
  %v1021 = vadd.f32 %v1017, %v1020
  %vm1022 = vweird.f32 %v1000
  %vm1023 = vweird.f32 %v1017
  %vm1024 = vmor %vm1022, %vm1023
  %v1025 = vsel %vm1024, %v1017, %v1021
  %v1026 = vand.u32 2147483647, %v1000
  %vm1027 = vcmp.eq.f32.partialorder %v1026, 8.507059e+37
  %v1028 = vand.u32 %v1000, 2147483648
  %v1029 = vor.u32 1.1754944e-38, %v1028
  %v1030 = vsel %vm1027, %v1029, %v1025
  %v1031 = vmul.f32 1.0, %v1030
  %v1032 = vrcp.pop %v1001
  %v1033 = vmul.f32 %v1001, %v1032
  %v1034 = vsub.f32 1.0, %v1033
  %v1035 = vmul.f32 %v1032, %v1034
  %v1036 = vadd.f32 %v1032, %v1035
  %vm1037 = vweird.f32 %v1001
  %vm1038 = vweird.f32 %v1032
  %vm1039 = vmor %vm1037, %vm1038
  %v1040 = vsel %vm1039, %v1032, %v1036
  %v1041 = vand.u32 2147483647, %v1001
  %vm1042 = vcmp.eq.f32.partialorder %v1041, 8.507059e+37
  %v1043 = vand.u32 %v1001, 2147483648
  %v1044 = vor.u32 1.1754944e-38, %v1043
  %v1045 = vsel %vm1042, %v1044, %v1040
  %v1046 = vmul.f32 1.0, %v1045
  %v1047 = vtanh.pop %v989
  %v1048 = vmul.f32 %v1031, %v929
  %v1049 = vmul.f32 %v1016, %v1047
  %v1050 = vadd.f32 %v1048, %v1049
  %v1051 = vtanh.pop %v1050
  %v1052 = vmul.f32 %v1046, %v1051
  %v1053 = vpack.c.bf16 %v1052, %v1052
  %1054 = vst [vmem:[#allocation2 + $0xc] sm:$0xf] %v1053
  %1055 = vmatpush.bf16.msra.mxu0 %v535
  %1056 = vmatpush.bf16.msra.mxu0 %v531
  %1057 = vmatpush.bf16.msra.mxu0 %v527
  %1058 = vmatpush.bf16.msra.mxu0 %v523
  %1059 = vmatpush.bf16.msra.mxu0 %v519
  %1060 = vmatpush.bf16.msra.mxu0 %v515
  %1061 = vmatpush.bf16.msra.mxu0 %v511
  %1062 = vmatpush.bf16.msra.mxu0 %v507
  %1063 = vmatmul.bf16.gmra.mxu0 %v1053
  %v1064 = vpop.f32.mrf.mxu0
  %v1065 = vadd.f32 0.0, %v1064
  %v1066 = vpop.f32.mrf.mxu0
  %1067 = vdwg.mxu0
  %1068 = vmatpush.bf16.msra.mxu0 %v536
  %1069 = vmatpush.bf16.msra.mxu0 %v532
  %1070 = vmatpush.bf16.msra.mxu0 %v528
  %1071 = vmatpush.bf16.msra.mxu0 %v524
  %1072 = vmatpush.bf16.msra.mxu0 %v520
  %1073 = vmatpush.bf16.msra.mxu0 %v516
  %1074 = vmatpush.bf16.msra.mxu0 %v512
  %1075 = vmatpush.bf16.msra.mxu0 %v508
  %1076 = vmatmul.bf16.gmra.mxu0 %v1053
  %v1077 = vpop.f32.mrf.mxu0
  %v1078 = vadd.f32 0.0, %v1077
  %v1079 = vpop.f32.mrf.mxu0
  %1080 = vdwg.mxu0
  %1081 = vmatpush.bf16.msra.mxu0 %v537
  %1082 = vmatpush.bf16.msra.mxu0 %v533
  %1083 = vmatpush.bf16.msra.mxu0 %v529
  %1084 = vmatpush.bf16.msra.mxu0 %v525
  %1085 = vmatpush.bf16.msra.mxu0 %v521
  %1086 = vmatpush.bf16.msra.mxu0 %v517
  %1087 = vmatpush.bf16.msra.mxu0 %v513
  %1088 = vmatpush.bf16.msra.mxu0 %v509
  %1089 = vmatmul.bf16.gmra.mxu0 %v1053
  %v1090 = vpop.f32.mrf.mxu0
  %v1091 = vadd.f32 0.0, %v1090
  %v1092 = vpop.f32.mrf.mxu0
  %1093 = vdwg.mxu0
  %1094 = vmatpush.bf16.msra.mxu0 %v538
  %1095 = vmatpush.bf16.msra.mxu0 %v534
  %1096 = vmatpush.bf16.msra.mxu0 %v530
  %1097 = vmatpush.bf16.msra.mxu0 %v526
  %1098 = vmatpush.bf16.msra.mxu0 %v522
  %1099 = vmatpush.bf16.msra.mxu0 %v518
  %1100 = vmatpush.bf16.msra.mxu0 %v514
  %1101 = vmatpush.bf16.msra.mxu0 %v510
  %1102 = vmatmul.bf16.gmra.mxu0 %v1053
  %v1103 = vpop.f32.mrf.mxu0
  %v1104 = vadd.f32 0.0, %v1103
  %v1105 = vpop.f32.mrf.mxu0
  %1106 = vdwg.mxu0
  %v1107 = vadd.f32 %v315, %v1065
  %v1108 = vadd.f32 %v344, %v1078
  %v1109 = vadd.f32 %v373, %v1091
  %v1110 = vadd.f32 %v402, %v1104
  %v1111 = vxor.u32 %v1107, 2147483648
  %v1112 = vxor.u32 %v1108, 2147483648
  %v1113 = vxor.u32 %v1109, 2147483648
  %v1114 = vmul.f32 %v1111, 1.442695
  %v1115 = vpow.pop %v1114
  %v1116 = vmul.f32 %v1112, 1.442695
  %v1117 = vpow.pop %v1116
  %v1118 = vmul.f32 %v1113, 1.442695
  %v1119 = vpow.pop %v1118
  %v1120 = vadd.f32 %v1115, 1.0
  %v1121 = vadd.f32 %v1117, 1.0
  %v1122 = vadd.f32 %v1119, 1.0
  %v1123 = vrcp.pop %v1120
  %v1124 = vmul.f32 %v1120, %v1123
  %v1125 = vsub.f32 1.0, %v1124
  %v1126 = vmul.f32 %v1123, %v1125
  %v1127 = vadd.f32 %v1123, %v1126
  %vm1128 = vweird.f32 %v1120
  %vm1129 = vweird.f32 %v1123
  %vm1130 = vmor %vm1128, %vm1129
  %v1131 = vsel %vm1130, %v1123, %v1127
  %v1132 = vand.u32 2147483647, %v1120
  %vm1133 = vcmp.eq.f32.partialorder %v1132, 8.507059e+37
  %v1134 = vand.u32 %v1120, 2147483648
  %v1135 = vor.u32 1.1754944e-38, %v1134
  %v1136 = vsel %vm1133, %v1135, %v1131
  %v1137 = vmul.f32 1.0, %v1136
  %v1138 = vrcp.pop %v1121
  %v1139 = vmul.f32 %v1121, %v1138
  %v1140 = vsub.f32 1.0, %v1139
  %v1141 = vmul.f32 %v1138, %v1140
  %v1142 = vadd.f32 %v1138, %v1141
  %vm1143 = vweird.f32 %v1121
  %vm1144 = vweird.f32 %v1138
  %vm1145 = vmor %vm1143, %vm1144
  %v1146 = vsel %vm1145, %v1138, %v1142
  %v1147 = vand.u32 2147483647, %v1121
  %vm1148 = vcmp.eq.f32.partialorder %v1147, 8.507059e+37
  %v1149 = vand.u32 %v1121, 2147483648
  %v1150 = vor.u32 1.1754944e-38, %v1149
  %v1151 = vsel %vm1148, %v1150, %v1146
  %v1152 = vmul.f32 1.0, %v1151
  %v1153 = vrcp.pop %v1122
  %v1154 = vmul.f32 %v1122, %v1153
  %v1155 = vsub.f32 1.0, %v1154
  %v1156 = vmul.f32 %v1153, %v1155
  %v1157 = vadd.f32 %v1153, %v1156
  %vm1158 = vweird.f32 %v1122
  %vm1159 = vweird.f32 %v1153
  %vm1160 = vmor %vm1158, %vm1159
  %v1161 = vsel %vm1160, %v1153, %v1157
  %v1162 = vand.u32 2147483647, %v1122
  %vm1163 = vcmp.eq.f32.partialorder %v1162, 8.507059e+37
  %v1164 = vand.u32 %v1122, 2147483648
  %v1165 = vor.u32 1.1754944e-38, %v1164
  %v1166 = vsel %vm1163, %v1165, %v1161
  %v1167 = vmul.f32 1.0, %v1166
  %v1168 = vtanh.pop %v1110
  %v1169 = vmul.f32 %v1152, %v1050
  %v1170 = vmul.f32 %v1137, %v1168
  %v1171 = vadd.f32 %v1169, %v1170
  %v1172 = vtanh.pop %v1171
  %v1173 = vmul.f32 %v1167, %v1172
  %v1174 = vpack.c.bf16 %v1173, %v1173
  %1175 = vst [vmem:[#allocation2 + $0x10] sm:$0xf] %v1174
  %1176 = vmatpush.bf16.msra.mxu0 %v535
  %1177 = vmatpush.bf16.msra.mxu0 %v531
  %1178 = vmatpush.bf16.msra.mxu0 %v527
  %1179 = vmatpush.bf16.msra.mxu0 %v523
  %1180 = vmatpush.bf16.msra.mxu0 %v519
  %1181 = vmatpush.bf16.msra.mxu0 %v515
  %1182 = vmatpush.bf16.msra.mxu0 %v511
  %1183 = vmatpush.bf16.msra.mxu0 %v507
  %1184 = vmatmul.bf16.gmra.mxu0 %v1174
  %v1185 = vpop.f32.mrf.mxu0
  %v1186 = vadd.f32 0.0, %v1185
  %v1187 = vpop.f32.mrf.mxu0
  %1188 = vdwg.mxu0
  %1189 = vmatpush.bf16.msra.mxu0 %v536
  %1190 = vmatpush.bf16.msra.mxu0 %v532
  %1191 = vmatpush.bf16.msra.mxu0 %v528
  %1192 = vmatpush.bf16.msra.mxu0 %v524
  %1193 = vmatpush.bf16.msra.mxu0 %v520
  %1194 = vmatpush.bf16.msra.mxu0 %v516
  %1195 = vmatpush.bf16.msra.mxu0 %v512
  %1196 = vmatpush.bf16.msra.mxu0 %v508
  %1197 = vmatmul.bf16.gmra.mxu0 %v1174
  %v1198 = vpop.f32.mrf.mxu0
  %v1199 = vadd.f32 0.0, %v1198
  %v1200 = vpop.f32.mrf.mxu0
  %1201 = vdwg.mxu0
  %1202 = vmatpush.bf16.msra.mxu0 %v537
  %1203 = vmatpush.bf16.msra.mxu0 %v533
  %1204 = vmatpush.bf16.msra.mxu0 %v529
  %1205 = vmatpush.bf16.msra.mxu0 %v525
  %1206 = vmatpush.bf16.msra.mxu0 %v521
  %1207 = vmatpush.bf16.msra.mxu0 %v517
  %1208 = vmatpush.bf16.msra.mxu0 %v513
  %1209 = vmatpush.bf16.msra.mxu0 %v509
  %1210 = vmatmul.bf16.gmra.mxu0 %v1174
  %v1211 = vpop.f32.mrf.mxu0
  %v1212 = vadd.f32 0.0, %v1211
  %v1213 = vpop.f32.mrf.mxu0
  %1214 = vdwg.mxu0
  %1215 = vmatpush.bf16.msra.mxu0 %v538
  %1216 = vmatpush.bf16.msra.mxu0 %v534
  %1217 = vmatpush.bf16.msra.mxu0 %v530
  %1218 = vmatpush.bf16.msra.mxu0 %v526
  %1219 = vmatpush.bf16.msra.mxu0 %v522
  %1220 = vmatpush.bf16.msra.mxu0 %v518
  %1221 = vmatpush.bf16.msra.mxu0 %v514
  %1222 = vmatpush.bf16.msra.mxu0 %v510
  %1223 = vmatmul.bf16.gmra.mxu0 %v1174
  %v1224 = vpop.f32.mrf.mxu0
  %v1225 = vadd.f32 0.0, %v1224
  %v1226 = vpop.f32.mrf.mxu0
  %1227 = vdwg.mxu0
  %v1228 = vadd.f32 %v317, %v1186
  %v1229 = vadd.f32 %v346, %v1199
  %v1230 = vadd.f32 %v375, %v1212
  %v1231 = vadd.f32 %v404, %v1225
  %v1232 = vxor.u32 %v1228, 2147483648
  %v1233 = vxor.u32 %v1229, 2147483648
  %v1234 = vxor.u32 %v1230, 2147483648
  %v1235 = vmul.f32 %v1232, 1.442695
  %v1236 = vpow.pop %v1235
  %v1237 = vmul.f32 %v1233, 1.442695
  %v1238 = vpow.pop %v1237
  %v1239 = vmul.f32 %v1234, 1.442695
  %v1240 = vpow.pop %v1239
  %v1241 = vadd.f32 %v1236, 1.0
  %v1242 = vadd.f32 %v1238, 1.0
  %v1243 = vadd.f32 %v1240, 1.0
  %v1244 = vrcp.pop %v1241
  %v1245 = vmul.f32 %v1241, %v1244
  %v1246 = vsub.f32 1.0, %v1245
  %v1247 = vmul.f32 %v1244, %v1246
  %v1248 = vadd.f32 %v1244, %v1247
  %vm1249 = vweird.f32 %v1241
  %vm1250 = vweird.f32 %v1244
  %vm1251 = vmor %vm1249, %vm1250
  %v1252 = vsel %vm1251, %v1244, %v1248
  %v1253 = vand.u32 2147483647, %v1241
  %vm1254 = vcmp.eq.f32.partialorder %v1253, 8.507059e+37
  %v1255 = vand.u32 %v1241, 2147483648
  %v1256 = vor.u32 1.1754944e-38, %v1255
  %v1257 = vsel %vm1254, %v1256, %v1252
  %v1258 = vmul.f32 1.0, %v1257
  %v1259 = vrcp.pop %v1242
  %v1260 = vmul.f32 %v1242, %v1259
  %v1261 = vsub.f32 1.0, %v1260
  %v1262 = vmul.f32 %v1259, %v1261
  %v1263 = vadd.f32 %v1259, %v1262
  %vm1264 = vweird.f32 %v1242
  %vm1265 = vweird.f32 %v1259
  %vm1266 = vmor %vm1264, %vm1265
  %v1267 = vsel %vm1266, %v1259, %v1263
  %v1268 = vand.u32 2147483647, %v1242
  %vm1269 = vcmp.eq.f32.partialorder %v1268, 8.507059e+37
  %v1270 = vand.u32 %v1242, 2147483648
  %v1271 = vor.u32 1.1754944e-38, %v1270
  %v1272 = vsel %vm1269, %v1271, %v1267
  %v1273 = vmul.f32 1.0, %v1272
  %v1274 = vrcp.pop %v1243
  %v1275 = vmul.f32 %v1243, %v1274
  %v1276 = vsub.f32 1.0, %v1275
  %v1277 = vmul.f32 %v1274, %v1276
  %v1278 = vadd.f32 %v1274, %v1277
  %vm1279 = vweird.f32 %v1243
  %vm1280 = vweird.f32 %v1274
  %vm1281 = vmor %vm1279, %vm1280
  %v1282 = vsel %vm1281, %v1274, %v1278
  %v1283 = vand.u32 2147483647, %v1243
  %vm1284 = vcmp.eq.f32.partialorder %v1283, 8.507059e+37
  %v1285 = vand.u32 %v1243, 2147483648
  %v1286 = vor.u32 1.1754944e-38, %v1285
  %v1287 = vsel %vm1284, %v1286, %v1282
  %v1288 = vmul.f32 1.0, %v1287
  %v1289 = vtanh.pop %v1231
  %v1290 = vmul.f32 %v1273, %v1171
  %v1291 = vmul.f32 %v1258, %v1289
  %v1292 = vadd.f32 %v1290, %v1291
  %v1293 = vtanh.pop %v1292
  %v1294 = vmul.f32 %v1288, %v1293
  %v1295 = vpack.c.bf16 %v1294, %v1294
  %1296 = vst [vmem:[#allocation2 + $0x14] sm:$0xf] %v1295
  %1297 = vmatpush.bf16.msra.mxu0 %v535
  %1298 = vmatpush.bf16.msra.mxu0 %v531
  %1299 = vmatpush.bf16.msra.mxu0 %v527
  %1300 = vmatpush.bf16.msra.mxu0 %v523
  %1301 = vmatpush.bf16.msra.mxu0 %v519
  %1302 = vmatpush.bf16.msra.mxu0 %v515
  %1303 = vmatpush.bf16.msra.mxu0 %v511
  %1304 = vmatpush.bf16.msra.mxu0 %v507
  %1305 = vmatmul.bf16.gmra.mxu0 %v1295
  %v1306 = vpop.f32.mrf.mxu0
  %v1307 = vadd.f32 0.0, %v1306
  %v1308 = vpop.f32.mrf.mxu0
  %1309 = vdwg.mxu0
  %1310 = vmatpush.bf16.msra.mxu0 %v536
  %1311 = vmatpush.bf16.msra.mxu0 %v532
  %1312 = vmatpush.bf16.msra.mxu0 %v528
  %1313 = vmatpush.bf16.msra.mxu0 %v524
  %1314 = vmatpush.bf16.msra.mxu0 %v520
  %1315 = vmatpush.bf16.msra.mxu0 %v516
  %1316 = vmatpush.bf16.msra.mxu0 %v512
  %1317 = vmatpush.bf16.msra.mxu0 %v508
  %1318 = vmatmul.bf16.gmra.mxu0 %v1295
  %v1319 = vpop.f32.mrf.mxu0
  %v1320 = vadd.f32 0.0, %v1319
  %v1321 = vpop.f32.mrf.mxu0
  %1322 = vdwg.mxu0
  %1323 = vmatpush.bf16.msra.mxu0 %v537
  %1324 = vmatpush.bf16.msra.mxu0 %v533
  %1325 = vmatpush.bf16.msra.mxu0 %v529
  %1326 = vmatpush.bf16.msra.mxu0 %v525
  %1327 = vmatpush.bf16.msra.mxu0 %v521
  %1328 = vmatpush.bf16.msra.mxu0 %v517
  %1329 = vmatpush.bf16.msra.mxu0 %v513
  %1330 = vmatpush.bf16.msra.mxu0 %v509
  %1331 = vmatmul.bf16.gmra.mxu0 %v1295
  %v1332 = vpop.f32.mrf.mxu0
  %v1333 = vadd.f32 0.0, %v1332
  %v1334 = vpop.f32.mrf.mxu0
  %1335 = vdwg.mxu0
  %1336 = vmatpush.bf16.msra.mxu0 %v538
  %1337 = vmatpush.bf16.msra.mxu0 %v534
  %1338 = vmatpush.bf16.msra.mxu0 %v530
  %1339 = vmatpush.bf16.msra.mxu0 %v526
  %1340 = vmatpush.bf16.msra.mxu0 %v522
  %1341 = vmatpush.bf16.msra.mxu0 %v518
  %1342 = vmatpush.bf16.msra.mxu0 %v514
  %1343 = vmatpush.bf16.msra.mxu0 %v510
  %1344 = vmatmul.bf16.gmra.mxu0 %v1295
  %v1345 = vpop.f32.mrf.mxu0
  %v1346 = vadd.f32 0.0, %v1345
  %v1347 = vpop.f32.mrf.mxu0
  %1348 = vdwg.mxu0
  %v1349 = vadd.f32 %v320, %v1307
  %v1350 = vadd.f32 %v349, %v1320
  %v1351 = vadd.f32 %v378, %v1333
  %v1352 = vadd.f32 %v407, %v1346
  %v1353 = vxor.u32 %v1349, 2147483648
  %v1354 = vxor.u32 %v1350, 2147483648
  %v1355 = vxor.u32 %v1351, 2147483648
  %v1356 = vmul.f32 %v1353, 1.442695
  %v1357 = vpow.pop %v1356
  %v1358 = vmul.f32 %v1354, 1.442695
  %v1359 = vpow.pop %v1358
  %v1360 = vmul.f32 %v1355, 1.442695
  %v1361 = vpow.pop %v1360
  %v1362 = vadd.f32 %v1357, 1.0
  %v1363 = vadd.f32 %v1359, 1.0
  %v1364 = vadd.f32 %v1361, 1.0
  %v1365 = vrcp.pop %v1362
  %v1366 = vmul.f32 %v1362, %v1365
  %v1367 = vsub.f32 1.0, %v1366
  %v1368 = vmul.f32 %v1365, %v1367
  %v1369 = vadd.f32 %v1365, %v1368
  %vm1370 = vweird.f32 %v1362
  %vm1371 = vweird.f32 %v1365
  %vm1372 = vmor %vm1370, %vm1371
  %v1373 = vsel %vm1372, %v1365, %v1369
  %v1374 = vand.u32 2147483647, %v1362
  %vm1375 = vcmp.eq.f32.partialorder %v1374, 8.507059e+37
  %v1376 = vand.u32 %v1362, 2147483648
  %v1377 = vor.u32 1.1754944e-38, %v1376
  %v1378 = vsel %vm1375, %v1377, %v1373
  %v1379 = vmul.f32 1.0, %v1378
  %v1380 = vrcp.pop %v1363
  %v1381 = vmul.f32 %v1363, %v1380
  %v1382 = vsub.f32 1.0, %v1381
  %v1383 = vmul.f32 %v1380, %v1382
  %v1384 = vadd.f32 %v1380, %v1383
  %vm1385 = vweird.f32 %v1363
  %vm1386 = vweird.f32 %v1380
  %vm1387 = vmor %vm1385, %vm1386
  %v1388 = vsel %vm1387, %v1380, %v1384
  %v1389 = vand.u32 2147483647, %v1363
  %vm1390 = vcmp.eq.f32.partialorder %v1389, 8.507059e+37
  %v1391 = vand.u32 %v1363, 2147483648
  %v1392 = vor.u32 1.1754944e-38, %v1391
  %v1393 = vsel %vm1390, %v1392, %v1388
  %v1394 = vmul.f32 1.0, %v1393
  %v1395 = vrcp.pop %v1364
  %v1396 = vmul.f32 %v1364, %v1395
  %v1397 = vsub.f32 1.0, %v1396
  %v1398 = vmul.f32 %v1395, %v1397
  %v1399 = vadd.f32 %v1395, %v1398
  %vm1400 = vweird.f32 %v1364
  %vm1401 = vweird.f32 %v1395
  %vm1402 = vmor %vm1400, %vm1401
  %v1403 = vsel %vm1402, %v1395, %v1399
  %v1404 = vand.u32 2147483647, %v1364
  %vm1405 = vcmp.eq.f32.partialorder %v1404, 8.507059e+37
  %v1406 = vand.u32 %v1364, 2147483648
  %v1407 = vor.u32 1.1754944e-38, %v1406
  %v1408 = vsel %vm1405, %v1407, %v1403
  %v1409 = vmul.f32 1.0, %v1408
  %v1410 = vtanh.pop %v1352
  %v1411 = vmul.f32 %v1394, %v1292
  %v1412 = vmul.f32 %v1379, %v1410
  %v1413 = vadd.f32 %v1411, %v1412
  %v1414 = vtanh.pop %v1413
  %v1415 = vmul.f32 %v1409, %v1414
  %v1416 = vpack.c.bf16 %v1415, %v1415
  %1417 = vst [vmem:[#allocation2 + $0x18] sm:$0xf] %v1416
  %1418 = vmatpush.bf16.msra.mxu0 %v535
  %1419 = vmatpush.bf16.msra.mxu0 %v531
  %1420 = vmatpush.bf16.msra.mxu0 %v527
  %1421 = vmatpush.bf16.msra.mxu0 %v523
  %1422 = vmatpush.bf16.msra.mxu0 %v519
  %1423 = vmatpush.bf16.msra.mxu0 %v515
  %1424 = vmatpush.bf16.msra.mxu0 %v511
  %1425 = vmatpush.bf16.msra.mxu0 %v507
  %1426 = vmatmul.bf16.gmra.mxu0 %v1416
  %v1427 = vpop.f32.mrf.mxu0
  %v1428 = vadd.f32 0.0, %v1427
  %v1429 = vpop.f32.mrf.mxu0
  %1430 = vdwg.mxu0
  %1431 = vmatpush.bf16.msra.mxu0 %v536
  %1432 = vmatpush.bf16.msra.mxu0 %v532
  %1433 = vmatpush.bf16.msra.mxu0 %v528
  %1434 = vmatpush.bf16.msra.mxu0 %v524
  %1435 = vmatpush.bf16.msra.mxu0 %v520
  %1436 = vmatpush.bf16.msra.mxu0 %v516
  %1437 = vmatpush.bf16.msra.mxu0 %v512
  %1438 = vmatpush.bf16.msra.mxu0 %v508
  %1439 = vmatmul.bf16.gmra.mxu0 %v1416
  %v1440 = vpop.f32.mrf.mxu0
  %v1441 = vadd.f32 0.0, %v1440
  %v1442 = vpop.f32.mrf.mxu0
  %1443 = vdwg.mxu0
  %1444 = vmatpush.bf16.msra.mxu0 %v537
  %1445 = vmatpush.bf16.msra.mxu0 %v533
  %1446 = vmatpush.bf16.msra.mxu0 %v529
  %1447 = vmatpush.bf16.msra.mxu0 %v525
  %1448 = vmatpush.bf16.msra.mxu0 %v521
  %1449 = vmatpush.bf16.msra.mxu0 %v517
  %1450 = vmatpush.bf16.msra.mxu0 %v513
  %1451 = vmatpush.bf16.msra.mxu0 %v509
  %1452 = vmatmul.bf16.gmra.mxu0 %v1416
  %v1453 = vpop.f32.mrf.mxu0
  %v1454 = vadd.f32 0.0, %v1453
  %v1455 = vpop.f32.mrf.mxu0
  %1456 = vdwg.mxu0
  %1457 = vmatpush.bf16.msra.mxu0 %v538
  %1458 = vmatpush.bf16.msra.mxu0 %v534
  %1459 = vmatpush.bf16.msra.mxu0 %v530
  %1460 = vmatpush.bf16.msra.mxu0 %v526
  %1461 = vmatpush.bf16.msra.mxu0 %v522
  %1462 = vmatpush.bf16.msra.mxu0 %v518
  %1463 = vmatpush.bf16.msra.mxu0 %v514
  %1464 = vmatpush.bf16.msra.mxu0 %v510
  %1465 = vmatmul.bf16.gmra.mxu0 %v1416
  %v1466 = vpop.f32.mrf.mxu0
  %v1467 = vadd.f32 0.0, %v1466
  %v1468 = vpop.f32.mrf.mxu0
  %1469 = vdwg.mxu0
  %v1470 = vadd.f32 %v322, %v1428
  %v1471 = vadd.f32 %v351, %v1441
  %v1472 = vadd.f32 %v380, %v1454
  %v1473 = vadd.f32 %v409, %v1467
  %v1474 = vxor.u32 %v1470, 2147483648
  %v1475 = vxor.u32 %v1471, 2147483648
  %v1476 = vxor.u32 %v1472, 2147483648
  %v1477 = vmul.f32 %v1474, 1.442695
  %v1478 = vpow.pop %v1477
  %v1479 = vmul.f32 %v1475, 1.442695
  %v1480 = vpow.pop %v1479
  %v1481 = vmul.f32 %v1476, 1.442695
  %v1482 = vpow.pop %v1481
  %v1483 = vadd.f32 %v1478, 1.0
  %v1484 = vadd.f32 %v1480, 1.0
  %v1485 = vadd.f32 %v1482, 1.0
  %v1486 = vrcp.pop %v1483
  %v1487 = vmul.f32 %v1483, %v1486
  %v1488 = vsub.f32 1.0, %v1487
  %v1489 = vmul.f32 %v1486, %v1488
  %v1490 = vadd.f32 %v1486, %v1489
  %vm1491 = vweird.f32 %v1483
  %vm1492 = vweird.f32 %v1486
  %vm1493 = vmor %vm1491, %vm1492
  %v1494 = vsel %vm1493, %v1486, %v1490
  %v1495 = vand.u32 2147483647, %v1483
  %vm1496 = vcmp.eq.f32.partialorder %v1495, 8.507059e+37
  %v1497 = vand.u32 %v1483, 2147483648
  %v1498 = vor.u32 1.1754944e-38, %v1497
  %v1499 = vsel %vm1496, %v1498, %v1494
  %v1500 = vmul.f32 1.0, %v1499
  %v1501 = vrcp.pop %v1484
  %v1502 = vmul.f32 %v1484, %v1501
  %v1503 = vsub.f32 1.0, %v1502
  %v1504 = vmul.f32 %v1501, %v1503
  %v1505 = vadd.f32 %v1501, %v1504
  %vm1506 = vweird.f32 %v1484
  %vm1507 = vweird.f32 %v1501
  %vm1508 = vmor %vm1506, %vm1507
  %v1509 = vsel %vm1508, %v1501, %v1505
  %v1510 = vand.u32 2147483647, %v1484
  %vm1511 = vcmp.eq.f32.partialorder %v1510, 8.507059e+37
  %v1512 = vand.u32 %v1484, 2147483648
  %v1513 = vor.u32 1.1754944e-38, %v1512
  %v1514 = vsel %vm1511, %v1513, %v1509
  %v1515 = vmul.f32 1.0, %v1514
  %v1516 = vrcp.pop %v1485
  %v1517 = vmul.f32 %v1485, %v1516
  %v1518 = vsub.f32 1.0, %v1517
  %v1519 = vmul.f32 %v1516, %v1518
  %v1520 = vadd.f32 %v1516, %v1519
  %vm1521 = vweird.f32 %v1485
  %vm1522 = vweird.f32 %v1516
  %vm1523 = vmor %vm1521, %vm1522
  %v1524 = vsel %vm1523, %v1516, %v1520
  %v1525 = vand.u32 2147483647, %v1485
  %vm1526 = vcmp.eq.f32.partialorder %v1525, 8.507059e+37
  %v1527 = vand.u32 %v1485, 2147483648
  %v1528 = vor.u32 1.1754944e-38, %v1527
  %v1529 = vsel %vm1526, %v1528, %v1524
  %v1530 = vmul.f32 1.0, %v1529
  %v1531 = vtanh.pop %v1473
  %v1532 = vmul.f32 %v1515, %v1413
  %v1533 = vmul.f32 %v1500, %v1531
  %v1534 = vadd.f32 %v1532, %v1533
  %v1535 = vtanh.pop %v1534
  %v1536 = vmul.f32 %v1530, %v1535
  %v1537 = vpack.c.bf16 %v1536, %v1536
  %1538 = vst [vmem:[#allocation2 + $0x1c] sm:$0xf] %v1537
  %1539 = vst [vmem:[%s7] sm:$0xff] %v1536
  %1540 = vst [vmem:[%s8] sm:$0xff] %v1534
  %v1541 = vld [vmem:[#allocation2] sm:$0xf]
  %v1542 = vld [vmem:[#allocation2 + $0x4] sm:$0xf]
  %v1543 = vld [vmem:[#allocation2 + $0x8] sm:$0xf]
  %v1544 = vld [vmem:[#allocation2 + $0xc] sm:$0xf]
  %v1545 = vld [vmem:[#allocation2 + $0x10] sm:$0xf]
  %v1546 = vld [vmem:[#allocation2 + $0x14] sm:$0xf]
  %v1547 = vld [vmem:[#allocation2 + $0x18] sm:$0xf]
  %v1548 = vld [vmem:[#allocation2 + $0x1c] sm:$0xf]
  %v1549 = vld [vmem:[%s4] sm:$0xff]
  %v1550 = vld [vmem:[%s4 + $0x8] sm:$0xff]
  %v1551 = vld [vmem:[%s4 + $0x10] sm:$0xff]
  %v1552 = vld [vmem:[%s4 + $0x18] sm:$0xff]
  %v1553 = vld [vmem:[%s4 + $0x20] sm:$0xff]
  %v1554 = vld [vmem:[%s4 + $0x28] sm:$0xff]
  %v1555 = vld [vmem:[%s4 + $0x30] sm:$0xff]
  %v1556 = vld [vmem:[%s4 + $0x38] sm:$0xff]
  %v1557 = vld [vmem:[%s4 + $0x40] sm:$0xff]
  %v1558 = vld [vmem:[%s4 + $0x48] sm:$0xff]
  %v1559 = vld [vmem:[%s4 + $0x50] sm:$0xff]
  %v1560 = vld [vmem:[%s4 + $0x58] sm:$0xff]
  %v1561 = vld [vmem:[%s4 + $0x60] sm:$0xff]
  %v1562 = vld [vmem:[%s4 + $0x68] sm:$0xff]
  %v1563 = vld [vmem:[%s4 + $0x70] sm:$0xff]
  %v1564 = vld [vmem:[%s4 + $0x78] sm:$0xff]
  %v1565 = vld [vmem:[%s4 + $0x80] sm:$0xff]
  %v1566 = vld [vmem:[%s4 + $0x88] sm:$0xff]
  %v1567 = vld [vmem:[%s4 + $0x90] sm:$0xff]
  %v1568 = vld [vmem:[%s4 + $0x98] sm:$0xff]
  %v1569 = vld [vmem:[%s4 + $0xa0] sm:$0xff]
  %v1570 = vld [vmem:[%s4 + $0xa8] sm:$0xff]
  %v1571 = vld [vmem:[%s4 + $0xb0] sm:$0xff]
  %v1572 = vld [vmem:[%s4 + $0xb8] sm:$0xff]
  %v1573 = vld [vmem:[%s4 + $0xc0] sm:$0xff]
  %v1574 = vld [vmem:[%s4 + $0xc8] sm:$0xff]
  %v1575 = vld [vmem:[%s4 + $0xd0] sm:$0xff]
  %v1576 = vld [vmem:[%s4 + $0xd8] sm:$0xff]
  %v1577 = vld [vmem:[%s4 + $0xe0] sm:$0xff]
  %v1578 = vld [vmem:[%s4 + $0xe8] sm:$0xff]
  %v1579 = vld [vmem:[%s4 + $0xf0] sm:$0xff]
  %v1580 = vld [vmem:[%s4 + $0xf8] sm:$0xff]
  %v1581 = vld [vmem:[%s5] sm:$0xff]
  %v1582 = vld [vmem:[%s5 + $0x8] sm:$0xff]
  %v1583 = vld [vmem:[%s5 + $0x10] sm:$0xff]
  %v1584 = vld [vmem:[%s5 + $0x18] sm:$0xff]
  %v1585 = vld [vmem:[%s5 + $0x20] sm:$0xff]
  %v1586 = vld [vmem:[%s5 + $0x28] sm:$0xff]
  %v1587 = vld [vmem:[%s5 + $0x30] sm:$0xff]
  %v1588 = vld [vmem:[%s5 + $0x38] sm:$0xff]
  %v1589 = vld [vmem:[%s5 + $0x40] sm:$0xff]
  %v1590 = vld [vmem:[%s5 + $0x48] sm:$0xff]
  %v1591 = vld [vmem:[%s5 + $0x50] sm:$0xff]
  %v1592 = vld [vmem:[%s5 + $0x58] sm:$0xff]
  %v1593 = vld [vmem:[%s5 + $0x60] sm:$0xff]
  %v1594 = vld [vmem:[%s5 + $0x68] sm:$0xff]
  %v1595 = vld [vmem:[%s5 + $0x70] sm:$0xff]
  %v1596 = vld [vmem:[%s5 + $0x78] sm:$0xff]
  %v1597 = vld [vmem:[%s5 + $0x80] sm:$0xff]
  %v1598 = vld [vmem:[%s5 + $0x88] sm:$0xff]
  %v1599 = vld [vmem:[%s5 + $0x90] sm:$0xff]
  %v1600 = vld [vmem:[%s5 + $0x98] sm:$0xff]
  %v1601 = vld [vmem:[%s5 + $0xa0] sm:$0xff]
  %v1602 = vld [vmem:[%s5 + $0xa8] sm:$0xff]
  %v1603 = vld [vmem:[%s5 + $0xb0] sm:$0xff]
  %v1604 = vld [vmem:[%s5 + $0xb8] sm:$0xff]
  %v1605 = vld [vmem:[%s5 + $0xc0] sm:$0xff]
  %v1606 = vld [vmem:[%s5 + $0xc8] sm:$0xff]
  %v1607 = vld [vmem:[%s5 + $0xd0] sm:$0xff]
  %v1608 = vld [vmem:[%s5 + $0xd8] sm:$0xff]
  %v1609 = vld [vmem:[%s5 + $0xe0] sm:$0xff]
  %v1610 = vld [vmem:[%s5 + $0xe8] sm:$0xff]
  %v1611 = vld [vmem:[%s5 + $0xf0] sm:$0xff]
  %v1612 = vld [vmem:[%s5 + $0xf8] sm:$0xff]
  %v1613 = vld [vmem:[%s6] sm:$0xf]
  %v1615 = vperm.slane %v1613, 0
  %v1616 = vperm.slane %v1613, 1
  %v1617 = vperm.slane %v1613, 2
  %v1618 = vperm.slane %v1613, 3
  %v1631 = vunpack.c.l.b16 %v1541
  %v1632 = vunpack.c.l.b16 %v1542
  %v1633 = vunpack.c.l.b16 %v1543
  %v1634 = vunpack.c.l.b16 %v1544
  %v1635 = vunpack.c.l.b16 %v1545
  %v1636 = vunpack.c.l.b16 %v1546
  %v1637 = vunpack.c.l.b16 %v1547
  %v1638 = vunpack.c.l.b16 %v1548
  %v1639 = vpack.c.b16 %v1632, %v1631
  %v1640 = vpack.c.b16 %v1634, %v1633
  %v1641 = vpack.c.b16 %v1636, %v1635
  %v1642 = vpack.c.b16 %v1638, %v1637
  %v1679 = vunpack.c.l.b16 %v1549
  %v1680 = vunpack.c.h.b16 %v1549
  %v1681 = vunpack.c.l.b16 %v1550
  %v1682 = vunpack.c.h.b16 %v1550
  %v1683 = vunpack.c.l.b16 %v1551
  %v1684 = vunpack.c.h.b16 %v1551
  %v1685 = vunpack.c.l.b16 %v1552
  %v1686 = vunpack.c.h.b16 %v1552
  %v1687 = vunpack.c.l.b16 %v1553
  %v1688 = vunpack.c.h.b16 %v1553
  %v1689 = vunpack.c.l.b16 %v1554
  %v1690 = vunpack.c.h.b16 %v1554
  %v1691 = vunpack.c.l.b16 %v1555
  %v1692 = vunpack.c.h.b16 %v1555
  %v1693 = vunpack.c.l.b16 %v1556
  %v1694 = vunpack.c.h.b16 %v1556
  %v1695 = vunpack.c.l.b16 %v1557
  %v1696 = vunpack.c.h.b16 %v1557
  %v1697 = vunpack.c.l.b16 %v1558
  %v1698 = vunpack.c.h.b16 %v1558
  %v1699 = vunpack.c.l.b16 %v1559
  %v1700 = vunpack.c.h.b16 %v1559
  %v1701 = vunpack.c.l.b16 %v1560
  %v1702 = vunpack.c.h.b16 %v1560
  %v1703 = vunpack.c.l.b16 %v1561
  %v1704 = vunpack.c.h.b16 %v1561
  %v1705 = vunpack.c.l.b16 %v1562
  %v1706 = vunpack.c.h.b16 %v1562
  %v1707 = vunpack.c.l.b16 %v1563
  %v1708 = vunpack.c.h.b16 %v1563
  %v1709 = vunpack.c.l.b16 %v1564
  %v1710 = vunpack.c.h.b16 %v1564
  %v1711 = vunpack.c.l.b16 %v1565
  %v1712 = vunpack.c.h.b16 %v1565
  %v1713 = vunpack.c.l.b16 %v1566
  %v1714 = vunpack.c.h.b16 %v1566
  %v1715 = vunpack.c.l.b16 %v1567
  %v1716 = vunpack.c.h.b16 %v1567
  %v1717 = vunpack.c.l.b16 %v1568
  %v1718 = vunpack.c.h.b16 %v1568
  %v1719 = vunpack.c.l.b16 %v1569
  %v1720 = vunpack.c.h.b16 %v1569
  %v1721 = vunpack.c.l.b16 %v1570
  %v1722 = vunpack.c.h.b16 %v1570
  %v1723 = vunpack.c.l.b16 %v1571
  %v1724 = vunpack.c.h.b16 %v1571
  %v1725 = vunpack.c.l.b16 %v1572
  %v1726 = vunpack.c.h.b16 %v1572
  %v1727 = vunpack.c.l.b16 %v1573
  %v1728 = vunpack.c.h.b16 %v1573
  %v1729 = vunpack.c.l.b16 %v1574
  %v1730 = vunpack.c.h.b16 %v1574
  %v1731 = vunpack.c.l.b16 %v1575
  %v1732 = vunpack.c.h.b16 %v1575
  %v1733 = vunpack.c.l.b16 %v1576
  %v1734 = vunpack.c.h.b16 %v1576
  %v1735 = vunpack.c.l.b16 %v1577
  %v1736 = vunpack.c.h.b16 %v1577
  %v1737 = vunpack.c.l.b16 %v1578
  %v1738 = vunpack.c.h.b16 %v1578
  %v1739 = vunpack.c.l.b16 %v1579
  %v1740 = vunpack.c.h.b16 %v1579
  %v1741 = vunpack.c.l.b16 %v1580
  %v1742 = vunpack.c.h.b16 %v1580
  %v1743 = vpack.c.b16 %v1683, %v1679
  %v1744 = vpack.c.b16 %v1684, %v1680
  %v1745 = vpack.c.b16 %v1685, %v1681
  %v1746 = vpack.c.b16 %v1686, %v1682
  %v1747 = vpack.c.b16 %v1691, %v1687
  %v1748 = vpack.c.b16 %v1692, %v1688
  %v1749 = vpack.c.b16 %v1693, %v1689
  %v1750 = vpack.c.b16 %v1694, %v1690
  %v1751 = vpack.c.b16 %v1699, %v1695
  %v1752 = vpack.c.b16 %v1700, %v1696
  %v1753 = vpack.c.b16 %v1701, %v1697
  %v1754 = vpack.c.b16 %v1702, %v1698
  %v1755 = vpack.c.b16 %v1707, %v1703
  %v1756 = vpack.c.b16 %v1708, %v1704
  %v1757 = vpack.c.b16 %v1709, %v1705
  %v1758 = vpack.c.b16 %v1710, %v1706
  %v1759 = vpack.c.b16 %v1715, %v1711
  %v1760 = vpack.c.b16 %v1716, %v1712
  %v1761 = vpack.c.b16 %v1717, %v1713
  %v1762 = vpack.c.b16 %v1718, %v1714
  %v1763 = vpack.c.b16 %v1723, %v1719
  %v1764 = vpack.c.b16 %v1724, %v1720
  %v1765 = vpack.c.b16 %v1725, %v1721
  %v1766 = vpack.c.b16 %v1726, %v1722
  %v1767 = vpack.c.b16 %v1731, %v1727
  %v1768 = vpack.c.b16 %v1732, %v1728
  %v1769 = vpack.c.b16 %v1733, %v1729
  %v1770 = vpack.c.b16 %v1734, %v1730
  %v1771 = vpack.c.b16 %v1739, %v1735
  %v1772 = vpack.c.b16 %v1740, %v1736
  %v1773 = vpack.c.b16 %v1741, %v1737
  %v1774 = vpack.c.b16 %v1742, %v1738
  %1807 = vmatpush.bf16.msra.mxu0 %v1771
  %1808 = vmatpush.bf16.msra.mxu0 %v1767
  %1809 = vmatpush.bf16.msra.mxu0 %v1763
  %1810 = vmatpush.bf16.msra.mxu0 %v1759
  %1811 = vmatpush.bf16.msra.mxu0 %v1755
  %1812 = vmatpush.bf16.msra.mxu0 %v1751
  %1813 = vmatpush.bf16.msra.mxu0 %v1747
  %1814 = vmatpush.bf16.msra.mxu0 %v1743
  %1815 = vmatmul.bf16.gmra.mxu0 %v1639
  %v1816 = vpop.f32.mrf.mxu0
  %v1817 = vadd.f32 %v1615, %v1816
  %v1818 = vpop.f32.mrf.mxu0
  %v1819 = vadd.f32 %v1615, %v1818
  %1820 = vmatmul.bf16.gmra.mxu0 %v1640
  %v1821 = vpop.f32.mrf.mxu0
  %v1822 = vadd.f32 %v1615, %v1821
  %v1823 = vpop.f32.mrf.mxu0
  %v1824 = vadd.f32 %v1615, %v1823
  %1825 = vmatmul.bf16.gmra.mxu0 %v1641
  %v1826 = vpop.f32.mrf.mxu0
  %v1827 = vadd.f32 %v1615, %v1826
  %v1828 = vpop.f32.mrf.mxu0
  %v1829 = vadd.f32 %v1615, %v1828
  %1830 = vmatmul.bf16.gmra.mxu0 %v1642
  %v1831 = vpop.f32.mrf.mxu0
  %v1832 = vadd.f32 %v1615, %v1831
  %v1833 = vpop.f32.mrf.mxu0
  %v1834 = vadd.f32 %v1615, %v1833
  %1835 = vdwg.mxu0
  %1836 = vmatpush.bf16.msra.mxu0 %v1772
  %1837 = vmatpush.bf16.msra.mxu0 %v1768
  %1838 = vmatpush.bf16.msra.mxu0 %v1764
  %1839 = vmatpush.bf16.msra.mxu0 %v1760
  %1840 = vmatpush.bf16.msra.mxu0 %v1756
  %1841 = vmatpush.bf16.msra.mxu0 %v1752
  %1842 = vmatpush.bf16.msra.mxu0 %v1748
  %1843 = vmatpush.bf16.msra.mxu0 %v1744
  %1844 = vmatmul.bf16.gmra.mxu0 %v1639
  %v1845 = vpop.f32.mrf.mxu0
  %v1846 = vadd.f32 %v1616, %v1845
  %v1847 = vpop.f32.mrf.mxu0
  %v1848 = vadd.f32 %v1616, %v1847
  %1849 = vmatmul.bf16.gmra.mxu0 %v1640
  %v1850 = vpop.f32.mrf.mxu0
  %v1851 = vadd.f32 %v1616, %v1850
  %v1852 = vpop.f32.mrf.mxu0
  %v1853 = vadd.f32 %v1616, %v1852
  %1854 = vmatmul.bf16.gmra.mxu0 %v1641
  %v1855 = vpop.f32.mrf.mxu0
  %v1856 = vadd.f32 %v1616, %v1855
  %v1857 = vpop.f32.mrf.mxu0
  %v1858 = vadd.f32 %v1616, %v1857
  %1859 = vmatmul.bf16.gmra.mxu0 %v1642
  %v1860 = vpop.f32.mrf.mxu0
  %v1861 = vadd.f32 %v1616, %v1860
  %v1862 = vpop.f32.mrf.mxu0
  %v1863 = vadd.f32 %v1616, %v1862
  %1864 = vdwg.mxu0
  %1865 = vmatpush.bf16.msra.mxu0 %v1773
  %1866 = vmatpush.bf16.msra.mxu0 %v1769
  %1867 = vmatpush.bf16.msra.mxu0 %v1765
  %1868 = vmatpush.bf16.msra.mxu0 %v1761
  %1869 = vmatpush.bf16.msra.mxu0 %v1757
  %1870 = vmatpush.bf16.msra.mxu0 %v1753
  %1871 = vmatpush.bf16.msra.mxu0 %v1749
  %1872 = vmatpush.bf16.msra.mxu0 %v1745
  %1873 = vmatmul.bf16.gmra.mxu0 %v1639
  %v1874 = vpop.f32.mrf.mxu0
  %v1875 = vadd.f32 %v1617, %v1874
  %v1876 = vpop.f32.mrf.mxu0
  %v1877 = vadd.f32 %v1617, %v1876
  %1878 = vmatmul.bf16.gmra.mxu0 %v1640
  %v1879 = vpop.f32.mrf.mxu0
  %v1880 = vadd.f32 %v1617, %v1879
  %v1881 = vpop.f32.mrf.mxu0
  %v1882 = vadd.f32 %v1617, %v1881
  %1883 = vmatmul.bf16.gmra.mxu0 %v1641
  %v1884 = vpop.f32.mrf.mxu0
  %v1885 = vadd.f32 %v1617, %v1884
  %v1886 = vpop.f32.mrf.mxu0
  %v1887 = vadd.f32 %v1617, %v1886
  %1888 = vmatmul.bf16.gmra.mxu0 %v1642
  %v1889 = vpop.f32.mrf.mxu0
  %v1890 = vadd.f32 %v1617, %v1889
  %v1891 = vpop.f32.mrf.mxu0
  %v1892 = vadd.f32 %v1617, %v1891
  %1893 = vdwg.mxu0
  %1894 = vmatpush.bf16.msra.mxu0 %v1774
  %1895 = vmatpush.bf16.msra.mxu0 %v1770
  %1896 = vmatpush.bf16.msra.mxu0 %v1766
  %1897 = vmatpush.bf16.msra.mxu0 %v1762
  %1898 = vmatpush.bf16.msra.mxu0 %v1758
  %1899 = vmatpush.bf16.msra.mxu0 %v1754
  %1900 = vmatpush.bf16.msra.mxu0 %v1750
  %1901 = vmatpush.bf16.msra.mxu0 %v1746
  %1902 = vmatmul.bf16.gmra.mxu0 %v1639
  %v1903 = vpop.f32.mrf.mxu0
  %v1904 = vadd.f32 %v1618, %v1903
  %v1905 = vpop.f32.mrf.mxu0
  %v1906 = vadd.f32 %v1618, %v1905
  %1907 = vmatmul.bf16.gmra.mxu0 %v1640
  %v1908 = vpop.f32.mrf.mxu0
  %v1909 = vadd.f32 %v1618, %v1908
  %v1910 = vpop.f32.mrf.mxu0
  %v1911 = vadd.f32 %v1618, %v1910
  %1912 = vmatmul.bf16.gmra.mxu0 %v1641
  %v1913 = vpop.f32.mrf.mxu0
  %v1914 = vadd.f32 %v1618, %v1913
  %v1915 = vpop.f32.mrf.mxu0
  %v1916 = vadd.f32 %v1618, %v1915
  %1917 = vmatmul.bf16.gmra.mxu0 %v1642
  %v1918 = vpop.f32.mrf.mxu0
  %v1919 = vadd.f32 %v1618, %v1918
  %v1920 = vpop.f32.mrf.mxu0
  %v1921 = vadd.f32 %v1618, %v1920
  %1922 = vdwg.mxu0
  %v1955 = vunpack.c.l.b16 %v1581
  %v1956 = vunpack.c.h.b16 %v1581
  %v1957 = vunpack.c.l.b16 %v1582
  %v1958 = vunpack.c.h.b16 %v1582
  %v1959 = vunpack.c.l.b16 %v1583
  %v1960 = vunpack.c.h.b16 %v1583
  %v1961 = vunpack.c.l.b16 %v1584
  %v1962 = vunpack.c.h.b16 %v1584
  %v1963 = vunpack.c.l.b16 %v1585
  %v1964 = vunpack.c.h.b16 %v1585
  %v1965 = vunpack.c.l.b16 %v1586
  %v1966 = vunpack.c.h.b16 %v1586
  %v1967 = vunpack.c.l.b16 %v1587
  %v1968 = vunpack.c.h.b16 %v1587
  %v1969 = vunpack.c.l.b16 %v1588
  %v1970 = vunpack.c.h.b16 %v1588
  %v1971 = vunpack.c.l.b16 %v1589
  %v1972 = vunpack.c.h.b16 %v1589
  %v1973 = vunpack.c.l.b16 %v1590
  %v1974 = vunpack.c.h.b16 %v1590
  %v1975 = vunpack.c.l.b16 %v1591
  %v1976 = vunpack.c.h.b16 %v1591
  %v1977 = vunpack.c.l.b16 %v1592
  %v1978 = vunpack.c.h.b16 %v1592
  %v1979 = vunpack.c.l.b16 %v1593
  %v1980 = vunpack.c.h.b16 %v1593
  %v1981 = vunpack.c.l.b16 %v1594
  %v1982 = vunpack.c.h.b16 %v1594
  %v1983 = vunpack.c.l.b16 %v1595
  %v1984 = vunpack.c.h.b16 %v1595
  %v1985 = vunpack.c.l.b16 %v1596
  %v1986 = vunpack.c.h.b16 %v1596
  %v1987 = vunpack.c.l.b16 %v1597
  %v1988 = vunpack.c.h.b16 %v1597
  %v1989 = vunpack.c.l.b16 %v1598
  %v1990 = vunpack.c.h.b16 %v1598
  %v1991 = vunpack.c.l.b16 %v1599
  %v1992 = vunpack.c.h.b16 %v1599
  %v1993 = vunpack.c.l.b16 %v1600
  %v1994 = vunpack.c.h.b16 %v1600
  %v1995 = vunpack.c.l.b16 %v1601
  %v1996 = vunpack.c.h.b16 %v1601
  %v1997 = vunpack.c.l.b16 %v1602
  %v1998 = vunpack.c.h.b16 %v1602
  %v1999 = vunpack.c.l.b16 %v1603
  %v2000 = vunpack.c.h.b16 %v1603
  %v2001 = vunpack.c.l.b16 %v1604
  %v2002 = vunpack.c.h.b16 %v1604
  %v2003 = vunpack.c.l.b16 %v1605
  %v2004 = vunpack.c.h.b16 %v1605
  %v2005 = vunpack.c.l.b16 %v1606
  %v2006 = vunpack.c.h.b16 %v1606
  %v2007 = vunpack.c.l.b16 %v1607
  %v2008 = vunpack.c.h.b16 %v1607
  %v2009 = vunpack.c.l.b16 %v1608
  %v2010 = vunpack.c.h.b16 %v1608
  %v2011 = vunpack.c.l.b16 %v1609
  %v2012 = vunpack.c.h.b16 %v1609
  %v2013 = vunpack.c.l.b16 %v1610
  %v2014 = vunpack.c.h.b16 %v1610
  %v2015 = vunpack.c.l.b16 %v1611
  %v2016 = vunpack.c.h.b16 %v1611
  %v2017 = vunpack.c.l.b16 %v1612
  %v2018 = vunpack.c.h.b16 %v1612
  %v2019 = vpack.c.b16 %v1959, %v1955
  %v2020 = vpack.c.b16 %v1960, %v1956
  %v2021 = vpack.c.b16 %v1961, %v1957
  %v2022 = vpack.c.b16 %v1962, %v1958
  %v2023 = vpack.c.b16 %v1967, %v1963
  %v2024 = vpack.c.b16 %v1968, %v1964
  %v2025 = vpack.c.b16 %v1969, %v1965
  %v2026 = vpack.c.b16 %v1970, %v1966
  %v2027 = vpack.c.b16 %v1975, %v1971
  %v2028 = vpack.c.b16 %v1976, %v1972
  %v2029 = vpack.c.b16 %v1977, %v1973
  %v2030 = vpack.c.b16 %v1978, %v1974
  %v2031 = vpack.c.b16 %v1983, %v1979
  %v2032 = vpack.c.b16 %v1984, %v1980
  %v2033 = vpack.c.b16 %v1985, %v1981
  %v2034 = vpack.c.b16 %v1986, %v1982
  %v2035 = vpack.c.b16 %v1991, %v1987
  %v2036 = vpack.c.b16 %v1992, %v1988
  %v2037 = vpack.c.b16 %v1993, %v1989
  %v2038 = vpack.c.b16 %v1994, %v1990
  %v2039 = vpack.c.b16 %v1999, %v1995
  %v2040 = vpack.c.b16 %v2000, %v1996
  %v2041 = vpack.c.b16 %v2001, %v1997
  %v2042 = vpack.c.b16 %v2002, %v1998
  %v2043 = vpack.c.b16 %v2007, %v2003
  %v2044 = vpack.c.b16 %v2008, %v2004
  %v2045 = vpack.c.b16 %v2009, %v2005
  %v2046 = vpack.c.b16 %v2010, %v2006
  %v2047 = vpack.c.b16 %v2015, %v2011
  %v2048 = vpack.c.b16 %v2016, %v2012
  %v2049 = vpack.c.b16 %v2017, %v2013
  %v2050 = vpack.c.b16 %v2018, %v2014
  %2083 = vmatpush.bf16.msra.mxu0 %v2047
  %2084 = vmatpush.bf16.msra.mxu0 %v2043
  %2085 = vmatpush.bf16.msra.mxu0 %v2039
  %2086 = vmatpush.bf16.msra.mxu0 %v2035
  %2087 = vmatpush.bf16.msra.mxu0 %v2031
  %2088 = vmatpush.bf16.msra.mxu0 %v2027
  %2089 = vmatpush.bf16.msra.mxu0 %v2023
  %2090 = vmatpush.bf16.msra.mxu0 %v2019
  %2091 = vmatmul.bf16.gmra.mxu0 0
  %v2092 = vpop.f32.mrf.mxu0
  %v2093 = vadd.f32 0.0, %v2092
  %v2094 = vpop.f32.mrf.mxu0
  %2095 = vdwg.mxu0
  %2096 = vmatpush.bf16.msra.mxu0 %v2048
  %2097 = vmatpush.bf16.msra.mxu0 %v2044
  %2098 = vmatpush.bf16.msra.mxu0 %v2040
  %2099 = vmatpush.bf16.msra.mxu0 %v2036
  %2100 = vmatpush.bf16.msra.mxu0 %v2032
  %2101 = vmatpush.bf16.msra.mxu0 %v2028
  %2102 = vmatpush.bf16.msra.mxu0 %v2024
  %2103 = vmatpush.bf16.msra.mxu0 %v2020
  %2104 = vmatmul.bf16.gmra.mxu0 0
  %v2105 = vpop.f32.mrf.mxu0
  %v2106 = vadd.f32 0.0, %v2105
  %v2107 = vpop.f32.mrf.mxu0
  %2108 = vdwg.mxu0
  %2109 = vmatpush.bf16.msra.mxu0 %v2049
  %2110 = vmatpush.bf16.msra.mxu0 %v2045
  %2111 = vmatpush.bf16.msra.mxu0 %v2041
  %2112 = vmatpush.bf16.msra.mxu0 %v2037
  %2113 = vmatpush.bf16.msra.mxu0 %v2033
  %2114 = vmatpush.bf16.msra.mxu0 %v2029
  %2115 = vmatpush.bf16.msra.mxu0 %v2025
  %2116 = vmatpush.bf16.msra.mxu0 %v2021
  %2117 = vmatmul.bf16.gmra.mxu0 0
  %v2118 = vpop.f32.mrf.mxu0
  %v2119 = vadd.f32 0.0, %v2118
  %v2120 = vpop.f32.mrf.mxu0
  %2121 = vdwg.mxu0
  %2122 = vmatpush.bf16.msra.mxu0 %v2050
  %2123 = vmatpush.bf16.msra.mxu0 %v2046
  %2124 = vmatpush.bf16.msra.mxu0 %v2042
  %2125 = vmatpush.bf16.msra.mxu0 %v2038
  %2126 = vmatpush.bf16.msra.mxu0 %v2034
  %2127 = vmatpush.bf16.msra.mxu0 %v2030
  %2128 = vmatpush.bf16.msra.mxu0 %v2026
  %2129 = vmatpush.bf16.msra.mxu0 %v2022
  %2130 = vmatmul.bf16.gmra.mxu0 0
  %v2131 = vpop.f32.mrf.mxu0
  %v2132 = vadd.f32 0.0, %v2131
  %v2133 = vpop.f32.mrf.mxu0
  %2134 = vdwg.mxu0
  %v2135 = vadd.f32 %v1817, %v2093
  %v2136 = vadd.f32 %v1846, %v2106
  %v2137 = vadd.f32 %v1875, %v2119
  %v2138 = vadd.f32 %v1904, %v2132
  %v2139 = vxor.u32 %v2135, 2147483648
  %v2140 = vxor.u32 %v2136, 2147483648
  %v2141 = vxor.u32 %v2137, 2147483648
  %v2142 = vmul.f32 %v2139, 1.442695
  %v2143 = vpow.pop %v2142
  %v2144 = vmul.f32 %v2140, 1.442695
  %v2145 = vpow.pop %v2144
  %v2146 = vmul.f32 %v2141, 1.442695
  %v2147 = vpow.pop %v2146
  %v2148 = vadd.f32 %v2143, 1.0
  %v2149 = vadd.f32 %v2145, 1.0
  %v2150 = vadd.f32 %v2147, 1.0
  %v2151 = vrcp.pop %v2148
  %v2152 = vmul.f32 %v2148, %v2151
  %v2153 = vsub.f32 1.0, %v2152
  %v2154 = vmul.f32 %v2151, %v2153
  %v2155 = vadd.f32 %v2151, %v2154
  %vm2156 = vweird.f32 %v2148
  %vm2157 = vweird.f32 %v2151
  %vm2158 = vmor %vm2156, %vm2157
  %v2159 = vsel %vm2158, %v2151, %v2155
  %v2160 = vand.u32 2147483647, %v2148
  %vm2161 = vcmp.eq.f32.partialorder %v2160, 8.507059e+37
  %v2162 = vand.u32 %v2148, 2147483648
  %v2163 = vor.u32 1.1754944e-38, %v2162
  %v2164 = vsel %vm2161, %v2163, %v2159
  %v2165 = vmul.f32 1.0, %v2164
  %v2166 = vrcp.pop %v2149
  %v2167 = vmul.f32 %v2149, %v2166
  %v2168 = vsub.f32 1.0, %v2167
  %v2169 = vmul.f32 %v2166, %v2168
  %v2170 = vadd.f32 %v2166, %v2169
  %vm2171 = vweird.f32 %v2149
  %vm2172 = vweird.f32 %v2166
  %vm2173 = vmor %vm2171, %vm2172
  %v2174 = vsel %vm2173, %v2166, %v2170
  %v2175 = vand.u32 2147483647, %v2149
  %vm2176 = vcmp.eq.f32.partialorder %v2175, 8.507059e+37
  %v2177 = vand.u32 %v2149, 2147483648
  %v2178 = vor.u32 1.1754944e-38, %v2177
  %v2179 = vsel %vm2176, %v2178, %v2174
  %v2180 = vmul.f32 1.0, %v2179
  %v2181 = vrcp.pop %v2150
  %v2182 = vmul.f32 %v2150, %v2181
  %v2183 = vsub.f32 1.0, %v2182
  %v2184 = vmul.f32 %v2181, %v2183
  %v2185 = vadd.f32 %v2181, %v2184
  %vm2186 = vweird.f32 %v2150
  %vm2187 = vweird.f32 %v2181
  %vm2188 = vmor %vm2186, %vm2187
  %v2189 = vsel %vm2188, %v2181, %v2185
  %v2190 = vand.u32 2147483647, %v2150
  %vm2191 = vcmp.eq.f32.partialorder %v2190, 8.507059e+37
  %v2192 = vand.u32 %v2150, 2147483648
  %v2193 = vor.u32 1.1754944e-38, %v2192
  %v2194 = vsel %vm2191, %v2193, %v2189
  %v2195 = vmul.f32 1.0, %v2194
  %v2196 = vtanh.pop %v2138
  %v2197 = vmul.f32 %v2180, 0.0
  %v2198 = vmul.f32 %v2165, %v2196
  %v2199 = vadd.f32 %v2197, %v2198
  %v2200 = vtanh.pop %v2199
  %v2201 = vmul.f32 %v2195, %v2200
  %v2202 = vpack.c.bf16 %v2201, %v2201
  %2203 = vmatpush.bf16.msra.mxu0 %v2047
  %2204 = vmatpush.bf16.msra.mxu0 %v2043
  %2205 = vmatpush.bf16.msra.mxu0 %v2039
  %2206 = vmatpush.bf16.msra.mxu0 %v2035
  %2207 = vmatpush.bf16.msra.mxu0 %v2031
  %2208 = vmatpush.bf16.msra.mxu0 %v2027
  %2209 = vmatpush.bf16.msra.mxu0 %v2023
  %2210 = vmatpush.bf16.msra.mxu0 %v2019
  %2211 = vmatmul.bf16.gmra.mxu0 %v2202
  %v2212 = vpop.f32.mrf.mxu0
  %v2213 = vadd.f32 0.0, %v2212
  %v2214 = vpop.f32.mrf.mxu0
  %2215 = vdwg.mxu0
  %2216 = vmatpush.bf16.msra.mxu0 %v2048
  %2217 = vmatpush.bf16.msra.mxu0 %v2044
  %2218 = vmatpush.bf16.msra.mxu0 %v2040
  %2219 = vmatpush.bf16.msra.mxu0 %v2036
  %2220 = vmatpush.bf16.msra.mxu0 %v2032
  %2221 = vmatpush.bf16.msra.mxu0 %v2028
  %2222 = vmatpush.bf16.msra.mxu0 %v2024
  %2223 = vmatpush.bf16.msra.mxu0 %v2020
  %2224 = vmatmul.bf16.gmra.mxu0 %v2202
  %v2225 = vpop.f32.mrf.mxu0
  %v2226 = vadd.f32 0.0, %v2225
  %v2227 = vpop.f32.mrf.mxu0
  %2228 = vdwg.mxu0
  %2229 = vmatpush.bf16.msra.mxu0 %v2049
  %2230 = vmatpush.bf16.msra.mxu0 %v2045
  %2231 = vmatpush.bf16.msra.mxu0 %v2041
  %2232 = vmatpush.bf16.msra.mxu0 %v2037
  %2233 = vmatpush.bf16.msra.mxu0 %v2033
  %2234 = vmatpush.bf16.msra.mxu0 %v2029
  %2235 = vmatpush.bf16.msra.mxu0 %v2025
  %2236 = vmatpush.bf16.msra.mxu0 %v2021
  %2237 = vmatmul.bf16.gmra.mxu0 %v2202
  %v2238 = vpop.f32.mrf.mxu0
  %v2239 = vadd.f32 0.0, %v2238
  %v2240 = vpop.f32.mrf.mxu0
  %2241 = vdwg.mxu0
  %2242 = vmatpush.bf16.msra.mxu0 %v2050
  %2243 = vmatpush.bf16.msra.mxu0 %v2046
  %2244 = vmatpush.bf16.msra.mxu0 %v2042
  %2245 = vmatpush.bf16.msra.mxu0 %v2038
  %2246 = vmatpush.bf16.msra.mxu0 %v2034
  %2247 = vmatpush.bf16.msra.mxu0 %v2030
  %2248 = vmatpush.bf16.msra.mxu0 %v2026
  %2249 = vmatpush.bf16.msra.mxu0 %v2022
  %2250 = vmatmul.bf16.gmra.mxu0 %v2202
  %v2251 = vpop.f32.mrf.mxu0
  %v2252 = vadd.f32 0.0, %v2251
  %v2253 = vpop.f32.mrf.mxu0
  %2254 = vdwg.mxu0
  %v2255 = vadd.f32 %v1819, %v2213
  %v2256 = vadd.f32 %v1848, %v2226
  %v2257 = vadd.f32 %v1877, %v2239
  %v2258 = vadd.f32 %v1906, %v2252
  %v2259 = vxor.u32 %v2255, 2147483648
  %v2260 = vxor.u32 %v2256, 2147483648
  %v2261 = vxor.u32 %v2257, 2147483648
  %v2262 = vmul.f32 %v2259, 1.442695
  %v2263 = vpow.pop %v2262
  %v2264 = vmul.f32 %v2260, 1.442695
  %v2265 = vpow.pop %v2264
  %v2266 = vmul.f32 %v2261, 1.442695
  %v2267 = vpow.pop %v2266
  %v2268 = vadd.f32 %v2263, 1.0
  %v2269 = vadd.f32 %v2265, 1.0
  %v2270 = vadd.f32 %v2267, 1.0
  %v2271 = vrcp.pop %v2268
  %v2272 = vmul.f32 %v2268, %v2271
  %v2273 = vsub.f32 1.0, %v2272
  %v2274 = vmul.f32 %v2271, %v2273
  %v2275 = vadd.f32 %v2271, %v2274
  %vm2276 = vweird.f32 %v2268
  %vm2277 = vweird.f32 %v2271
  %vm2278 = vmor %vm2276, %vm2277
  %v2279 = vsel %vm2278, %v2271, %v2275
  %v2280 = vand.u32 2147483647, %v2268
  %vm2281 = vcmp.eq.f32.partialorder %v2280, 8.507059e+37
  %v2282 = vand.u32 %v2268, 2147483648
  %v2283 = vor.u32 1.1754944e-38, %v2282
  %v2284 = vsel %vm2281, %v2283, %v2279
  %v2285 = vmul.f32 1.0, %v2284
  %v2286 = vrcp.pop %v2269
  %v2287 = vmul.f32 %v2269, %v2286
  %v2288 = vsub.f32 1.0, %v2287
  %v2289 = vmul.f32 %v2286, %v2288
  %v2290 = vadd.f32 %v2286, %v2289
  %vm2291 = vweird.f32 %v2269
  %vm2292 = vweird.f32 %v2286
  %vm2293 = vmor %vm2291, %vm2292
  %v2294 = vsel %vm2293, %v2286, %v2290
  %v2295 = vand.u32 2147483647, %v2269
  %vm2296 = vcmp.eq.f32.partialorder %v2295, 8.507059e+37
  %v2297 = vand.u32 %v2269, 2147483648
  %v2298 = vor.u32 1.1754944e-38, %v2297
  %v2299 = vsel %vm2296, %v2298, %v2294
  %v2300 = vmul.f32 1.0, %v2299
  %v2301 = vrcp.pop %v2270
  %v2302 = vmul.f32 %v2270, %v2301
  %v2303 = vsub.f32 1.0, %v2302
  %v2304 = vmul.f32 %v2301, %v2303
  %v2305 = vadd.f32 %v2301, %v2304
  %vm2306 = vweird.f32 %v2270
  %vm2307 = vweird.f32 %v2301
  %vm2308 = vmor %vm2306, %vm2307
  %v2309 = vsel %vm2308, %v2301, %v2305
  %v2310 = vand.u32 2147483647, %v2270
  %vm2311 = vcmp.eq.f32.partialorder %v2310, 8.507059e+37
  %v2312 = vand.u32 %v2270, 2147483648
  %v2313 = vor.u32 1.1754944e-38, %v2312
  %v2314 = vsel %vm2311, %v2313, %v2309
  %v2315 = vmul.f32 1.0, %v2314
  %v2316 = vtanh.pop %v2258
  %v2317 = vmul.f32 %v2300, %v2199
  %v2318 = vmul.f32 %v2285, %v2316
  %v2319 = vadd.f32 %v2317, %v2318
  %v2320 = vtanh.pop %v2319
  %v2321 = vmul.f32 %v2315, %v2320
  %v2322 = vpack.c.bf16 %v2321, %v2321
  %2323 = vmatpush.bf16.msra.mxu0 %v2047
  %2324 = vmatpush.bf16.msra.mxu0 %v2043
  %2325 = vmatpush.bf16.msra.mxu0 %v2039
  %2326 = vmatpush.bf16.msra.mxu0 %v2035
  %2327 = vmatpush.bf16.msra.mxu0 %v2031
  %2328 = vmatpush.bf16.msra.mxu0 %v2027
  %2329 = vmatpush.bf16.msra.mxu0 %v2023
  %2330 = vmatpush.bf16.msra.mxu0 %v2019
  %2331 = vmatmul.bf16.gmra.mxu0 %v2322
  %v2332 = vpop.f32.mrf.mxu0
  %v2333 = vadd.f32 0.0, %v2332
  %v2334 = vpop.f32.mrf.mxu0
  %2335 = vdwg.mxu0
  %2336 = vmatpush.bf16.msra.mxu0 %v2048
  %2337 = vmatpush.bf16.msra.mxu0 %v2044
  %2338 = vmatpush.bf16.msra.mxu0 %v2040
  %2339 = vmatpush.bf16.msra.mxu0 %v2036
  %2340 = vmatpush.bf16.msra.mxu0 %v2032
  %2341 = vmatpush.bf16.msra.mxu0 %v2028
  %2342 = vmatpush.bf16.msra.mxu0 %v2024
  %2343 = vmatpush.bf16.msra.mxu0 %v2020
  %2344 = vmatmul.bf16.gmra.mxu0 %v2322
  %v2345 = vpop.f32.mrf.mxu0
  %v2346 = vadd.f32 0.0, %v2345
  %v2347 = vpop.f32.mrf.mxu0
  %2348 = vdwg.mxu0
  %2349 = vmatpush.bf16.msra.mxu0 %v2049
  %2350 = vmatpush.bf16.msra.mxu0 %v2045
  %2351 = vmatpush.bf16.msra.mxu0 %v2041
  %2352 = vmatpush.bf16.msra.mxu0 %v2037
  %2353 = vmatpush.bf16.msra.mxu0 %v2033
  %2354 = vmatpush.bf16.msra.mxu0 %v2029
  %2355 = vmatpush.bf16.msra.mxu0 %v2025
  %2356 = vmatpush.bf16.msra.mxu0 %v2021
  %2357 = vmatmul.bf16.gmra.mxu0 %v2322
  %v2358 = vpop.f32.mrf.mxu0
  %v2359 = vadd.f32 0.0, %v2358
  %v2360 = vpop.f32.mrf.mxu0
  %2361 = vdwg.mxu0
  %2362 = vmatpush.bf16.msra.mxu0 %v2050
  %2363 = vmatpush.bf16.msra.mxu0 %v2046
  %2364 = vmatpush.bf16.msra.mxu0 %v2042
  %2365 = vmatpush.bf16.msra.mxu0 %v2038
  %2366 = vmatpush.bf16.msra.mxu0 %v2034
  %2367 = vmatpush.bf16.msra.mxu0 %v2030
  %2368 = vmatpush.bf16.msra.mxu0 %v2026
  %2369 = vmatpush.bf16.msra.mxu0 %v2022
  %2370 = vmatmul.bf16.gmra.mxu0 %v2322
  %v2371 = vpop.f32.mrf.mxu0
  %v2372 = vadd.f32 0.0, %v2371
  %v2373 = vpop.f32.mrf.mxu0
  %2374 = vdwg.mxu0
  %v2375 = vadd.f32 %v1822, %v2333
  %v2376 = vadd.f32 %v1851, %v2346
  %v2377 = vadd.f32 %v1880, %v2359
  %v2378 = vadd.f32 %v1909, %v2372
  %v2379 = vxor.u32 %v2375, 2147483648
  %v2380 = vxor.u32 %v2376, 2147483648
  %v2381 = vxor.u32 %v2377, 2147483648
  %v2382 = vmul.f32 %v2379, 1.442695
  %v2383 = vpow.pop %v2382
  %v2384 = vmul.f32 %v2380, 1.442695
  %v2385 = vpow.pop %v2384
  %v2386 = vmul.f32 %v2381, 1.442695
  %v2387 = vpow.pop %v2386
  %v2388 = vadd.f32 %v2383, 1.0
  %v2389 = vadd.f32 %v2385, 1.0
  %v2390 = vadd.f32 %v2387, 1.0
  %v2391 = vrcp.pop %v2388
  %v2392 = vmul.f32 %v2388, %v2391
  %v2393 = vsub.f32 1.0, %v2392
  %v2394 = vmul.f32 %v2391, %v2393
  %v2395 = vadd.f32 %v2391, %v2394
  %vm2396 = vweird.f32 %v2388
  %vm2397 = vweird.f32 %v2391
  %vm2398 = vmor %vm2396, %vm2397
  %v2399 = vsel %vm2398, %v2391, %v2395
  %v2400 = vand.u32 2147483647, %v2388
  %vm2401 = vcmp.eq.f32.partialorder %v2400, 8.507059e+37
  %v2402 = vand.u32 %v2388, 2147483648
  %v2403 = vor.u32 1.1754944e-38, %v2402
  %v2404 = vsel %vm2401, %v2403, %v2399
  %v2405 = vmul.f32 1.0, %v2404
  %v2406 = vrcp.pop %v2389
  %v2407 = vmul.f32 %v2389, %v2406
  %v2408 = vsub.f32 1.0, %v2407
  %v2409 = vmul.f32 %v2406, %v2408
  %v2410 = vadd.f32 %v2406, %v2409
  %vm2411 = vweird.f32 %v2389
  %vm2412 = vweird.f32 %v2406
  %vm2413 = vmor %vm2411, %vm2412
  %v2414 = vsel %vm2413, %v2406, %v2410
  %v2415 = vand.u32 2147483647, %v2389
  %vm2416 = vcmp.eq.f32.partialorder %v2415, 8.507059e+37
  %v2417 = vand.u32 %v2389, 2147483648
  %v2418 = vor.u32 1.1754944e-38, %v2417
  %v2419 = vsel %vm2416, %v2418, %v2414
  %v2420 = vmul.f32 1.0, %v2419
  %v2421 = vrcp.pop %v2390
  %v2422 = vmul.f32 %v2390, %v2421
  %v2423 = vsub.f32 1.0, %v2422
  %v2424 = vmul.f32 %v2421, %v2423
  %v2425 = vadd.f32 %v2421, %v2424
  %vm2426 = vweird.f32 %v2390
  %vm2427 = vweird.f32 %v2421
  %vm2428 = vmor %vm2426, %vm2427
  %v2429 = vsel %vm2428, %v2421, %v2425
  %v2430 = vand.u32 2147483647, %v2390
  %vm2431 = vcmp.eq.f32.partialorder %v2430, 8.507059e+37
  %v2432 = vand.u32 %v2390, 2147483648
  %v2433 = vor.u32 1.1754944e-38, %v2432
  %v2434 = vsel %vm2431, %v2433, %v2429
  %v2435 = vmul.f32 1.0, %v2434
  %v2436 = vtanh.pop %v2378
  %v2437 = vmul.f32 %v2420, %v2319
  %v2438 = vmul.f32 %v2405, %v2436
  %v2439 = vadd.f32 %v2437, %v2438
  %v2440 = vtanh.pop %v2439
  %v2441 = vmul.f32 %v2435, %v2440
  %v2442 = vpack.c.bf16 %v2441, %v2441
  %2443 = vmatpush.bf16.msra.mxu0 %v2047
  %2444 = vmatpush.bf16.msra.mxu0 %v2043
  %2445 = vmatpush.bf16.msra.mxu0 %v2039
  %2446 = vmatpush.bf16.msra.mxu0 %v2035
  %2447 = vmatpush.bf16.msra.mxu0 %v2031
  %2448 = vmatpush.bf16.msra.mxu0 %v2027
  %2449 = vmatpush.bf16.msra.mxu0 %v2023
  %2450 = vmatpush.bf16.msra.mxu0 %v2019
  %2451 = vmatmul.bf16.gmra.mxu0 %v2442
  %v2452 = vpop.f32.mrf.mxu0
  %v2453 = vadd.f32 0.0, %v2452
  %v2454 = vpop.f32.mrf.mxu0
  %2455 = vdwg.mxu0
  %2456 = vmatpush.bf16.msra.mxu0 %v2048
  %2457 = vmatpush.bf16.msra.mxu0 %v2044
  %2458 = vmatpush.bf16.msra.mxu0 %v2040
  %2459 = vmatpush.bf16.msra.mxu0 %v2036
  %2460 = vmatpush.bf16.msra.mxu0 %v2032
  %2461 = vmatpush.bf16.msra.mxu0 %v2028
  %2462 = vmatpush.bf16.msra.mxu0 %v2024
  %2463 = vmatpush.bf16.msra.mxu0 %v2020
  %2464 = vmatmul.bf16.gmra.mxu0 %v2442
  %v2465 = vpop.f32.mrf.mxu0
  %v2466 = vadd.f32 0.0, %v2465
  %v2467 = vpop.f32.mrf.mxu0
  %2468 = vdwg.mxu0
  %2469 = vmatpush.bf16.msra.mxu0 %v2049
  %2470 = vmatpush.bf16.msra.mxu0 %v2045
  %2471 = vmatpush.bf16.msra.mxu0 %v2041
  %2472 = vmatpush.bf16.msra.mxu0 %v2037
  %2473 = vmatpush.bf16.msra.mxu0 %v2033
  %2474 = vmatpush.bf16.msra.mxu0 %v2029
  %2475 = vmatpush.bf16.msra.mxu0 %v2025
  %2476 = vmatpush.bf16.msra.mxu0 %v2021
  %2477 = vmatmul.bf16.gmra.mxu0 %v2442
  %v2478 = vpop.f32.mrf.mxu0
  %v2479 = vadd.f32 0.0, %v2478
  %v2480 = vpop.f32.mrf.mxu0
  %2481 = vdwg.mxu0
  %2482 = vmatpush.bf16.msra.mxu0 %v2050
  %2483 = vmatpush.bf16.msra.mxu0 %v2046
  %2484 = vmatpush.bf16.msra.mxu0 %v2042
  %2485 = vmatpush.bf16.msra.mxu0 %v2038
  %2486 = vmatpush.bf16.msra.mxu0 %v2034
  %2487 = vmatpush.bf16.msra.mxu0 %v2030
  %2488 = vmatpush.bf16.msra.mxu0 %v2026
  %2489 = vmatpush.bf16.msra.mxu0 %v2022
  %2490 = vmatmul.bf16.gmra.mxu0 %v2442
  %v2491 = vpop.f32.mrf.mxu0
  %v2492 = vadd.f32 0.0, %v2491
  %v2493 = vpop.f32.mrf.mxu0
  %2494 = vdwg.mxu0
  %v2495 = vadd.f32 %v1824, %v2453
  %v2496 = vadd.f32 %v1853, %v2466
  %v2497 = vadd.f32 %v1882, %v2479
  %v2498 = vadd.f32 %v1911, %v2492
  %v2499 = vxor.u32 %v2495, 2147483648
  %v2500 = vxor.u32 %v2496, 2147483648
  %v2501 = vxor.u32 %v2497, 2147483648
  %v2502 = vmul.f32 %v2499, 1.442695
  %v2503 = vpow.pop %v2502
  %v2504 = vmul.f32 %v2500, 1.442695
  %v2505 = vpow.pop %v2504
  %v2506 = vmul.f32 %v2501, 1.442695
  %v2507 = vpow.pop %v2506
  %v2508 = vadd.f32 %v2503, 1.0
  %v2509 = vadd.f32 %v2505, 1.0
  %v2510 = vadd.f32 %v2507, 1.0
  %v2511 = vrcp.pop %v2508
  %v2512 = vmul.f32 %v2508, %v2511
  %v2513 = vsub.f32 1.0, %v2512
  %v2514 = vmul.f32 %v2511, %v2513
  %v2515 = vadd.f32 %v2511, %v2514
  %vm2516 = vweird.f32 %v2508
  %vm2517 = vweird.f32 %v2511
  %vm2518 = vmor %vm2516, %vm2517
  %v2519 = vsel %vm2518, %v2511, %v2515
  %v2520 = vand.u32 2147483647, %v2508
  %vm2521 = vcmp.eq.f32.partialorder %v2520, 8.507059e+37
  %v2522 = vand.u32 %v2508, 2147483648
  %v2523 = vor.u32 1.1754944e-38, %v2522
  %v2524 = vsel %vm2521, %v2523, %v2519
  %v2525 = vmul.f32 1.0, %v2524
  %v2526 = vrcp.pop %v2509
  %v2527 = vmul.f32 %v2509, %v2526
  %v2528 = vsub.f32 1.0, %v2527
  %v2529 = vmul.f32 %v2526, %v2528
  %v2530 = vadd.f32 %v2526, %v2529
  %vm2531 = vweird.f32 %v2509
  %vm2532 = vweird.f32 %v2526
  %vm2533 = vmor %vm2531, %vm2532
  %v2534 = vsel %vm2533, %v2526, %v2530
  %v2535 = vand.u32 2147483647, %v2509
  %vm2536 = vcmp.eq.f32.partialorder %v2535, 8.507059e+37
  %v2537 = vand.u32 %v2509, 2147483648
  %v2538 = vor.u32 1.1754944e-38, %v2537
  %v2539 = vsel %vm2536, %v2538, %v2534
  %v2540 = vmul.f32 1.0, %v2539
  %v2541 = vrcp.pop %v2510
  %v2542 = vmul.f32 %v2510, %v2541
  %v2543 = vsub.f32 1.0, %v2542
  %v2544 = vmul.f32 %v2541, %v2543
  %v2545 = vadd.f32 %v2541, %v2544
  %vm2546 = vweird.f32 %v2510
  %vm2547 = vweird.f32 %v2541
  %vm2548 = vmor %vm2546, %vm2547
  %v2549 = vsel %vm2548, %v2541, %v2545
  %v2550 = vand.u32 2147483647, %v2510
  %vm2551 = vcmp.eq.f32.partialorder %v2550, 8.507059e+37
  %v2552 = vand.u32 %v2510, 2147483648
  %v2553 = vor.u32 1.1754944e-38, %v2552
  %v2554 = vsel %vm2551, %v2553, %v2549
  %v2555 = vmul.f32 1.0, %v2554
  %v2556 = vtanh.pop %v2498
  %v2557 = vmul.f32 %v2540, %v2439
  %v2558 = vmul.f32 %v2525, %v2556
  %v2559 = vadd.f32 %v2557, %v2558
  %v2560 = vtanh.pop %v2559
  %v2561 = vmul.f32 %v2555, %v2560
  %v2562 = vpack.c.bf16 %v2561, %v2561
  %2563 = vmatpush.bf16.msra.mxu0 %v2047
  %2564 = vmatpush.bf16.msra.mxu0 %v2043
  %2565 = vmatpush.bf16.msra.mxu0 %v2039
  %2566 = vmatpush.bf16.msra.mxu0 %v2035
  %2567 = vmatpush.bf16.msra.mxu0 %v2031
  %2568 = vmatpush.bf16.msra.mxu0 %v2027
  %2569 = vmatpush.bf16.msra.mxu0 %v2023
  %2570 = vmatpush.bf16.msra.mxu0 %v2019
  %2571 = vmatmul.bf16.gmra.mxu0 %v2562
  %v2572 = vpop.f32.mrf.mxu0
  %v2573 = vadd.f32 0.0, %v2572
  %v2574 = vpop.f32.mrf.mxu0
  %2575 = vdwg.mxu0
  %2576 = vmatpush.bf16.msra.mxu0 %v2048
  %2577 = vmatpush.bf16.msra.mxu0 %v2044
  %2578 = vmatpush.bf16.msra.mxu0 %v2040
  %2579 = vmatpush.bf16.msra.mxu0 %v2036
  %2580 = vmatpush.bf16.msra.mxu0 %v2032
  %2581 = vmatpush.bf16.msra.mxu0 %v2028
  %2582 = vmatpush.bf16.msra.mxu0 %v2024
  %2583 = vmatpush.bf16.msra.mxu0 %v2020
  %2584 = vmatmul.bf16.gmra.mxu0 %v2562
  %v2585 = vpop.f32.mrf.mxu0
  %v2586 = vadd.f32 0.0, %v2585
  %v2587 = vpop.f32.mrf.mxu0
  %2588 = vdwg.mxu0
  %2589 = vmatpush.bf16.msra.mxu0 %v2049
  %2590 = vmatpush.bf16.msra.mxu0 %v2045
  %2591 = vmatpush.bf16.msra.mxu0 %v2041
  %2592 = vmatpush.bf16.msra.mxu0 %v2037
  %2593 = vmatpush.bf16.msra.mxu0 %v2033
  %2594 = vmatpush.bf16.msra.mxu0 %v2029
  %2595 = vmatpush.bf16.msra.mxu0 %v2025
  %2596 = vmatpush.bf16.msra.mxu0 %v2021
  %2597 = vmatmul.bf16.gmra.mxu0 %v2562
  %v2598 = vpop.f32.mrf.mxu0
  %v2599 = vadd.f32 0.0, %v2598
  %v2600 = vpop.f32.mrf.mxu0
  %2601 = vdwg.mxu0
  %2602 = vmatpush.bf16.msra.mxu0 %v2050
  %2603 = vmatpush.bf16.msra.mxu0 %v2046
  %2604 = vmatpush.bf16.msra.mxu0 %v2042
  %2605 = vmatpush.bf16.msra.mxu0 %v2038
  %2606 = vmatpush.bf16.msra.mxu0 %v2034
  %2607 = vmatpush.bf16.msra.mxu0 %v2030
  %2608 = vmatpush.bf16.msra.mxu0 %v2026
  %2609 = vmatpush.bf16.msra.mxu0 %v2022
  %2610 = vmatmul.bf16.gmra.mxu0 %v2562
  %v2611 = vpop.f32.mrf.mxu0
  %v2612 = vadd.f32 0.0, %v2611
  %v2613 = vpop.f32.mrf.mxu0
  %2614 = vdwg.mxu0
  %v2615 = vadd.f32 %v1827, %v2573
  %v2616 = vadd.f32 %v1856, %v2586
  %v2617 = vadd.f32 %v1885, %v2599
  %v2618 = vadd.f32 %v1914, %v2612
  %v2619 = vxor.u32 %v2615, 2147483648
  %v2620 = vxor.u32 %v2616, 2147483648
  %v2621 = vxor.u32 %v2617, 2147483648
  %v2622 = vmul.f32 %v2619, 1.442695
  %v2623 = vpow.pop %v2622
  %v2624 = vmul.f32 %v2620, 1.442695
  %v2625 = vpow.pop %v2624
  %v2626 = vmul.f32 %v2621, 1.442695
  %v2627 = vpow.pop %v2626
  %v2628 = vadd.f32 %v2623, 1.0
  %v2629 = vadd.f32 %v2625, 1.0
  %v2630 = vadd.f32 %v2627, 1.0
  %v2631 = vrcp.pop %v2628
  %v2632 = vmul.f32 %v2628, %v2631
  %v2633 = vsub.f32 1.0, %v2632
  %v2634 = vmul.f32 %v2631, %v2633
  %v2635 = vadd.f32 %v2631, %v2634
  %vm2636 = vweird.f32 %v2628
  %vm2637 = vweird.f32 %v2631
  %vm2638 = vmor %vm2636, %vm2637
  %v2639 = vsel %vm2638, %v2631, %v2635
  %v2640 = vand.u32 2147483647, %v2628
  %vm2641 = vcmp.eq.f32.partialorder %v2640, 8.507059e+37
  %v2642 = vand.u32 %v2628, 2147483648
  %v2643 = vor.u32 1.1754944e-38, %v2642
  %v2644 = vsel %vm2641, %v2643, %v2639
  %v2645 = vmul.f32 1.0, %v2644
  %v2646 = vrcp.pop %v2629
  %v2647 = vmul.f32 %v2629, %v2646
  %v2648 = vsub.f32 1.0, %v2647
  %v2649 = vmul.f32 %v2646, %v2648
  %v2650 = vadd.f32 %v2646, %v2649
  %vm2651 = vweird.f32 %v2629
  %vm2652 = vweird.f32 %v2646
  %vm2653 = vmor %vm2651, %vm2652
  %v2654 = vsel %vm2653, %v2646, %v2650
  %v2655 = vand.u32 2147483647, %v2629
  %vm2656 = vcmp.eq.f32.partialorder %v2655, 8.507059e+37
  %v2657 = vand.u32 %v2629, 2147483648
  %v2658 = vor.u32 1.1754944e-38, %v2657
  %v2659 = vsel %vm2656, %v2658, %v2654
  %v2660 = vmul.f32 1.0, %v2659
  %v2661 = vrcp.pop %v2630
  %v2662 = vmul.f32 %v2630, %v2661
  %v2663 = vsub.f32 1.0, %v2662
  %v2664 = vmul.f32 %v2661, %v2663
  %v2665 = vadd.f32 %v2661, %v2664
  %vm2666 = vweird.f32 %v2630
  %vm2667 = vweird.f32 %v2661
  %vm2668 = vmor %vm2666, %vm2667
  %v2669 = vsel %vm2668, %v2661, %v2665
  %v2670 = vand.u32 2147483647, %v2630
  %vm2671 = vcmp.eq.f32.partialorder %v2670, 8.507059e+37
  %v2672 = vand.u32 %v2630, 2147483648
  %v2673 = vor.u32 1.1754944e-38, %v2672
  %v2674 = vsel %vm2671, %v2673, %v2669
  %v2675 = vmul.f32 1.0, %v2674
  %v2676 = vtanh.pop %v2618
  %v2677 = vmul.f32 %v2660, %v2559
  %v2678 = vmul.f32 %v2645, %v2676
  %v2679 = vadd.f32 %v2677, %v2678
  %v2680 = vtanh.pop %v2679
  %v2681 = vmul.f32 %v2675, %v2680
  %v2682 = vpack.c.bf16 %v2681, %v2681
  %2683 = vmatpush.bf16.msra.mxu0 %v2047
  %2684 = vmatpush.bf16.msra.mxu0 %v2043
  %2685 = vmatpush.bf16.msra.mxu0 %v2039
  %2686 = vmatpush.bf16.msra.mxu0 %v2035
  %2687 = vmatpush.bf16.msra.mxu0 %v2031
  %2688 = vmatpush.bf16.msra.mxu0 %v2027
  %2689 = vmatpush.bf16.msra.mxu0 %v2023
  %2690 = vmatpush.bf16.msra.mxu0 %v2019
  %2691 = vmatmul.bf16.gmra.mxu0 %v2682
  %v2692 = vpop.f32.mrf.mxu0
  %v2693 = vadd.f32 0.0, %v2692
  %v2694 = vpop.f32.mrf.mxu0
  %2695 = vdwg.mxu0
  %2696 = vmatpush.bf16.msra.mxu0 %v2048
  %2697 = vmatpush.bf16.msra.mxu0 %v2044
  %2698 = vmatpush.bf16.msra.mxu0 %v2040
  %2699 = vmatpush.bf16.msra.mxu0 %v2036
  %2700 = vmatpush.bf16.msra.mxu0 %v2032
  %2701 = vmatpush.bf16.msra.mxu0 %v2028
  %2702 = vmatpush.bf16.msra.mxu0 %v2024
  %2703 = vmatpush.bf16.msra.mxu0 %v2020
  %2704 = vmatmul.bf16.gmra.mxu0 %v2682
  %v2705 = vpop.f32.mrf.mxu0
  %v2706 = vadd.f32 0.0, %v2705
  %v2707 = vpop.f32.mrf.mxu0
  %2708 = vdwg.mxu0
  %2709 = vmatpush.bf16.msra.mxu0 %v2049
  %2710 = vmatpush.bf16.msra.mxu0 %v2045
  %2711 = vmatpush.bf16.msra.mxu0 %v2041
  %2712 = vmatpush.bf16.msra.mxu0 %v2037
  %2713 = vmatpush.bf16.msra.mxu0 %v2033
  %2714 = vmatpush.bf16.msra.mxu0 %v2029
  %2715 = vmatpush.bf16.msra.mxu0 %v2025
  %2716 = vmatpush.bf16.msra.mxu0 %v2021
  %2717 = vmatmul.bf16.gmra.mxu0 %v2682
  %v2718 = vpop.f32.mrf.mxu0
  %v2719 = vadd.f32 0.0, %v2718
  %v2720 = vpop.f32.mrf.mxu0
  %2721 = vdwg.mxu0
  %2722 = vmatpush.bf16.msra.mxu0 %v2050
  %2723 = vmatpush.bf16.msra.mxu0 %v2046
  %2724 = vmatpush.bf16.msra.mxu0 %v2042
  %2725 = vmatpush.bf16.msra.mxu0 %v2038
  %2726 = vmatpush.bf16.msra.mxu0 %v2034
  %2727 = vmatpush.bf16.msra.mxu0 %v2030
  %2728 = vmatpush.bf16.msra.mxu0 %v2026
  %2729 = vmatpush.bf16.msra.mxu0 %v2022
  %2730 = vmatmul.bf16.gmra.mxu0 %v2682
  %v2731 = vpop.f32.mrf.mxu0
  %v2732 = vadd.f32 0.0, %v2731
  %v2733 = vpop.f32.mrf.mxu0
  %2734 = vdwg.mxu0
  %v2735 = vadd.f32 %v1829, %v2693
  %v2736 = vadd.f32 %v1858, %v2706
  %v2737 = vadd.f32 %v1887, %v2719
  %v2738 = vadd.f32 %v1916, %v2732
  %v2739 = vxor.u32 %v2735, 2147483648
  %v2740 = vxor.u32 %v2736, 2147483648
  %v2741 = vxor.u32 %v2737, 2147483648
  %v2742 = vmul.f32 %v2739, 1.442695
  %v2743 = vpow.pop %v2742
  %v2744 = vmul.f32 %v2740, 1.442695
  %v2745 = vpow.pop %v2744
  %v2746 = vmul.f32 %v2741, 1.442695
  %v2747 = vpow.pop %v2746
  %v2748 = vadd.f32 %v2743, 1.0
  %v2749 = vadd.f32 %v2745, 1.0
  %v2750 = vadd.f32 %v2747, 1.0
  %v2751 = vrcp.pop %v2748
  %v2752 = vmul.f32 %v2748, %v2751
  %v2753 = vsub.f32 1.0, %v2752
  %v2754 = vmul.f32 %v2751, %v2753
  %v2755 = vadd.f32 %v2751, %v2754
  %vm2756 = vweird.f32 %v2748
  %vm2757 = vweird.f32 %v2751
  %vm2758 = vmor %vm2756, %vm2757
  %v2759 = vsel %vm2758, %v2751, %v2755
  %v2760 = vand.u32 2147483647, %v2748
  %vm2761 = vcmp.eq.f32.partialorder %v2760, 8.507059e+37
  %v2762 = vand.u32 %v2748, 2147483648
  %v2763 = vor.u32 1.1754944e-38, %v2762
  %v2764 = vsel %vm2761, %v2763, %v2759
  %v2765 = vmul.f32 1.0, %v2764
  %v2766 = vrcp.pop %v2749
  %v2767 = vmul.f32 %v2749, %v2766
  %v2768 = vsub.f32 1.0, %v2767
  %v2769 = vmul.f32 %v2766, %v2768
  %v2770 = vadd.f32 %v2766, %v2769
  %vm2771 = vweird.f32 %v2749
  %vm2772 = vweird.f32 %v2766
  %vm2773 = vmor %vm2771, %vm2772
  %v2774 = vsel %vm2773, %v2766, %v2770
  %v2775 = vand.u32 2147483647, %v2749
  %vm2776 = vcmp.eq.f32.partialorder %v2775, 8.507059e+37
  %v2777 = vand.u32 %v2749, 2147483648
  %v2778 = vor.u32 1.1754944e-38, %v2777
  %v2779 = vsel %vm2776, %v2778, %v2774
  %v2780 = vmul.f32 1.0, %v2779
  %v2781 = vrcp.pop %v2750
  %v2782 = vmul.f32 %v2750, %v2781
  %v2783 = vsub.f32 1.0, %v2782
  %v2784 = vmul.f32 %v2781, %v2783
  %v2785 = vadd.f32 %v2781, %v2784
  %vm2786 = vweird.f32 %v2750
  %vm2787 = vweird.f32 %v2781
  %vm2788 = vmor %vm2786, %vm2787
  %v2789 = vsel %vm2788, %v2781, %v2785
  %v2790 = vand.u32 2147483647, %v2750
  %vm2791 = vcmp.eq.f32.partialorder %v2790, 8.507059e+37
  %v2792 = vand.u32 %v2750, 2147483648
  %v2793 = vor.u32 1.1754944e-38, %v2792
  %v2794 = vsel %vm2791, %v2793, %v2789
  %v2795 = vmul.f32 1.0, %v2794
  %v2796 = vtanh.pop %v2738
  %v2797 = vmul.f32 %v2780, %v2679
  %v2798 = vmul.f32 %v2765, %v2796
  %v2799 = vadd.f32 %v2797, %v2798
  %v2800 = vtanh.pop %v2799
  %v2801 = vmul.f32 %v2795, %v2800
  %v2802 = vpack.c.bf16 %v2801, %v2801
  %2803 = vmatpush.bf16.msra.mxu0 %v2047
  %2804 = vmatpush.bf16.msra.mxu0 %v2043
  %2805 = vmatpush.bf16.msra.mxu0 %v2039
  %2806 = vmatpush.bf16.msra.mxu0 %v2035
  %2807 = vmatpush.bf16.msra.mxu0 %v2031
  %2808 = vmatpush.bf16.msra.mxu0 %v2027
  %2809 = vmatpush.bf16.msra.mxu0 %v2023
  %2810 = vmatpush.bf16.msra.mxu0 %v2019
  %2811 = vmatmul.bf16.gmra.mxu0 %v2802
  %v2812 = vpop.f32.mrf.mxu0
  %v2813 = vadd.f32 0.0, %v2812
  %v2814 = vpop.f32.mrf.mxu0
  %2815 = vdwg.mxu0
  %2816 = vmatpush.bf16.msra.mxu0 %v2048
  %2817 = vmatpush.bf16.msra.mxu0 %v2044
  %2818 = vmatpush.bf16.msra.mxu0 %v2040
  %2819 = vmatpush.bf16.msra.mxu0 %v2036
  %2820 = vmatpush.bf16.msra.mxu0 %v2032
  %2821 = vmatpush.bf16.msra.mxu0 %v2028
  %2822 = vmatpush.bf16.msra.mxu0 %v2024
  %2823 = vmatpush.bf16.msra.mxu0 %v2020
  %2824 = vmatmul.bf16.gmra.mxu0 %v2802
  %v2825 = vpop.f32.mrf.mxu0
  %v2826 = vadd.f32 0.0, %v2825
  %v2827 = vpop.f32.mrf.mxu0
  %2828 = vdwg.mxu0
  %2829 = vmatpush.bf16.msra.mxu0 %v2049
  %2830 = vmatpush.bf16.msra.mxu0 %v2045
  %2831 = vmatpush.bf16.msra.mxu0 %v2041
  %2832 = vmatpush.bf16.msra.mxu0 %v2037
  %2833 = vmatpush.bf16.msra.mxu0 %v2033
  %2834 = vmatpush.bf16.msra.mxu0 %v2029
  %2835 = vmatpush.bf16.msra.mxu0 %v2025
  %2836 = vmatpush.bf16.msra.mxu0 %v2021
  %2837 = vmatmul.bf16.gmra.mxu0 %v2802
  %v2838 = vpop.f32.mrf.mxu0
  %v2839 = vadd.f32 0.0, %v2838
  %v2840 = vpop.f32.mrf.mxu0
  %2841 = vdwg.mxu0
  %2842 = vmatpush.bf16.msra.mxu0 %v2050
  %2843 = vmatpush.bf16.msra.mxu0 %v2046
  %2844 = vmatpush.bf16.msra.mxu0 %v2042
  %2845 = vmatpush.bf16.msra.mxu0 %v2038
  %2846 = vmatpush.bf16.msra.mxu0 %v2034
  %2847 = vmatpush.bf16.msra.mxu0 %v2030
  %2848 = vmatpush.bf16.msra.mxu0 %v2026
  %2849 = vmatpush.bf16.msra.mxu0 %v2022
  %2850 = vmatmul.bf16.gmra.mxu0 %v2802
  %v2851 = vpop.f32.mrf.mxu0
  %v2852 = vadd.f32 0.0, %v2851
  %v2853 = vpop.f32.mrf.mxu0
  %2854 = vdwg.mxu0
  %v2855 = vadd.f32 %v1832, %v2813
  %v2856 = vadd.f32 %v1861, %v2826
  %v2857 = vadd.f32 %v1890, %v2839
  %v2858 = vadd.f32 %v1919, %v2852
  %v2859 = vxor.u32 %v2855, 2147483648
  %v2860 = vxor.u32 %v2856, 2147483648
  %v2861 = vxor.u32 %v2857, 2147483648
  %v2862 = vmul.f32 %v2859, 1.442695
  %v2863 = vpow.pop %v2862
  %v2864 = vmul.f32 %v2860, 1.442695
  %v2865 = vpow.pop %v2864
  %v2866 = vmul.f32 %v2861, 1.442695
  %v2867 = vpow.pop %v2866
  %v2868 = vadd.f32 %v2863, 1.0
  %v2869 = vadd.f32 %v2865, 1.0
  %v2870 = vadd.f32 %v2867, 1.0
  %v2871 = vrcp.pop %v2868
  %v2872 = vmul.f32 %v2868, %v2871
  %v2873 = vsub.f32 1.0, %v2872
  %v2874 = vmul.f32 %v2871, %v2873
  %v2875 = vadd.f32 %v2871, %v2874
  %vm2876 = vweird.f32 %v2868
  %vm2877 = vweird.f32 %v2871
  %vm2878 = vmor %vm2876, %vm2877
  %v2879 = vsel %vm2878, %v2871, %v2875
  %v2880 = vand.u32 2147483647, %v2868
  %vm2881 = vcmp.eq.f32.partialorder %v2880, 8.507059e+37
  %v2882 = vand.u32 %v2868, 2147483648
  %v2883 = vor.u32 1.1754944e-38, %v2882
  %v2884 = vsel %vm2881, %v2883, %v2879
  %v2885 = vmul.f32 1.0, %v2884
  %v2886 = vrcp.pop %v2869
  %v2887 = vmul.f32 %v2869, %v2886
  %v2888 = vsub.f32 1.0, %v2887
  %v2889 = vmul.f32 %v2886, %v2888
  %v2890 = vadd.f32 %v2886, %v2889
  %vm2891 = vweird.f32 %v2869
  %vm2892 = vweird.f32 %v2886
  %vm2893 = vmor %vm2891, %vm2892
  %v2894 = vsel %vm2893, %v2886, %v2890
  %v2895 = vand.u32 2147483647, %v2869
  %vm2896 = vcmp.eq.f32.partialorder %v2895, 8.507059e+37
  %v2897 = vand.u32 %v2869, 2147483648
  %v2898 = vor.u32 1.1754944e-38, %v2897
  %v2899 = vsel %vm2896, %v2898, %v2894
  %v2900 = vmul.f32 1.0, %v2899
  %v2901 = vrcp.pop %v2870
  %v2902 = vmul.f32 %v2870, %v2901
  %v2903 = vsub.f32 1.0, %v2902
  %v2904 = vmul.f32 %v2901, %v2903
  %v2905 = vadd.f32 %v2901, %v2904
  %vm2906 = vweird.f32 %v2870
  %vm2907 = vweird.f32 %v2901
  %vm2908 = vmor %vm2906, %vm2907
  %v2909 = vsel %vm2908, %v2901, %v2905
  %v2910 = vand.u32 2147483647, %v2870
  %vm2911 = vcmp.eq.f32.partialorder %v2910, 8.507059e+37
  %v2912 = vand.u32 %v2870, 2147483648
  %v2913 = vor.u32 1.1754944e-38, %v2912
  %v2914 = vsel %vm2911, %v2913, %v2909
  %v2915 = vmul.f32 1.0, %v2914
  %v2916 = vtanh.pop %v2858
  %v2917 = vmul.f32 %v2900, %v2799
  %v2918 = vmul.f32 %v2885, %v2916
  %v2919 = vadd.f32 %v2917, %v2918
  %v2920 = vtanh.pop %v2919
  %v2921 = vmul.f32 %v2915, %v2920
  %v2922 = vpack.c.bf16 %v2921, %v2921
  %2923 = vmatpush.bf16.msra.mxu0 %v2047
  %2924 = vmatpush.bf16.msra.mxu0 %v2043
  %2925 = vmatpush.bf16.msra.mxu0 %v2039
  %2926 = vmatpush.bf16.msra.mxu0 %v2035
  %2927 = vmatpush.bf16.msra.mxu0 %v2031
  %2928 = vmatpush.bf16.msra.mxu0 %v2027
  %2929 = vmatpush.bf16.msra.mxu0 %v2023
  %2930 = vmatpush.bf16.msra.mxu0 %v2019
  %2931 = vmatmul.bf16.gmra.mxu0 %v2922
  %v2932 = vpop.f32.mrf.mxu0
  %v2933 = vadd.f32 0.0, %v2932
  %v2934 = vpop.f32.mrf.mxu0
  %2935 = vdwg.mxu0
  %2936 = vmatpush.bf16.msra.mxu0 %v2048
  %2937 = vmatpush.bf16.msra.mxu0 %v2044
  %2938 = vmatpush.bf16.msra.mxu0 %v2040
  %2939 = vmatpush.bf16.msra.mxu0 %v2036
  %2940 = vmatpush.bf16.msra.mxu0 %v2032
  %2941 = vmatpush.bf16.msra.mxu0 %v2028
  %2942 = vmatpush.bf16.msra.mxu0 %v2024
  %2943 = vmatpush.bf16.msra.mxu0 %v2020
  %2944 = vmatmul.bf16.gmra.mxu0 %v2922
  %v2945 = vpop.f32.mrf.mxu0
  %v2946 = vadd.f32 0.0, %v2945
  %v2947 = vpop.f32.mrf.mxu0
  %2948 = vdwg.mxu0
  %2949 = vmatpush.bf16.msra.mxu0 %v2049
  %2950 = vmatpush.bf16.msra.mxu0 %v2045
  %2951 = vmatpush.bf16.msra.mxu0 %v2041
  %2952 = vmatpush.bf16.msra.mxu0 %v2037
  %2953 = vmatpush.bf16.msra.mxu0 %v2033
  %2954 = vmatpush.bf16.msra.mxu0 %v2029
  %2955 = vmatpush.bf16.msra.mxu0 %v2025
  %2956 = vmatpush.bf16.msra.mxu0 %v2021
  %2957 = vmatmul.bf16.gmra.mxu0 %v2922
  %v2958 = vpop.f32.mrf.mxu0
  %v2959 = vadd.f32 0.0, %v2958
  %v2960 = vpop.f32.mrf.mxu0
  %2961 = vdwg.mxu0
  %2962 = vmatpush.bf16.msra.mxu0 %v2050
  %2963 = vmatpush.bf16.msra.mxu0 %v2046
  %2964 = vmatpush.bf16.msra.mxu0 %v2042
  %2965 = vmatpush.bf16.msra.mxu0 %v2038
  %2966 = vmatpush.bf16.msra.mxu0 %v2034
  %2967 = vmatpush.bf16.msra.mxu0 %v2030
  %2968 = vmatpush.bf16.msra.mxu0 %v2026
  %2969 = vmatpush.bf16.msra.mxu0 %v2022
  %2970 = vmatmul.bf16.gmra.mxu0 %v2922
  %v2971 = vpop.f32.mrf.mxu0
  %v2972 = vadd.f32 0.0, %v2971
  %v2973 = vpop.f32.mrf.mxu0
  %2974 = vdwg.mxu0
  %v2975 = vadd.f32 %v1834, %v2933
  %v2976 = vadd.f32 %v1863, %v2946
  %v2977 = vadd.f32 %v1892, %v2959
  %v2978 = vadd.f32 %v1921, %v2972
  %v2979 = vxor.u32 %v2975, 2147483648
  %v2980 = vxor.u32 %v2976, 2147483648
  %v2981 = vxor.u32 %v2977, 2147483648
  %v2982 = vmul.f32 %v2979, 1.442695
  %v2983 = vpow.pop %v2982
  %v2984 = vmul.f32 %v2980, 1.442695
  %v2985 = vpow.pop %v2984
  %v2986 = vmul.f32 %v2981, 1.442695
  %v2987 = vpow.pop %v2986
  %v2988 = vadd.f32 %v2983, 1.0
  %v2989 = vadd.f32 %v2985, 1.0
  %v2990 = vadd.f32 %v2987, 1.0
  %v2991 = vrcp.pop %v2988
  %v2992 = vmul.f32 %v2988, %v2991
  %v2993 = vsub.f32 1.0, %v2992
  %v2994 = vmul.f32 %v2991, %v2993
  %v2995 = vadd.f32 %v2991, %v2994
  %vm2996 = vweird.f32 %v2988
  %vm2997 = vweird.f32 %v2991
  %vm2998 = vmor %vm2996, %vm2997
  %v2999 = vsel %vm2998, %v2991, %v2995
  %v3000 = vand.u32 2147483647, %v2988
  %vm3001 = vcmp.eq.f32.partialorder %v3000, 8.507059e+37
  %v3002 = vand.u32 %v2988, 2147483648
  %v3003 = vor.u32 1.1754944e-38, %v3002
  %v3004 = vsel %vm3001, %v3003, %v2999
  %v3005 = vmul.f32 1.0, %v3004
  %v3006 = vrcp.pop %v2989
  %v3007 = vmul.f32 %v2989, %v3006
  %v3008 = vsub.f32 1.0, %v3007
  %v3009 = vmul.f32 %v3006, %v3008
  %v3010 = vadd.f32 %v3006, %v3009
  %vm3011 = vweird.f32 %v2989
  %vm3012 = vweird.f32 %v3006
  %vm3013 = vmor %vm3011, %vm3012
  %v3014 = vsel %vm3013, %v3006, %v3010
  %v3015 = vand.u32 2147483647, %v2989
  %vm3016 = vcmp.eq.f32.partialorder %v3015, 8.507059e+37
  %v3017 = vand.u32 %v2989, 2147483648
  %v3018 = vor.u32 1.1754944e-38, %v3017
  %v3019 = vsel %vm3016, %v3018, %v3014
  %v3020 = vmul.f32 1.0, %v3019
  %v3021 = vrcp.pop %v2990
  %v3022 = vmul.f32 %v2990, %v3021
  %v3023 = vsub.f32 1.0, %v3022
  %v3024 = vmul.f32 %v3021, %v3023
  %v3025 = vadd.f32 %v3021, %v3024
  %vm3026 = vweird.f32 %v2990
  %vm3027 = vweird.f32 %v3021
  %vm3028 = vmor %vm3026, %vm3027
  %v3029 = vsel %vm3028, %v3021, %v3025
  %v3030 = vand.u32 2147483647, %v2990
  %vm3031 = vcmp.eq.f32.partialorder %v3030, 8.507059e+37
  %v3032 = vand.u32 %v2990, 2147483648
  %v3033 = vor.u32 1.1754944e-38, %v3032
  %v3034 = vsel %vm3031, %v3033, %v3029
  %v3035 = vmul.f32 1.0, %v3034
  %v3036 = vtanh.pop %v2978
  %v3037 = vmul.f32 %v3020, %v2919
  %v3038 = vmul.f32 %v3005, %v3036
  %v3039 = vadd.f32 %v3037, %v3038
  %v3040 = vtanh.pop %v3039
  %v3041 = vmul.f32 %v3035, %v3040
  %s3042 = scalar_lea.vmem %s7, 8
  %3043 = vst [vmem:[%s3042] sm:$0xff] %v3041
  %s3044 = scalar_lea.vmem %s8, 8
  %3045 = vst [vmem:[%s3044] sm:$0xff] %v3039
  // Predicated region
  $region30: #{encoder_pallas.1} parent=0 // pred_check
    _
  $region31: #{encoder_pallas.1} parent=0 // pred_check_branch
    %3047 = sbr.rel (0) target = $region33
  $region32: #{encoder_pallas.1} parent=0 // pred_region
    _
  $region33: #{encoder_pallas.1} parent=0 // pred_fallthru
    _
  // Predicated region
  $region34: #{encoder_pallas.1} parent=0 // pred_check
    _
  $region35: #{encoder_pallas.1} parent=0 // pred_check_branch
    %3049 = sbr.rel (0) target = $region37
  $region36: #{encoder_pallas.1} parent=0 // pred_region
    _
  $region37: #{encoder_pallas.1} parent=0 // pred_fallthru
    _
  // Predicated region
  $region38: #{encoder_pallas.1} parent=0 // pred_check
    _
  $region39: #{encoder_pallas.1} parent=0 // pred_check_branch
    %3051 = sbr.rel (0) target = $region41
  $region40: #{encoder_pallas.1} parent=0 // pred_region
    _
  $region41: #{encoder_pallas.1} parent=0 // pred_fallthru
    _
  // Predicated region
  $region42: #{encoder_pallas.1} parent=0 // pred_check
    _
  $region43: #{encoder_pallas.1} parent=0 // pred_check_branch
    %3053 = sbr.rel (0) target = $region45
  $region44: #{encoder_pallas.1} parent=0 // pred_region
    _
  $region45: #{encoder_pallas.1} parent=0 // pred_fallthru
    _

</llo_original>
